<compile_context>
chip_gen: v7x
topology: tpu7x:2x2x1
jax: 0.10.0
libtpu: 0.0.40
codegen_flags: <defaults>
</compile_context>

<pallas_src>
import functools
import math

import jax
import jax.numpy as jnp
from jax.experimental import pallas as pl
from jax.experimental.pallas import tpu as pltpu

NEG_SLOPE = 0.2
ACT_SCALE = math.sqrt(2.0)
VMEM_LIMIT = 48 * 1024 * 1024          # explicit scoped-VMEM limit, headroom under v7x 64 MiB


def _round_up(x, m):
    return (x + m - 1) // m * m


def _pad2(a, rows, cols):
    return jnp.pad(a, ((0, rows - a.shape[0]), (0, cols - a.shape[1])))


def _default_tiles():
    """Per-generation matmul tile sizes (tm, tn, tk)."""
    try:
        kind = jax.devices()[0].device_kind.lower()
    except Exception:
        kind = ""
    if "v5 lite" in kind or "v5e" in kind or "v5litepod" in kind:
        # v5e: 4x128x128 MXU, single vector-store slot -> 128-aligned N, modest accumulator.
        return 256, 128, 256
    # v6e / v7x: 2x256x256 MXU -> 256-aligned N / K, sized for 64 MiB VMEM on v7x.
    return 256, 256, 512


# ----------------------------- Pallas kernels -----------------------------

def _mm_kernel(x_ref, w_ref, b_ref, *rest, activate, has_skip, skip_gain):
    """Tiled matmul with K-accumulation; bias + fused_leaky_relu (+ fused skip) epilogue.

    x: [tm, tk] (bf16), w: [tk, tn] (bf16), b: [1, tn] (f32);
    optional xs: [tm, Ks], ws: [Ks, tn] for the fused skip 1x1 conv.
    """
    if has_skip:
        xs_ref, ws_ref, o_ref, acc_ref = rest
    else:
        o_ref, acc_ref = rest
    k = pl.program_id(2)

    @pl.when(k == 0)
    def _init():
        acc_ref[...] = jnp.zeros_like(acc_ref)

    acc_ref[...] += jnp.dot(x_ref[...], w_ref[...],
                            preferred_element_type=jnp.float32)

    @pl.when(k == pl.num_programs(2) - 1)
    def _finalize():
        y = acc_ref[...] + b_ref[...]
        if activate:
            # fused_leaky_relu: leaky_relu(x + b, 0.2) * sqrt(2)
            y = jnp.where(y >= 0.0, y, NEG_SLOPE * y) * ACT_SCALE
        if has_skip:
            s = jnp.dot(xs_ref[...], ws_ref[...],
                        preferred_element_type=jnp.float32)
            y = (y * skip_gain + s) * (1.0 / math.sqrt(skip_gain ** 2 + 1.0))
        o_ref[...] = y.astype(o_ref.dtype)


def _blur_kernel(x_ref, o_ref, *, taps):
    """Separable 4-tap x 4-tap FIR on an NHWC tile (kernel is symmetric -> flip irrelevant)."""
    k0, k1, k2, k3 = taps
    _, hp, wp, _ = x_ref.shape
    ho, wo = hp - 3, wp - 3
    x = x_ref[...]
    # horizontal pass (slices along the sublane dim, lane dim = channels stays dense)
    h = (k0 * x[:, :, 0:wo, :] + k1 * x[:, :, 1:wo + 1, :]
         + k2 * x[:, :, 2:wo + 2, :] + k3 * x[:, :, 3:wo + 3, :])
    # vertical pass (slices along an outer dim)
    out = (k0 * h[:, 0:ho] + k1 * h[:, 1:ho + 1]
           + k2 * h[:, 2:ho + 2] + k3 * h[:, 3:ho + 3])
    o_ref[...] = out.astype(o_ref.dtype)


def _blur_down2_kernel(xee_ref, xeo_ref, xoe_ref, xoo_ref, o_ref, *, taps):
    """Separable blur fused with stride-2 decimation.

    Inputs are the polyphase split of the padded activation (even/odd rows x even/odd cols),
    each [1, oh+1, ow+1, C]; output is the decimated blur [1, oh, ow, C].
    """
    k0, k1, k2, k3 = taps
    _, ohp1, owp1, _ = xee_ref.shape
    oh, ow = ohp1 - 1, owp1 - 1
    xee, xeo = xee_ref[...], xeo_ref[...]
    xoe, xoo = xoe_ref[...], xoo_ref[...]
    # horizontal decimated pass on even / odd input rows
    he = (k0 * xee[:, :, 0:ow, :] + k1 * xeo[:, :, 0:ow, :]
          + k2 * xee[:, :, 1:ow + 1, :] + k3 * xeo[:, :, 1:ow + 1, :])
    ho = (k0 * xoe[:, :, 0:ow, :] + k1 * xoo[:, :, 0:ow, :]
          + k2 * xoe[:, :, 1:ow + 1, :] + k3 * xoo[:, :, 1:ow + 1, :])
    # vertical decimated pass
    out = (k0 * he[:, 0:oh] + k1 * ho[:, 0:oh]
           + k2 * he[:, 1:oh + 1] + k3 * ho[:, 1:oh + 1])
    o_ref[...] = out.astype(o_ref.dtype)


# ----------------------------- Pallas wrappers -----------------------------

def conv_matmul(x, w, b, *, activate, xs=None, ws=None, skip_gain=1.0,
                compute_dtype=jnp.bfloat16):
    """y = act(x @ w + b); optionally fused skip: (y*g + xs @ ws)/sqrt(g^2+1)."""
    M, K = x.shape
    N = w.shape[1]
    tm0, tn0, tk0 = _default_tiles()
    tm = min(tm0, _round_up(M, 8))
    tn = min(tn0, _round_up(N, 128))
    tk = min(tk0, _round_up(K, 128))
    Mp, Np, Kp = _round_up(M, tm), _round_up(N, tn), _round_up(K, tk)

    xp = _pad2(x.astype(compute_dtype), Mp, Kp)
    wp = _pad2(w.astype(compute_dtype), Kp, Np)
    bp = _pad2(b.reshape(1, N).astype(jnp.float32), 1, Np)

    itemsize = jnp.dtype(compute_dtype).itemsize
    inputs = [xp, wp, bp]
    in_specs = [
        pl.BlockSpec((tm, tk), lambda i, j, k: (i, k)),
        pl.BlockSpec((tk, tn), lambda i, j, k: (k, j)),
        pl.BlockSpec((1, tn), lambda i, j, k: (0, j)),
    ]
    flops = 2 * Mp * Np * Kp
    bytes_accessed = Mp * Kp * itemsize + Kp * Np * itemsize + Np * 4 + Mp * Np * 4

    has_skip = xs is not None
    if has_skip:
        Ks = xs.shape[1]
        Ksp = _round_up(Ks, 128)
        xsp = _pad2(xs.astype(compute_dtype), Mp, Ksp)
        wsp = _pad2(ws.astype(compute_dtype), Ksp, Np)
        inputs += [xsp, wsp]
        in_specs += [
            pl.BlockSpec((tm, Ksp), lambda i, j, k: (i, 0)),
            pl.BlockSpec((Ksp, tn), lambda i, j, k: (0, j)),
        ]
        flops += 2 * Mp * Np * Ksp
        bytes_accessed += Mp * Ksp * itemsize + Ksp * Np * itemsize

    grid = (Mp // tm, Np // tn, Kp // tk)
    out = pl.pallas_call(
        functools.partial(_mm_kernel, activate=activate, has_skip=has_skip,
                          skip_gain=skip_gain),
        out_shape=jax.ShapeDtypeStruct((Mp, Np), jnp.float32),
        grid_spec=pltpu.PrefetchScalarGridSpec(
            num_scalar_prefetch=0,
            grid=grid,
            in_specs=in_specs,
            out_specs=pl.BlockSpec((tm, tn), lambda i, j, k: (i, j)),
            scratch_shapes=[pltpu.VMEM((tm, tn), jnp.float32)]),
        compiler_params=pltpu.CompilerParams(
            dimension_semantics=("parallel", "parallel", "arbitrary"),
            vmem_limit_bytes=VMEM_LIMIT),
        cost_estimate=pl.CostEstimate(flops=int(flops), transcendentals=0,
                                      bytes_accessed=int(bytes_accessed)),
    )(*inputs)
    return out[:M, :N]


def blur_nhwc(x, pad, taps):
    """upfirdn2d(x, outer(taps), up=1, down=1, pad=(pad, pad)) on NHWC input."""
    B, H, W, C = x.shape
    xp = jnp.pad(x, ((0, 0), (pad, pad), (pad, pad), (0, 0)))
    Hp, Wp = H + 2 * pad, W + 2 * pad
    Ho, Wo = Hp - 3, Wp - 3
    return pl.pallas_call(
        functools.partial(_blur_kernel, taps=taps),
        out_shape=jax.ShapeDtypeStruct((B, Ho, Wo, C), jnp.float32),
        grid_spec=pltpu.PrefetchScalarGridSpec(
            num_scalar_prefetch=0,
            grid=(B,),
            in_specs=[pl.BlockSpec((1, Hp, Wp, C), lambda b: (b, 0, 0, 0))],
            out_specs=pl.BlockSpec((1, Ho, Wo, C), lambda b: (b, 0, 0, 0))),
        compiler_params=pltpu.CompilerParams(
            dimension_semantics=("parallel",),
            vmem_limit_bytes=VMEM_LIMIT),
        cost_estimate=pl.CostEstimate(
            flops=int(2 * 8 * B * Ho * Wo * C), transcendentals=0,
            bytes_accessed=int((B * Hp * Wp * C + B * Ho * Wo * C) * 4)),
    )(xp)


def blur_down2_nhwc(x, taps):
    """Blur(pad=(1,1)) immediately followed by stride-2 decimation, fused into one kernel."""
    B, H, W, C = x.shape
    assert H % 2 == 0 and W % 2 == 0
    xp = jnp.pad(x, ((0, 0), (1, 1), (1, 1), (0, 0)))
    oh, ow = H // 2, W // 2
    # polyphase even/odd split of the padded input (plain-JAX plumbing; kernel only ever writes
    # the decimated output, never the full-resolution blurred tensor)
    xee = xp[:, 0::2, 0::2, :]
    xeo = xp[:, 0::2, 1::2, :]
    xoe = xp[:, 1::2, 0::2, :]
    xoo = xp[:, 1::2, 1::2, :]
    spec = pl.BlockSpec((1, oh + 1, ow + 1, C), lambda b: (b, 0, 0, 0))
    return pl.pallas_call(
        functools.partial(_blur_down2_kernel, taps=taps),
        out_shape=jax.ShapeDtypeStruct((B, oh, ow, C), jnp.float32),
        grid_spec=pltpu.PrefetchScalarGridSpec(
            num_scalar_prefetch=0,
            grid=(B,),
            in_specs=[spec, spec, spec, spec],
            out_specs=pl.BlockSpec((1, oh, ow, C), lambda b: (b, 0, 0, 0))),
        compiler_params=pltpu.CompilerParams(
            dimension_semantics=("parallel",),
            vmem_limit_bytes=VMEM_LIMIT),
        cost_estimate=pl.CostEstimate(
            flops=int(2 * 8 * B * oh * ow * C), transcendentals=0,
            bytes_accessed=int((4 * B * (oh + 1) * (ow + 1) * C + B * oh * ow * C) * 4)),
    )(xee, xeo, xoe, xoo)


# ----------------------------- glue (plain JAX) -----------------------------

def im2col_nhwc(x, ksize, stride, pad, compute_dtype):
    """NHWC -> patches [B*Ho*Wo, ksize*ksize*C] (tap-major, channel-minor)."""
    B, H, W, C = x.shape
    xp = jnp.pad(x, ((0, 0), (pad, pad), (pad, pad), (0, 0))).astype(compute_dtype)
    Ho = (H + 2 * pad - ksize) // stride + 1
    Wo = (W + 2 * pad - ksize) // stride + 1
    cols = []
    for i in range(ksize):
        for j in range(ksize):
            cols.append(xp[:, i:i + stride * Ho:stride, j:j + stride * Wo:stride, :])
    patches = jnp.stack(cols, axis=3)                    # [B, Ho, Wo, K2, C]
    return patches.reshape(B * Ho * Wo, ksize * ksize * C), Ho, Wo


def resblock_forward(x_nchw, params, skip_gain=1.0, compute_dtype=jnp.bfloat16):
    """ResBlock(in_ch, out_ch, blur_kernel=[1,3,3,1], downsample=True) forward."""
    B, Cin, H, W = x_nchw.shape
    Cout = params["w2"].shape[0]

    kraw = params["blur_kernel"]
    ksum = float(sum(kraw))
    taps = tuple(float(v) / ksum for v in kraw)          # separable 1-D factor of make_kernel
    assert taps == taps[::-1], "blur kernel must be symmetric (upfirdn2d uses flipped taps)"

    x = jnp.transpose(x_nchw, (0, 2, 3, 1))              # NHWC, channels on the lane axis

    # conv1 = ConvLayer(Cin, Cin, 3): EqualConv2d(3x3, s=1, p=1, no bias) + FusedLeakyReLU
    scale1 = 1.0 / math.sqrt(Cin * 9)
    w1 = (params["w1"] * scale1).transpose(2, 3, 1, 0).reshape(9 * Cin, Cin)
    p1, _, _ = im2col_nhwc(x, 3, 1, 1, compute_dtype)
    y1 = conv_matmul(p1, w1, params["b1"], activate=True,
                     compute_dtype=compute_dtype)        # [B*H*W, Cin] f32
    y1 = y1.reshape(B, H, W, Cin)

    # conv2 = ConvLayer(Cin, Cout, 3, downsample):
    #   Blur(pad=(2,2)) -> EqualConv2d(3x3, s=2, p=0) -> FusedLeakyReLU (skip fused in epilogue)
    y1b = blur_nhwc(y1, 2, taps)                         # [B, H+1, W+1, Cin]
    scale2 = 1.0 / math.sqrt(Cin * 9)
    w2 = (params["w2"] * scale2).transpose(2, 3, 1, 0).reshape(9 * Cin, Cout)
    p2, Ho, Wo = im2col_nhwc(y1b, 3, 2, 0, compute_dtype)

    # skip = ConvLayer(Cin, Cout, 1, downsample, no act, no bias):
    #   Blur(pad=(1,1)) + stride-2 decimation fused; 1x1 conv fused into the conv2 epilogue.
    xs = blur_down2_nhwc(x, taps)                        # [B, Ho, Wo, Cin]
    xs_flat = xs.reshape(B * Ho * Wo, Cin)
    ws = (params["wskip"] * (1.0 / math.sqrt(Cin))).reshape(Cout, Cin).T

    out = conv_matmul(p2, w2, params["b2"], activate=True,
                      xs=xs_flat, ws=ws, skip_gain=skip_gain,
                      compute_dtype=compute_dtype)       # [B*Ho*Wo, Cout]
    out = out.reshape(B, Ho, Wo, Cout)
    return jnp.transpose(out, (0, 3, 1, 2))              # back to NCHW


# ----------------------------- pure-JAX reference -----------------------------

def ref_forward(x, params, skip_gain=1.0):
    Cin = x.shape[1]
    k1d = jnp.array(params["blur_kernel"], jnp.float32)
    k2d = jnp.outer(k1d, k1d)
    k2d = k2d / jnp.sum(k2d)

    def conv(inp, w, stride, pad):
        return jax.lax.conv_general_dilated(
            inp, w, (stride, stride), [(pad, pad), (pad, pad)],
            dimension_numbers=("NCHW", "OIHW", "NCHW"))

    def dwblur(inp, pad):
        C = inp.shape[1]
        w = jnp.tile(k2d[None, None], (C, 1, 1, 1))
        return jax.lax.conv_general_dilated(
            inp, w, (1, 1), [(pad, pad), (pad, pad)],
            dimension_numbers=("NCHW", "OIHW", "NCHW"), feature_group_count=C)

    def lrelu(v):
        return jnp.where(v >= 0, v, NEG_SLOPE * v) * ACT_SCALE

    y = conv(x, params["w1"] / math.sqrt(Cin * 9), 1, 1) + params["b1"].reshape(1, -1, 1, 1)
    y = lrelu(y)
    y = dwblur(y, 2)
    y = conv(y, params["w2"] / math.sqrt(Cin * 9), 2, 0) + params["b2"].reshape(1, -1, 1, 1)
    y = lrelu(y)
    s = dwblur(x, 1)
    s = conv(s, params["wskip"] / math.sqrt(Cin), 2, 0)
    return (y * skip_gain + s) / math.sqrt(skip_gain ** 2 + 1.0)


# ----------------------------- params -----------------------------

def init_params(key, c_in, c_out):
    k1, k2, k3, k4, k5 = jax.random.split(key, 5)
    return {
        "w1": jax.random.normal(k1, (c_in, c_in, 3, 3), jnp.float32),      # EqualConv2d weight
        "b1": 0.1 * jax.random.normal(k2, (c_in,), jnp.float32),           # FusedLeakyReLU bias
        "w2": jax.random.normal(k3, (c_out, c_in, 3, 3), jnp.float32),
        "b2": 0.1 * jax.random.normal(k4, (c_out,), jnp.float32),
        "wskip": jax.random.normal(k5, (c_out, c_in, 1, 1), jnp.float32),  # skip 1x1, no bias
        "blur_kernel": (1.0, 3.0, 3.0, 1.0),
    }


if __name__ == "__main__":
    B, Cin, Cout, H, W = 2, 4, 8, 16, 16
    key = jax.random.PRNGKey(0)
    kx, kp = jax.random.split(key)
    x = jax.random.normal(kx, (B, Cin, H, W), jnp.float32)
    params = init_params(kp, Cin, Cout)

    # production path: bf16 MXU inputs, f32 accumulation / epilogue
    fwd = jax.jit(lambda inp: resblock_forward(inp, params, skip_gain=1.0))
    out = jax.block_until_ready(fwd(x))

    ref = ref_forward(x, params, skip_gain=1.0)
    assert out.shape == (B, Cout, H // 2, W // 2), out.shape
    assert bool(jnp.all(jnp.isfinite(out)))

    # exact-semantics check with f32 compute (same kernels, no quantization)
    out_f32 = resblock_forward(x, params, skip_gain=1.0, compute_dtype=jnp.float32)
    err_f32 = float(jnp.max(jnp.abs(out_f32 - ref)))
    assert bool(jnp.allclose(out_f32, ref, atol=1e-4, rtol=1e-4)), err_f32

    # bf16 fast path: relative check against the f32 reference
    err = float(jnp.max(jnp.abs(out - ref)))
    scale = float(jnp.max(jnp.abs(ref)))
    assert err <= 5e-2 * scale + 1e-3, (err, scale)

    print("KERNEL_OK")
</pallas_src>

<mosaic_0001>
module attributes {stable_mosaic.version = 11 : i64} {
  func.func @_blur_down2_kernel(%arg0: i32, %arg1: memref<1x9x9x4xf32, #tpu.memory_space<vmem>>, %arg2: memref<1x9x9x4xf32, #tpu.memory_space<vmem>>, %arg3: memref<1x9x9x4xf32, #tpu.memory_space<vmem>>, %arg4: memref<1x9x9x4xf32, #tpu.memory_space<vmem>>, %arg5: memref<1x8x8x4xf32, #tpu.memory_space<vmem>>) attributes {dimension_semantics = [#tpu.dimension_semantics<parallel>], iteration_bounds = array<i64: 2>, scalar_prefetch = 0 : i64, scratch_operands = 0 : i64, tpu.core_type = #tpu.core_type<tc>, window_params = [{transform_indices = @transform_0, window_bounds = array<i64: 1, 9, 9, 4>}, {transform_indices = @transform_1, window_bounds = array<i64: 1, 9, 9, 4>}, {transform_indices = @transform_2, window_bounds = array<i64: 1, 9, 9, 4>}, {transform_indices = @transform_3, window_bounds = array<i64: 1, 9, 9, 4>}, {transform_indices = @transform_4, window_bounds = array<i64: 1, 8, 8, 4>}]} {
    %c0 = arith.constant 0 : index
    %c0_0 = arith.constant 0 : index
    %c0_1 = arith.constant 0 : index
    %c0_2 = arith.constant 0 : index
    %0 = vector.load %arg1[%c0, %c0_0, %c0_1, %c0_2] : memref<1x9x9x4xf32, #tpu.memory_space<vmem>>, vector<1x9x9x4xf32>
    %c0_3 = arith.constant 0 : index
    %c0_4 = arith.constant 0 : index
    %c0_5 = arith.constant 0 : index
    %c0_6 = arith.constant 0 : index
    %1 = vector.load %arg2[%c0_3, %c0_4, %c0_5, %c0_6] : memref<1x9x9x4xf32, #tpu.memory_space<vmem>>, vector<1x9x9x4xf32>
    %c0_7 = arith.constant 0 : index
    %c0_8 = arith.constant 0 : index
    %c0_9 = arith.constant 0 : index
    %c0_10 = arith.constant 0 : index
    %2 = vector.load %arg3[%c0_7, %c0_8, %c0_9, %c0_10] : memref<1x9x9x4xf32, #tpu.memory_space<vmem>>, vector<1x9x9x4xf32>
    %c0_11 = arith.constant 0 : index
    %c0_12 = arith.constant 0 : index
    %c0_13 = arith.constant 0 : index
    %c0_14 = arith.constant 0 : index
    %3 = vector.load %arg4[%c0_11, %c0_12, %c0_13, %c0_14] : memref<1x9x9x4xf32, #tpu.memory_space<vmem>>, vector<1x9x9x4xf32>
    %4 = vector.extract_strided_slice %0 {offsets = [0, 0, 0, 0], sizes = [1, 9, 8, 4], strides = [1, 1, 1, 1]} : vector<1x9x9x4xf32> to vector<1x9x8x4xf32>
    %cst = arith.constant 1.250000e-01 : f32
    %5 = vector.broadcast %cst : f32 to vector<1x9x8x4xf32>
    %6 = arith.mulf %5, %4 : vector<1x9x8x4xf32>
    %7 = vector.extract_strided_slice %1 {offsets = [0, 0, 0, 0], sizes = [1, 9, 8, 4], strides = [1, 1, 1, 1]} : vector<1x9x9x4xf32> to vector<1x9x8x4xf32>
    %cst_15 = arith.constant 3.750000e-01 : f32
    %8 = vector.broadcast %cst_15 : f32 to vector<1x9x8x4xf32>
    %9 = arith.mulf %8, %7 : vector<1x9x8x4xf32>
    %10 = arith.addf %6, %9 : vector<1x9x8x4xf32>
    %11 = vector.extract_strided_slice %0 {offsets = [0, 0, 1, 0], sizes = [1, 9, 8, 4], strides = [1, 1, 1, 1]} : vector<1x9x9x4xf32> to vector<1x9x8x4xf32>
    %cst_16 = arith.constant 3.750000e-01 : f32
    %12 = vector.broadcast %cst_16 : f32 to vector<1x9x8x4xf32>
    %13 = arith.mulf %12, %11 : vector<1x9x8x4xf32>
    %14 = arith.addf %10, %13 : vector<1x9x8x4xf32>
    %15 = vector.extract_strided_slice %1 {offsets = [0, 0, 1, 0], sizes = [1, 9, 8, 4], strides = [1, 1, 1, 1]} : vector<1x9x9x4xf32> to vector<1x9x8x4xf32>
    %cst_17 = arith.constant 1.250000e-01 : f32
    %16 = vector.broadcast %cst_17 : f32 to vector<1x9x8x4xf32>
    %17 = arith.mulf %16, %15 : vector<1x9x8x4xf32>
    %18 = arith.addf %14, %17 : vector<1x9x8x4xf32>
    %19 = vector.extract_strided_slice %2 {offsets = [0, 0, 0, 0], sizes = [1, 9, 8, 4], strides = [1, 1, 1, 1]} : vector<1x9x9x4xf32> to vector<1x9x8x4xf32>
    %cst_18 = arith.constant 1.250000e-01 : f32
    %20 = vector.broadcast %cst_18 : f32 to vector<1x9x8x4xf32>
    %21 = arith.mulf %20, %19 : vector<1x9x8x4xf32>
    %22 = vector.extract_strided_slice %3 {offsets = [0, 0, 0, 0], sizes = [1, 9, 8, 4], strides = [1, 1, 1, 1]} : vector<1x9x9x4xf32> to vector<1x9x8x4xf32>
    %cst_19 = arith.constant 3.750000e-01 : f32
    %23 = vector.broadcast %cst_19 : f32 to vector<1x9x8x4xf32>
    %24 = arith.mulf %23, %22 : vector<1x9x8x4xf32>
    %25 = arith.addf %21, %24 : vector<1x9x8x4xf32>
    %26 = vector.extract_strided_slice %2 {offsets = [0, 0, 1, 0], sizes = [1, 9, 8, 4], strides = [1, 1, 1, 1]} : vector<1x9x9x4xf32> to vector<1x9x8x4xf32>
    %cst_20 = arith.constant 3.750000e-01 : f32
    %27 = vector.broadcast %cst_20 : f32 to vector<1x9x8x4xf32>
    %28 = arith.mulf %27, %26 : vector<1x9x8x4xf32>
    %29 = arith.addf %25, %28 : vector<1x9x8x4xf32>
    %30 = vector.extract_strided_slice %3 {offsets = [0, 0, 1, 0], sizes = [1, 9, 8, 4], strides = [1, 1, 1, 1]} : vector<1x9x9x4xf32> to vector<1x9x8x4xf32>
    %cst_21 = arith.constant 1.250000e-01 : f32
    %31 = vector.broadcast %cst_21 : f32 to vector<1x9x8x4xf32>
    %32 = arith.mulf %31, %30 : vector<1x9x8x4xf32>
    %33 = arith.addf %29, %32 : vector<1x9x8x4xf32>
    %34 = vector.extract_strided_slice %18 {offsets = [0, 0, 0, 0], sizes = [1, 8, 8, 4], strides = [1, 1, 1, 1]} : vector<1x9x8x4xf32> to vector<1x8x8x4xf32>
    %cst_22 = arith.constant 1.250000e-01 : f32
    %35 = vector.broadcast %cst_22 : f32 to vector<1x8x8x4xf32>
    %36 = arith.mulf %35, %34 : vector<1x8x8x4xf32>
    %37 = vector.extract_strided_slice %33 {offsets = [0, 0, 0, 0], sizes = [1, 8, 8, 4], strides = [1, 1, 1, 1]} : vector<1x9x8x4xf32> to vector<1x8x8x4xf32>
    %cst_23 = arith.constant 3.750000e-01 : f32
    %38 = vector.broadcast %cst_23 : f32 to vector<1x8x8x4xf32>
    %39 = arith.mulf %38, %37 : vector<1x8x8x4xf32>
    %40 = arith.addf %36, %39 : vector<1x8x8x4xf32>
    %41 = vector.extract_strided_slice %18 {offsets = [0, 1, 0, 0], sizes = [1, 8, 8, 4], strides = [1, 1, 1, 1]} : vector<1x9x8x4xf32> to vector<1x8x8x4xf32>
    %cst_24 = arith.constant 3.750000e-01 : f32
    %42 = vector.broadcast %cst_24 : f32 to vector<1x8x8x4xf32>
    %43 = arith.mulf %42, %41 : vector<1x8x8x4xf32>
    %44 = arith.addf %40, %43 : vector<1x8x8x4xf32>
    %45 = vector.extract_strided_slice %33 {offsets = [0, 1, 0, 0], sizes = [1, 8, 8, 4], strides = [1, 1, 1, 1]} : vector<1x9x8x4xf32> to vector<1x8x8x4xf32>
    %cst_25 = arith.constant 1.250000e-01 : f32
    %46 = vector.broadcast %cst_25 : f32 to vector<1x8x8x4xf32>
    %47 = arith.mulf %46, %45 : vector<1x8x8x4xf32>
    %48 = arith.addf %44, %47 : vector<1x8x8x4xf32>
    %c0_26 = arith.constant 0 : index
    %c0_27 = arith.constant 0 : index
    %c0_28 = arith.constant 0 : index
    %c0_29 = arith.constant 0 : index
    %49 = vector.load %arg5[%c0_26, %c0_27, %c0_28, %c0_29] : memref<1x8x8x4xf32, #tpu.memory_space<vmem>>, vector<1x8x8x4xf32>
    tpu.vector_store %arg5[%c0_26, %c0_27, %c0_28, %c0_29], %48 {strides = array<i32>} : memref<1x8x8x4xf32, #tpu.memory_space<vmem>>, vector<1x8x8x4xf32>,
    return
  }
  func.func @transform_0(%arg0: i32) -> (i32, i32, i32, i32) {
    %c0_i32 = arith.constant 0 : i32
    %c0_i32_0 = arith.constant 0 : i32
    %c0_i32_1 = arith.constant 0 : i32
    %c0_i32_2 = arith.constant 0 : i32
    return %arg0, %c0_i32, %c0_i32_0, %c0_i32_1 : i32, i32, i32, i32
  }
  func.func @transform_1(%arg0: i32) -> (i32, i32, i32, i32) {
    %c0_i32 = arith.constant 0 : i32
    %c0_i32_0 = arith.constant 0 : i32
    %c0_i32_1 = arith.constant 0 : i32
    %c0_i32_2 = arith.constant 0 : i32
    return %arg0, %c0_i32, %c0_i32_0, %c0_i32_1 : i32, i32, i32, i32
  }
  func.func @transform_2(%arg0: i32) -> (i32, i32, i32, i32) {
    %c0_i32 = arith.constant 0 : i32
    %c0_i32_0 = arith.constant 0 : i32
    %c0_i32_1 = arith.constant 0 : i32
    %c0_i32_2 = arith.constant 0 : i32
    return %arg0, %c0_i32, %c0_i32_0, %c0_i32_1 : i32, i32, i32, i32
  }
  func.func @transform_3(%arg0: i32) -> (i32, i32, i32, i32) {
    %c0_i32 = arith.constant 0 : i32
    %c0_i32_0 = arith.constant 0 : i32
    %c0_i32_1 = arith.constant 0 : i32
    %c0_i32_2 = arith.constant 0 : i32
    return %arg0, %c0_i32, %c0_i32_0, %c0_i32_1 : i32, i32, i32, i32
  }
  func.func @transform_4(%arg0: i32) -> (i32, i32, i32, i32) {
    %c0_i32 = arith.constant 0 : i32
    %c0_i32_0 = arith.constant 0 : i32
    %c0_i32_1 = arith.constant 0 : i32
    %c0_i32_2 = arith.constant 0 : i32
    return %arg0, %c0_i32, %c0_i32_0, %c0_i32_1 : i32, i32, i32, i32
  }
}

module attributes {stable_mosaic.version = 11 : i64} {
  func.func @_mm_kernel(%arg0: i32, %arg1: i32, %arg2: i32, %arg3: memref<256x128xbf16, #tpu.memory_space<vmem>>, %arg4: memref<128x128xbf16, #tpu.memory_space<vmem>>, %arg5: memref<1x128xf32, #tpu.memory_space<vmem>>, %arg6: memref<256x128xf32, #tpu.memory_space<vmem>>, %arg7: memref<256x128xf32, #tpu.memory_space<vmem>>) attributes {dimension_semantics = [#tpu.dimension_semantics<parallel>, #tpu.dimension_semantics<parallel>, #tpu.dimension_semantics<arbitrary>], iteration_bounds = array<i64: 2, 1, 1>, scalar_prefetch = 0 : i64, scratch_operands = 1 : i64, tpu.core_type = #tpu.core_type<tc>, window_params = [{transform_indices = @transform_0, window_bounds = array<i64: 256, 128>}, {transform_indices = @transform_1, window_bounds = array<i64: 128, 128>}, {transform_indices = @transform_2, window_bounds = array<i64: 1, 128>}, {transform_indices = @transform_3, window_bounds = array<i64: 256, 128>}]} {
    %c0_i32 = arith.constant 0 : i32
    %0 = arith.cmpi eq, %arg2, %c0_i32 : i32
    %1 = arith.extui %0 : i1 to i32
    %c0_i32_0 = arith.constant 0 : i32
    %2 = arith.cmpi ne, %1, %c0_i32_0 : i32
    scf.if %2 {
      %cst_10 = arith.constant 0.000000e+00 : f32
      %12 = vector.broadcast %cst_10 : f32 to vector<256x128xf32>
      %c0_11 = arith.constant 0 : index
      %c0_12 = arith.constant 0 : index
      %13 = vector.load %arg7[%c0_11, %c0_12] : memref<256x128xf32, #tpu.memory_space<vmem>>, vector<256x128xf32>
      tpu.vector_store %arg7[%c0_11, %c0_12], %12 {strides = array<i32>} : memref<256x128xf32, #tpu.memory_space<vmem>>, vector<256x128xf32>,
    } else {
    }
    %c0 = arith.constant 0 : index
    %c0_1 = arith.constant 0 : index
    %3 = vector.load %arg7[%c0, %c0_1] : memref<256x128xf32, #tpu.memory_space<vmem>>, vector<256x128xf32>
    %c0_2 = arith.constant 0 : index
    %c0_3 = arith.constant 0 : index
    %4 = vector.load %arg3[%c0_2, %c0_3] : memref<256x128xbf16, #tpu.memory_space<vmem>>, vector<256x128xbf16>
    %c0_4 = arith.constant 0 : index
    %c0_5 = arith.constant 0 : index
    %5 = vector.load %arg4[%c0_4, %c0_5] : memref<128x128xbf16, #tpu.memory_space<vmem>>, vector<128x128xbf16>
    %cst = arith.constant dense<0.000000e+00> : vector<256x128xf32>
    %6 = tpu.matmul %4, %5, %cst {dimension_numbers = #tpu.dot_dimension_numbers<[1], [0], [0], [1], [0, 0, 1, 1], [], []>} : vector<256x128xbf16>, vector<128x128xbf16>, vector<256x128xf32> -> vector<256x128xf32>
    %7 = arith.addf %3, %6 : vector<256x128xf32>
    %c0_6 = arith.constant 0 : index
    %c0_7 = arith.constant 0 : index
    %8 = vector.load %arg7[%c0_6, %c0_7] : memref<256x128xf32, #tpu.memory_space<vmem>>, vector<256x128xf32>
    tpu.vector_store %arg7[%c0_6, %c0_7], %7 {strides = array<i32>} : memref<256x128xf32, #tpu.memory_space<vmem>>, vector<256x128xf32>,
    %c0_i32_8 = arith.constant 0 : i32
    %9 = arith.cmpi eq, %arg2, %c0_i32_8 : i32
    %10 = arith.extui %9 : i1 to i32
    %c0_i32_9 = arith.constant 0 : i32
    %11 = arith.cmpi ne, %10, %c0_i32_9 : i32
    scf.if %11 {
      %c0_10 = arith.constant 0 : index
      %c0_11 = arith.constant 0 : index
      %12 = vector.load %arg7[%c0_10, %c0_11] : memref<256x128xf32, #tpu.memory_space<vmem>>, vector<256x128xf32>
      %c0_12 = arith.constant 0 : index
      %c0_13 = arith.constant 0 : index
      %13 = vector.load %arg5[%c0_12, %c0_13] : memref<1x128xf32, #tpu.memory_space<vmem>>, vector<1x128xf32>
      %14 = vector.broadcast %13 : vector<1x128xf32> to vector<256x128xf32>
      %15 = arith.addf %12, %14 : vector<256x128xf32>
      %cst_14 = arith.constant 0.000000e+00 : f32
      %16 = vector.broadcast %cst_14 : f32 to vector<256x128xf32>
      %17 = arith.cmpf oge, %15, %16 : vector<256x128xf32>
      %cst_15 = arith.constant 2.000000e-01 : f32
      %18 = vector.broadcast %cst_15 : f32 to vector<256x128xf32>
      %19 = arith.mulf %18, %15 : vector<256x128xf32>
      %20 = arith.select %17, %15, %19 : vector<256x128xi1>, vector<256x128xf32>
      %cst_16 = arith.constant 1.41421354 : f32
      %21 = vector.broadcast %cst_16 : f32 to vector<256x128xf32>
      %22 = arith.mulf %20, %21 : vector<256x128xf32>
      %c0_17 = arith.constant 0 : index
      %c0_18 = arith.constant 0 : index
      %23 = vector.load %arg6[%c0_17, %c0_18] : memref<256x128xf32, #tpu.memory_space<vmem>>, vector<256x128xf32>
      tpu.vector_store %arg6[%c0_17, %c0_18], %22 {strides = array<i32>} : memref<256x128xf32, #tpu.memory_space<vmem>>, vector<256x128xf32>,
    } else {
    }
    return
  }
  func.func @transform_0(%arg0: i32, %arg1: i32, %arg2: i32) -> (i32, i32) {
    %c0_i32 = arith.constant 0 : i32
    return %arg0, %arg2 : i32, i32
  }
  func.func @transform_1(%arg0: i32, %arg1: i32, %arg2: i32) -> (i32, i32) {
    %c0_i32 = arith.constant 0 : i32
    return %arg2, %arg1 : i32, i32
  }
  func.func @transform_2(%arg0: i32, %arg1: i32, %arg2: i32) -> (i32, i32) {
    %c0_i32 = arith.constant 0 : i32
    %c0_i32_0 = arith.constant 0 : i32
    return %c0_i32, %arg1 : i32, i32
  }
  func.func @transform_3(%arg0: i32, %arg1: i32, %arg2: i32) -> (i32, i32) {
    %c0_i32 = arith.constant 0 : i32
    return %arg0, %arg1 : i32, i32
  }
}

module attributes {stable_mosaic.version = 11 : i64} {
  func.func @_blur_kernel(%arg0: i32, %arg1: memref<1x20x20x4xf32, #tpu.memory_space<vmem>>, %arg2: memref<1x17x17x4xf32, #tpu.memory_space<vmem>>) attributes {dimension_semantics = [#tpu.dimension_semantics<parallel>], iteration_bounds = array<i64: 2>, scalar_prefetch = 0 : i64, scratch_operands = 0 : i64, tpu.core_type = #tpu.core_type<tc>, window_params = [{transform_indices = @transform_0, window_bounds = array<i64: 1, 20, 20, 4>}, {transform_indices = @transform_1, window_bounds = array<i64: 1, 17, 17, 4>}]} {
    %c0 = arith.constant 0 : index
    %c0_0 = arith.constant 0 : index
    %c0_1 = arith.constant 0 : index
    %c0_2 = arith.constant 0 : index
    %0 = vector.load %arg1[%c0, %c0_0, %c0_1, %c0_2] : memref<1x20x20x4xf32, #tpu.memory_space<vmem>>, vector<1x20x20x4xf32>
    %1 = vector.extract_strided_slice %0 {offsets = [0, 0, 0, 0], sizes = [1, 20, 17, 4], strides = [1, 1, 1, 1]} : vector<1x20x20x4xf32> to vector<1x20x17x4xf32>
    %cst = arith.constant 1.250000e-01 : f32
    %2 = vector.broadcast %cst : f32 to vector<1x20x17x4xf32>
    %3 = arith.mulf %2, %1 : vector<1x20x17x4xf32>
    %4 = vector.extract_strided_slice %0 {offsets = [0, 0, 1, 0], sizes = [1, 20, 17, 4], strides = [1, 1, 1, 1]} : vector<1x20x20x4xf32> to vector<1x20x17x4xf32>
    %cst_3 = arith.constant 3.750000e-01 : f32
    %5 = vector.broadcast %cst_3 : f32 to vector<1x20x17x4xf32>
    %6 = arith.mulf %5, %4 : vector<1x20x17x4xf32>
    %7 = arith.addf %3, %6 : vector<1x20x17x4xf32>
    %8 = vector.extract_strided_slice %0 {offsets = [0, 0, 2, 0], sizes = [1, 20, 17, 4], strides = [1, 1, 1, 1]} : vector<1x20x20x4xf32> to vector<1x20x17x4xf32>
    %cst_4 = arith.constant 3.750000e-01 : f32
    %9 = vector.broadcast %cst_4 : f32 to vector<1x20x17x4xf32>
    %10 = arith.mulf %9, %8 : vector<1x20x17x4xf32>
    %11 = arith.addf %7, %10 : vector<1x20x17x4xf32>
    %12 = vector.extract_strided_slice %0 {offsets = [0, 0, 3, 0], sizes = [1, 20, 17, 4], strides = [1, 1, 1, 1]} : vector<1x20x20x4xf32> to vector<1x20x17x4xf32>
    %cst_5 = arith.constant 1.250000e-01 : f32
    %13 = vector.broadcast %cst_5 : f32 to vector<1x20x17x4xf32>
    %14 = arith.mulf %13, %12 : vector<1x20x17x4xf32>
    %15 = arith.addf %11, %14 : vector<1x20x17x4xf32>
    %16 = vector.extract_strided_slice %15 {offsets = [0, 0, 0, 0], sizes = [1, 17, 17, 4], strides = [1, 1, 1, 1]} : vector<1x20x17x4xf32> to vector<1x17x17x4xf32>
    %cst_6 = arith.constant 1.250000e-01 : f32
    %17 = vector.broadcast %cst_6 : f32 to vector<1x17x17x4xf32>
    %18 = arith.mulf %17, %16 : vector<1x17x17x4xf32>
    %19 = vector.extract_strided_slice %15 {offsets = [0, 1, 0, 0], sizes = [1, 17, 17, 4], strides = [1, 1, 1, 1]} : vector<1x20x17x4xf32> to vector<1x17x17x4xf32>
    %cst_7 = arith.constant 3.750000e-01 : f32
    %20 = vector.broadcast %cst_7 : f32 to vector<1x17x17x4xf32>
    %21 = arith.mulf %20, %19 : vector<1x17x17x4xf32>
    %22 = arith.addf %18, %21 : vector<1x17x17x4xf32>
    %23 = vector.extract_strided_slice %15 {offsets = [0, 2, 0, 0], sizes = [1, 17, 17, 4], strides = [1, 1, 1, 1]} : vector<1x20x17x4xf32> to vector<1x17x17x4xf32>
    %cst_8 = arith.constant 3.750000e-01 : f32
    %24 = vector.broadcast %cst_8 : f32 to vector<1x17x17x4xf32>
    %25 = arith.mulf %24, %23 : vector<1x17x17x4xf32>
    %26 = arith.addf %22, %25 : vector<1x17x17x4xf32>
    %27 = vector.extract_strided_slice %15 {offsets = [0, 3, 0, 0], sizes = [1, 17, 17, 4], strides = [1, 1, 1, 1]} : vector<1x20x17x4xf32> to vector<1x17x17x4xf32>
    %cst_9 = arith.constant 1.250000e-01 : f32
    %28 = vector.broadcast %cst_9 : f32 to vector<1x17x17x4xf32>
    %29 = arith.mulf %28, %27 : vector<1x17x17x4xf32>
    %30 = arith.addf %26, %29 : vector<1x17x17x4xf32>
    %c0_10 = arith.constant 0 : index
    %c0_11 = arith.constant 0 : index
    %c0_12 = arith.constant 0 : index
    %c0_13 = arith.constant 0 : index
    %31 = vector.load %arg2[%c0_10, %c0_11, %c0_12, %c0_13] : memref<1x17x17x4xf32, #tpu.memory_space<vmem>>, vector<1x17x17x4xf32>
    tpu.vector_store %arg2[%c0_10, %c0_11, %c0_12, %c0_13], %30 {strides = array<i32>} : memref<1x17x17x4xf32, #tpu.memory_space<vmem>>, vector<1x17x17x4xf32>,
    return
  }
  func.func @transform_0(%arg0: i32) -> (i32, i32, i32, i32) {
    %c0_i32 = arith.constant 0 : i32
    %c0_i32_0 = arith.constant 0 : i32
    %c0_i32_1 = arith.constant 0 : i32
    %c0_i32_2 = arith.constant 0 : i32
    return %arg0, %c0_i32, %c0_i32_0, %c0_i32_1 : i32, i32, i32, i32
  }
  func.func @transform_1(%arg0: i32) -> (i32, i32, i32, i32) {
    %c0_i32 = arith.constant 0 : i32
    %c0_i32_0 = arith.constant 0 : i32
    %c0_i32_1 = arith.constant 0 : i32
    %c0_i32_2 = arith.constant 0 : i32
    return %arg0, %c0_i32, %c0_i32_0, %c0_i32_1 : i32, i32, i32, i32
  }
}

module attributes {stable_mosaic.version = 11 : i64} {
  func.func @_mm_kernel(%arg0: i32, %arg1: i32, %arg2: i32, %arg3: memref<128x128xbf16, #tpu.memory_space<vmem>>, %arg4: memref<128x128xbf16, #tpu.memory_space<vmem>>, %arg5: memref<1x128xf32, #tpu.memory_space<vmem>>, %arg6: memref<128x128xbf16, #tpu.memory_space<vmem>>, %arg7: memref<128x128xbf16, #tpu.memory_space<vmem>>, %arg8: memref<128x128xf32, #tpu.memory_space<vmem>>, %arg9: memref<128x128xf32, #tpu.memory_space<vmem>>) attributes {dimension_semantics = [#tpu.dimension_semantics<parallel>, #tpu.dimension_semantics<parallel>, #tpu.dimension_semantics<arbitrary>], iteration_bounds = array<i64: 1, 1, 1>, scalar_prefetch = 0 : i64, scratch_operands = 1 : i64, tpu.core_type = #tpu.core_type<tc>, window_params = [{transform_indices = @transform_0, window_bounds = array<i64: 128, 128>}, {transform_indices = @transform_1, window_bounds = array<i64: 128, 128>}, {transform_indices = @transform_2, window_bounds = array<i64: 1, 128>}, {transform_indices = @transform_3, window_bounds = array<i64: 128, 128>}, {transform_indices = @transform_4, window_bounds = array<i64: 128, 128>}, {transform_indices = @transform_5, window_bounds = array<i64: 128, 128>}]} {
    %c0_i32 = arith.constant 0 : i32
    %0 = arith.cmpi eq, %arg2, %c0_i32 : i32
    %1 = arith.extui %0 : i1 to i32
    %c0_i32_0 = arith.constant 0 : i32
    %2 = arith.cmpi ne, %1, %c0_i32_0 : i32
    scf.if %2 {
      %cst_10 = arith.constant 0.000000e+00 : f32
      %12 = vector.broadcast %cst_10 : f32 to vector<128x128xf32>
      %c0_11 = arith.constant 0 : index
      %c0_12 = arith.constant 0 : index
      %13 = vector.load %arg9[%c0_11, %c0_12] : memref<128x128xf32, #tpu.memory_space<vmem>>, vector<128x128xf32>
      tpu.vector_store %arg9[%c0_11, %c0_12], %12 {strides = array<i32>} : memref<128x128xf32, #tpu.memory_space<vmem>>, vector<128x128xf32>,
    } else {
    }
    %c0 = arith.constant 0 : index
    %c0_1 = arith.constant 0 : index
    %3 = vector.load %arg9[%c0, %c0_1] : memref<128x128xf32, #tpu.memory_space<vmem>>, vector<128x128xf32>
    %c0_2 = arith.constant 0 : index
    %c0_3 = arith.constant 0 : index
    %4 = vector.load %arg3[%c0_2, %c0_3] : memref<128x128xbf16, #tpu.memory_space<vmem>>, vector<128x128xbf16>
    %c0_4 = arith.constant 0 : index
    %c0_5 = arith.constant 0 : index
    %5 = vector.load %arg4[%c0_4, %c0_5] : memref<128x128xbf16, #tpu.memory_space<vmem>>, vector<128x128xbf16>
    %cst = arith.constant dense<0.000000e+00> : vector<128x128xf32>
    %6 = tpu.matmul %4, %5, %cst {dimension_numbers = #tpu.dot_dimension_numbers<[1], [0], [0], [1], [0, 0, 1, 1], [], []>} : vector<128x128xbf16>, vector<128x128xbf16>, vector<128x128xf32> -> vector<128x128xf32>
    %7 = arith.addf %3, %6 : vector<128x128xf32>
    %c0_6 = arith.constant 0 : index
    %c0_7 = arith.constant 0 : index
    %8 = vector.load %arg9[%c0_6, %c0_7] : memref<128x128xf32, #tpu.memory_space<vmem>>, vector<128x128xf32>
    tpu.vector_store %arg9[%c0_6, %c0_7], %7 {strides = array<i32>} : memref<128x128xf32, #tpu.memory_space<vmem>>, vector<128x128xf32>,
    %c0_i32_8 = arith.constant 0 : i32
    %9 = arith.cmpi eq, %arg2, %c0_i32_8 : i32
    %10 = arith.extui %9 : i1 to i32
    %c0_i32_9 = arith.constant 0 : i32
    %11 = arith.cmpi ne, %10, %c0_i32_9 : i32
    scf.if %11 {
      %c0_10 = arith.constant 0 : index
      %c0_11 = arith.constant 0 : index
      %12 = vector.load %arg9[%c0_10, %c0_11] : memref<128x128xf32, #tpu.memory_space<vmem>>, vector<128x128xf32>
      %c0_12 = arith.constant 0 : index
      %c0_13 = arith.constant 0 : index
      %13 = vector.load %arg5[%c0_12, %c0_13] : memref<1x128xf32, #tpu.memory_space<vmem>>, vector<1x128xf32>
      %14 = vector.broadcast %13 : vector<1x128xf32> to vector<128x128xf32>
      %15 = arith.addf %12, %14 : vector<128x128xf32>
      %cst_14 = arith.constant 0.000000e+00 : f32
      %16 = vector.broadcast %cst_14 : f32 to vector<128x128xf32>
      %17 = arith.cmpf oge, %15, %16 : vector<128x128xf32>
      %cst_15 = arith.constant 2.000000e-01 : f32
      %18 = vector.broadcast %cst_15 : f32 to vector<128x128xf32>
      %19 = arith.mulf %18, %15 : vector<128x128xf32>
      %20 = arith.select %17, %15, %19 : vector<128x128xi1>, vector<128x128xf32>
      %cst_16 = arith.constant 1.41421354 : f32
      %21 = vector.broadcast %cst_16 : f32 to vector<128x128xf32>
      %22 = arith.mulf %20, %21 : vector<128x128xf32>
      %c0_17 = arith.constant 0 : index
      %c0_18 = arith.constant 0 : index
      %23 = vector.load %arg6[%c0_17, %c0_18] : memref<128x128xbf16, #tpu.memory_space<vmem>>, vector<128x128xbf16>
      %c0_19 = arith.constant 0 : index
      %c0_20 = arith.constant 0 : index
      %24 = vector.load %arg7[%c0_19, %c0_20] : memref<128x128xbf16, #tpu.memory_space<vmem>>, vector<128x128xbf16>
      %cst_21 = arith.constant dense<0.000000e+00> : vector<128x128xf32>
      %25 = tpu.matmul %23, %24, %cst_21 {dimension_numbers = #tpu.dot_dimension_numbers<[1], [0], [0], [1], [0, 0, 1, 1], [], []>} : vector<128x128xbf16>, vector<128x128xbf16>, vector<128x128xf32> -> vector<128x128xf32>
      %cst_22 = arith.constant 1.000000e+00 : f32
      %26 = vector.broadcast %cst_22 : f32 to vector<128x128xf32>
      %27 = arith.mulf %22, %26 : vector<128x128xf32>
      %28 = arith.addf %27, %25 : vector<128x128xf32>
      %cst_23 = arith.constant 0.707106769 : f32
      %29 = vector.broadcast %cst_23 : f32 to vector<128x128xf32>
      %30 = arith.mulf %28, %29 : vector<128x128xf32>
      %c0_24 = arith.constant 0 : index
      %c0_25 = arith.constant 0 : index
      %31 = vector.load %arg8[%c0_24, %c0_25] : memref<128x128xf32, #tpu.memory_space<vmem>>, vector<128x128xf32>
      tpu.vector_store %arg8[%c0_24, %c0_25], %30 {strides = array<i32>} : memref<128x128xf32, #tpu.memory_space<vmem>>, vector<128x128xf32>,
    } else {
    }
    return
  }
  func.func @transform_0(%arg0: i32, %arg1: i32, %arg2: i32) -> (i32, i32) {
    %c0_i32 = arith.constant 0 : i32
    return %arg0, %arg2 : i32, i32
  }
  func.func @transform_1(%arg0: i32, %arg1: i32, %arg2: i32) -> (i32, i32) {
    %c0_i32 = arith.constant 0 : i32
    return %arg2, %arg1 : i32, i32
  }
  func.func @transform_2(%arg0: i32, %arg1: i32, %arg2: i32) -> (i32, i32) {
    %c0_i32 = arith.constant 0 : i32
    %c0_i32_0 = arith.constant 0 : i32
    return %c0_i32, %arg1 : i32, i32
  }
  func.func @transform_3(%arg0: i32, %arg1: i32, %arg2: i32) -> (i32, i32) {
    %c0_i32 = arith.constant 0 : i32
    %c0_i32_0 = arith.constant 0 : i32
    return %arg0, %c0_i32 : i32, i32
  }
  func.func @transform_4(%arg0: i32, %arg1: i32, %arg2: i32) -> (i32, i32) {
    %c0_i32 = arith.constant 0 : i32
    %c0_i32_0 = arith.constant 0 : i32
    return %c0_i32, %arg1 : i32, i32
  }
  func.func @transform_5(%arg0: i32, %arg1: i32, %arg2: i32) -> (i32, i32) {
    %c0_i32 = arith.constant 0 : i32
    return %arg0, %arg1 : i32, i32
  }
}

</mosaic_0001>

<llo_original>
// kernel: _lambda_.6
$region0: #{_lambda_.6}
  #allocation0 [shape = 'u32[]', space=smem, size = 0x4, offset = 0x4, fixed_abs, tag = 'smem constant byte address 0x4 - core index']
  #allocation1 [shape = 'u32[144,128]{1,0:T(1,128)}', space=vmem, size = 0x12000, scoped, tag = 'internal scratch']
  %s0 = inlined_call_operand.vmem [shape: f32[2,9,9,4], index: 0, kind: input, shape index: {}]
  %s1 = inlined_call_operand.vmem [shape: f32[2,9,9,4], index: 1, kind: input, shape index: {}]
  %s2 = inlined_call_operand.vmem [shape: f32[2,9,9,4], index: 2, kind: input, shape index: {}]
  %s3 = inlined_call_operand.vmem [shape: f32[2,9,9,4], index: 3, kind: input, shape index: {}]
  %s4 = inlined_call_operand.vmem [shape: f32[2,8,8,4], index: 4, kind: output, shape index: {}]
  %s5 = sld [smem:[#allocation0]]
  $region49: #{_lambda_.6} parent=0
    _
  %s7 = ssub.s32 1, %s5
  %s8 = scalar_select 0, %s7, %s5
  loop: start=0, step=1, limit=4
  $region2: #{_lambda_.6} parent=0 // loop_pre_header
    _
  $region3: #{_lambda_.6} parent=0 // loop_header
    %s10 = sphi 0, %s14
    %p11 = scmp.ge.s32.totalorder %s10, 4
    %s20 = sphi 0, %s22
    %s23 = sphi 0, %s20
    %s24 = sphi 0, %s23
    %s40 = sphi 0, %s24
    %s46 = sphi 0, %s48
    %s49 = sphi 0, %s46
    %s50 = sphi 0, %s49
    %s66 = sphi 0, %s50
    %s72 = sphi 0, %s74
    %s75 = sphi 0, %s72
    %s76 = sphi 0, %s75
    %s92 = sphi 0, %s76
    %s98 = sphi 0, %s100
    %s101 = sphi 0, %s98
    %s102 = sphi 0, %s101
    %s118 = sphi 0, %s102
    %s124 = sphi 0, %s126
    %s127 = sphi 0, %s124
    %s128 = sphi 0, %s127
    %s144 = sphi 0, %s128
  $region4: #{_lambda_.6} parent=0 // loop_header_branch
    %13 = sbr.rel (%p11) target = $region8
  $region5: #{_lambda_.6} parent=0 // loop_body
    %s15 = ssub.s32 %s10, 1
    %s16 = ssub.s32 %s10, 2
    %s17 = sadd.s32 %s10, 1
    %s18 = ssub.s32 %s10, %s17
    %p19 = scmp.eq.s32.totalorder %s18, 0
    %s21 = sadd.s32 %s20, 1
    %s22 = scalar_select %p19, %s20, %s21
    %p25 = pneg %p19
    %p26 = scmp.eq.s32.totalorder %s10, 1
    %p27 = por %p25, %p26
    %p28 = scmp.ne.s32.totalorder %s20, %s23
    %p29 = scmp.eq.s32.totalorder %s10, 0
    %p30 = por %p28, %p29
    %p31 = scmp.ne.s32.totalorder %s20, %s23
    %p32 = scmp.eq.s32.totalorder %s15, 1
    %p33 = por %p31, %p32
    %p34 = scmp.ne.s32.totalorder %s23, %s24
    %p35 = scmp.eq.s32.totalorder %s15, 0
    %p36 = por %p34, %p35
    %p37 = scmp.ne.s32.totalorder %s23, %s24
    %p38 = scmp.eq.s32.totalorder %s16, 1
    %p39 = por %p37, %p38
    %p41 = scmp.ne.s32.totalorder %s24, %s40
    %p42 = scmp.eq.s32.totalorder %s16, 0
    %p43 = por %p41, %p42
    %s44 = ssub.s32 %s10, %s17
    %p45 = scmp.eq.s32.totalorder %s44, 0
    %s47 = sadd.s32 %s46, 1
    %s48 = scalar_select %p45, %s46, %s47
    %p51 = pneg %p45
    %p52 = scmp.eq.s32.totalorder %s10, 1
    %p53 = por %p51, %p52
    %p54 = scmp.ne.s32.totalorder %s46, %s49
    %p55 = scmp.eq.s32.totalorder %s10, 0
    %p56 = por %p54, %p55
    %p57 = scmp.ne.s32.totalorder %s46, %s49
    %p58 = scmp.eq.s32.totalorder %s15, 1
    %p59 = por %p57, %p58
    %p60 = scmp.ne.s32.totalorder %s49, %s50
    %p61 = scmp.eq.s32.totalorder %s15, 0
    %p62 = por %p60, %p61
    %p63 = scmp.ne.s32.totalorder %s49, %s50
    %p64 = scmp.eq.s32.totalorder %s16, 1
    %p65 = por %p63, %p64
    %p67 = scmp.ne.s32.totalorder %s50, %s66
    %p68 = scmp.eq.s32.totalorder %s16, 0
    %p69 = por %p67, %p68
    %s70 = ssub.s32 %s10, %s17
    %p71 = scmp.eq.s32.totalorder %s70, 0
    %s73 = sadd.s32 %s72, 1
    %s74 = scalar_select %p71, %s72, %s73
    %p77 = pneg %p71
    %p78 = scmp.eq.s32.totalorder %s10, 1
    %p79 = por %p77, %p78
    %p80 = scmp.ne.s32.totalorder %s72, %s75
    %p81 = scmp.eq.s32.totalorder %s10, 0
    %p82 = por %p80, %p81
    %p83 = scmp.ne.s32.totalorder %s72, %s75
    %p84 = scmp.eq.s32.totalorder %s15, 1
    %p85 = por %p83, %p84
    %p86 = scmp.ne.s32.totalorder %s75, %s76
    %p87 = scmp.eq.s32.totalorder %s15, 0
    %p88 = por %p86, %p87
    %p89 = scmp.ne.s32.totalorder %s75, %s76
    %p90 = scmp.eq.s32.totalorder %s16, 1
    %p91 = por %p89, %p90
    %p93 = scmp.ne.s32.totalorder %s76, %s92
    %p94 = scmp.eq.s32.totalorder %s16, 0
    %p95 = por %p93, %p94
    %s96 = ssub.s32 %s10, %s17
    %p97 = scmp.eq.s32.totalorder %s96, 0
    %s99 = sadd.s32 %s98, 1
    %s100 = scalar_select %p97, %s98, %s99
    %p103 = pneg %p97
    %p104 = scmp.eq.s32.totalorder %s10, 1
    %p105 = por %p103, %p104
    %p106 = scmp.ne.s32.totalorder %s98, %s101
    %p107 = scmp.eq.s32.totalorder %s10, 0
    %p108 = por %p106, %p107
    %p109 = scmp.ne.s32.totalorder %s98, %s101
    %p110 = scmp.eq.s32.totalorder %s15, 1
    %p111 = por %p109, %p110
    %p112 = scmp.ne.s32.totalorder %s101, %s102
    %p113 = scmp.eq.s32.totalorder %s15, 0
    %p114 = por %p112, %p113
    %p115 = scmp.ne.s32.totalorder %s101, %s102
    %p116 = scmp.eq.s32.totalorder %s16, 1
    %p117 = por %p115, %p116
    %p119 = scmp.ne.s32.totalorder %s102, %s118
    %p120 = scmp.eq.s32.totalorder %s16, 0
    %p121 = por %p119, %p120
    %s122 = ssub.s32 %s10, %s17
    %p123 = scmp.eq.s32.totalorder %s122, 0
    %s125 = sadd.s32 %s124, 1
    %s126 = scalar_select %p123, %s124, %s125
    %p129 = pneg %p123
    %p130 = scmp.eq.s32.totalorder %s10, 1
    %p131 = por %p129, %p130
    %p132 = scmp.ne.s32.totalorder %s124, %s127
    %p133 = scmp.eq.s32.totalorder %s10, 0
    %p134 = por %p132, %p133
    %p135 = scmp.ne.s32.totalorder %s124, %s127
    %p136 = scmp.eq.s32.totalorder %s15, 1
    %p137 = por %p135, %p136
    %p138 = scmp.ne.s32.totalorder %s127, %s128
    %p139 = scmp.eq.s32.totalorder %s15, 0
    %p140 = por %p138, %p139
    %p141 = scmp.ne.s32.totalorder %s127, %s128
    %p142 = scmp.eq.s32.totalorder %s16, 1
    %p143 = por %p141, %p142
    %p145 = scmp.ne.s32.totalorder %s128, %s144
    %p146 = scmp.eq.s32.totalorder %s16, 0
    %p147 = por %p145, %p146
    %p148 = scmp.le.s32.totalorder 1, %s10
    %p149 = scmp.lt.s32.totalorder %s10, 3
    %p150 = pnand %p148, %p149
    %p151 = pneg %p150
    // Predicated region
    $region9: #{_lambda_.6} parent=5 // pred_check
      _
    $region10: #{_lambda_.6} parent=5 // pred_check_branch
      %153 = sbr.rel (%p150) target = $region12
    $region11: #{_lambda_.6} parent=5 // pred_region
      %s154 = ssub.s32 %s10, 1
    $region12: #{_lambda_.6} parent=5 // pred_fallthru
      _
    %p155 = scmp.lt.s32.totalorder %s10, 2
    // Predicated region
    $region13: #{_lambda_.6} parent=5 // pred_check
      %p156 = pneg %p155
    $region14: #{_lambda_.6} parent=5 // pred_check_branch
      %158 = sbr.rel (%p156) target = $region16
    $region15: #{_lambda_.6} parent=5 // pred_region
      // Predicated region
      $region17: #{_lambda_.6} parent=15 // pred_check
        %p159 = pneg %p30
      $region18: #{_lambda_.6} parent=15 // pred_check_branch
        %161 = sbr.rel (%p159) target = $region20
      $region19: #{_lambda_.6} parent=15 // pred_region
        %p162 = scmp.lt.s32.totalorder %s10, 1
        %s163 = scalar_select %p162, %s10, 1
        %s164 = smul.addr %s163, 18
        %s165 = smul.addr %s164, 8
        %s166 = scalar_lea.vmem %s0, %s165
      $region20: #{_lambda_.6} parent=15 // pred_fallthru
        _
      // Predicated region
      $region21: #{_lambda_.6} parent=15 // pred_check
        %p167 = pneg %p56
      $region22: #{_lambda_.6} parent=15 // pred_check_branch
        %169 = sbr.rel (%p167) target = $region24
      $region23: #{_lambda_.6} parent=15 // pred_region
        %p170 = scmp.lt.s32.totalorder %s10, 1
        %s171 = scalar_select %p170, %s10, 1
        %s172 = smul.addr %s171, 18
        %s173 = smul.addr %s172, 8
        %s174 = scalar_lea.vmem %s1, %s173
      $region24: #{_lambda_.6} parent=15 // pred_fallthru
        _
      // Predicated region
      $region25: #{_lambda_.6} parent=15 // pred_check
        %p175 = pneg %p82
      $region26: #{_lambda_.6} parent=15 // pred_check_branch
        %177 = sbr.rel (%p175) target = $region28
      $region27: #{_lambda_.6} parent=15 // pred_region
        %p178 = scmp.lt.s32.totalorder %s10, 1
        %s179 = scalar_select %p178, %s10, 1
        %s180 = smul.addr %s179, 18
        %s181 = smul.addr %s180, 8
        %s182 = scalar_lea.vmem %s2, %s181
      $region28: #{_lambda_.6} parent=15 // pred_fallthru
        _
      // Predicated region
      $region29: #{_lambda_.6} parent=15 // pred_check
        %p183 = pneg %p108
      $region30: #{_lambda_.6} parent=15 // pred_check_branch
        %185 = sbr.rel (%p183) target = $region32
      $region31: #{_lambda_.6} parent=15 // pred_region
        %p186 = scmp.lt.s32.totalorder %s10, 1
        %s187 = scalar_select %p186, %s10, 1
        %s188 = smul.addr %s187, 18
        %s189 = smul.addr %s188, 8
        %s190 = scalar_lea.vmem %s3, %s189
      $region32: #{_lambda_.6} parent=15 // pred_fallthru
        _
    $region16: #{_lambda_.6} parent=5 // pred_fallthru
      _
    %p191 = scmp.le.s32.totalorder 1, %s10
    %p192 = scmp.lt.s32.totalorder %s10, 3
    %p193 = pnand %p191, %p192
    %p194 = pneg %p193
    // Predicated region
    $region33: #{_lambda_.6} parent=5 // pred_check
      _
    $region34: #{_lambda_.6} parent=5 // pred_check_branch
      %196 = sbr.rel (%p193) target = $region36
    $region35: #{_lambda_.6} parent=5 // pred_region
      %s197 = ssub.s32 %s10, 1
      %p198 = scmp.lt.s32.totalorder %s15, 1
      %s199 = scalar_select %p198, %s15, 1
      %s200 = smul.addr %s199, 18
      %s201 = smul.addr %s200, 8
      %s202 = scalar_lea.vmem %s0, %s201
      %p203 = pneg %p36
      %p204 = pneg %p33
      %p205 = scmp.lt.s32.totalorder %s15, 1
      %s206 = scalar_select %p205, %s15, 1
      %s207 = smul.addr %s206, 18
      %s208 = smul.addr %s207, 8
      %s209 = scalar_lea.vmem %s1, %s208
      %p210 = pneg %p62
      %p211 = pneg %p59
      %p212 = scmp.lt.s32.totalorder %s15, 1
      %s213 = scalar_select %p212, %s15, 1
      %s214 = smul.addr %s213, 18
      %s215 = smul.addr %s214, 8
      %s216 = scalar_lea.vmem %s2, %s215
      %p217 = pneg %p88
      %p218 = pneg %p85
      %p219 = scmp.lt.s32.totalorder %s15, 1
      %s220 = scalar_select %p219, %s15, 1
      %s221 = smul.addr %s220, 18
      %s222 = smul.addr %s221, 8
      %s223 = scalar_lea.vmem %s3, %s222
      %p224 = pneg %p114
      %p225 = pneg %p111
      %p226 = pneg %p140
      %p227 = pneg %p137
      %p228 = scmp.lt.s32.totalorder %s15, 1
      %s229 = scalar_select %p228, %s15, 1
      %s230 = smul.addr %s229, 8
      %s231 = smul.addr %s230, 8
      %s232 = scalar_lea.vmem %s4, %s231
      %p233 = scmp.lt.s32.totalorder %s15, 1
      %s234 = scalar_select %p233, %s15, 1
      %s235 = smul.addr %s234, 18
      %s236 = smul.addr %s235, 8
      %s237 = scalar_lea.vmem %s0, %s236
      %p238 = scmp.lt.s32.totalorder %s15, 1
      %s239 = scalar_select %p238, %s15, 1
      %s240 = smul.addr %s239, 18
      %s241 = smul.addr %s240, 8
      %s242 = scalar_lea.vmem %s1, %s241
      %p243 = scmp.lt.s32.totalorder %s15, 1
      %s244 = scalar_select %p243, %s15, 1
      %s245 = smul.addr %s244, 18
      %s246 = smul.addr %s245, 8
      %s247 = scalar_lea.vmem %s2, %s246
      %p248 = scmp.lt.s32.totalorder %s15, 1
      %s249 = scalar_select %p248, %s15, 1
      %s250 = smul.addr %s249, 18
      %s251 = smul.addr %s250, 8
      %s252 = scalar_lea.vmem %s3, %s251
      %p253 = scmp.lt.s32.totalorder %s15, 1
      %s254 = scalar_select %p253, %s15, 1
      %s255 = smul.addr %s254, 8
      %s256 = smul.addr %s255, 8
      %s257 = scalar_lea.vmem %s4, %s256
      %v258 = vld [vmem:[%s237] sm:$0xff]
      %v259 = vld [vmem:[%s237 + $0x8] sm:$0x1]
      %v260 = vld [vmem:[%s237 + $0x10] sm:$0xff]
      %v261 = vld [vmem:[%s237 + $0x18] sm:$0x1]
      %v262 = vld [vmem:[%s237 + $0x20] sm:$0xff]
      %v263 = vld [vmem:[%s237 + $0x28] sm:$0x1]
      %v264 = vld [vmem:[%s237 + $0x30] sm:$0xff]
      %v265 = vld [vmem:[%s237 + $0x38] sm:$0x1]
      %v266 = vld [vmem:[%s237 + $0x40] sm:$0xff]
      %v267 = vld [vmem:[%s237 + $0x48] sm:$0x1]
      %v268 = vld [vmem:[%s237 + $0x50] sm:$0xff]
      %v269 = vld [vmem:[%s237 + $0x58] sm:$0x1]
      %v270 = vld [vmem:[%s237 + $0x60] sm:$0xff]
      %v271 = vld [vmem:[%s237 + $0x68] sm:$0x1]
      %v272 = vld [vmem:[%s237 + $0x70] sm:$0xff]
      %v273 = vld [vmem:[%s237 + $0x78] sm:$0x1]
      %v274 = vld [vmem:[%s237 + $0x80] sm:$0xff]
      %v275 = vld [vmem:[%s237 + $0x88] sm:$0x1]
      %v276 = vld [vmem:[%s242] sm:$0xff]
      %v277 = vld [vmem:[%s242 + $0x8] sm:$0x1]
      %v278 = vld [vmem:[%s242 + $0x10] sm:$0xff]
      %v279 = vld [vmem:[%s242 + $0x18] sm:$0x1]
      %v280 = vld [vmem:[%s242 + $0x20] sm:$0xff]
      %v281 = vld [vmem:[%s242 + $0x28] sm:$0x1]
      %v282 = vld [vmem:[%s242 + $0x30] sm:$0xff]
      %v283 = vld [vmem:[%s242 + $0x38] sm:$0x1]
      %v284 = vld [vmem:[%s242 + $0x40] sm:$0xff]
      %v285 = vld [vmem:[%s242 + $0x48] sm:$0x1]
      %v286 = vld [vmem:[%s242 + $0x50] sm:$0xff]
      %v287 = vld [vmem:[%s242 + $0x58] sm:$0x1]
      %v288 = vld [vmem:[%s242 + $0x60] sm:$0xff]
      %v289 = vld [vmem:[%s242 + $0x68] sm:$0x1]
      %v290 = vld [vmem:[%s242 + $0x70] sm:$0xff]
      %v291 = vld [vmem:[%s242 + $0x78] sm:$0x1]
      %v292 = vld [vmem:[%s242 + $0x80] sm:$0xff]
      %v293 = vld [vmem:[%s242 + $0x88] sm:$0x1]
      %v294 = vld [vmem:[%s247] sm:$0xff]
      %v295 = vld [vmem:[%s247 + $0x8] sm:$0x1]
      %v296 = vld [vmem:[%s247 + $0x10] sm:$0xff]
      %v297 = vld [vmem:[%s247 + $0x18] sm:$0x1]
      %v298 = vld [vmem:[%s247 + $0x20] sm:$0xff]
      %v299 = vld [vmem:[%s247 + $0x28] sm:$0x1]
      %v300 = vld [vmem:[%s247 + $0x30] sm:$0xff]
      %v301 = vld [vmem:[%s247 + $0x38] sm:$0x1]
      %v302 = vld [vmem:[%s247 + $0x40] sm:$0xff]
      %v303 = vld [vmem:[%s247 + $0x48] sm:$0x1]
      %v304 = vld [vmem:[%s247 + $0x50] sm:$0xff]
      %v305 = vld [vmem:[%s247 + $0x58] sm:$0x1]
      %v306 = vld [vmem:[%s247 + $0x60] sm:$0xff]
      %v307 = vld [vmem:[%s247 + $0x68] sm:$0x1]
      %v308 = vld [vmem:[%s247 + $0x70] sm:$0xff]
      %v309 = vld [vmem:[%s247 + $0x78] sm:$0x1]
      %v310 = vld [vmem:[%s247 + $0x80] sm:$0xff]
      %v311 = vld [vmem:[%s247 + $0x88] sm:$0x1]
      %v312 = vld [vmem:[%s252] sm:$0xff]
      %v313 = vld [vmem:[%s252 + $0x8] sm:$0x1]
      %v314 = vld [vmem:[%s252 + $0x10] sm:$0xff]
      %v315 = vld [vmem:[%s252 + $0x18] sm:$0x1]
      %v316 = vld [vmem:[%s252 + $0x20] sm:$0xff]
      %v317 = vld [vmem:[%s252 + $0x28] sm:$0x1]
      %v318 = vld [vmem:[%s252 + $0x30] sm:$0xff]
      %v319 = vld [vmem:[%s252 + $0x38] sm:$0x1]
      %v320 = vld [vmem:[%s252 + $0x40] sm:$0xff]
      %v321 = vld [vmem:[%s252 + $0x48] sm:$0x1]
      %v322 = vld [vmem:[%s252 + $0x50] sm:$0xff]
      %v323 = vld [vmem:[%s252 + $0x58] sm:$0x1]
      %v324 = vld [vmem:[%s252 + $0x60] sm:$0xff]
      %v325 = vld [vmem:[%s252 + $0x68] sm:$0x1]
      %v326 = vld [vmem:[%s252 + $0x70] sm:$0xff]
      %v327 = vld [vmem:[%s252 + $0x78] sm:$0x1]
      %v328 = vld [vmem:[%s252 + $0x80] sm:$0xff]
      %v329 = vld [vmem:[%s252 + $0x88] sm:$0x1]
      %v330 = vmul.f32 %v258, 0.125
      %v331 = vmul.f32 %v260, 0.125
      %v332 = vmul.f32 %v262, 0.125
      %v333 = vmul.f32 %v264, 0.125
      %v334 = vmul.f32 %v266, 0.125
      %v335 = vmul.f32 %v268, 0.125
      %v336 = vmul.f32 %v270, 0.125
      %v337 = vmul.f32 %v272, 0.125
      %v338 = vmul.f32 %v274, 0.125
      %v339 = vmul.f32 %v276, 0.375
      %v340 = vmul.f32 %v278, 0.375
      %v341 = vmul.f32 %v280, 0.375
      %v342 = vmul.f32 %v282, 0.375
      %v343 = vmul.f32 %v284, 0.375
      %v344 = vmul.f32 %v286, 0.375
      %v345 = vmul.f32 %v288, 0.375
      %v346 = vmul.f32 %v290, 0.375
      %v347 = vmul.f32 %v292, 0.375
      %v348 = vadd.f32 %v330, %v339
      %v349 = vadd.f32 %v331, %v340
      %v350 = vadd.f32 %v332, %v341
      %v351 = vadd.f32 %v333, %v342
      %v352 = vadd.f32 %v334, %v343
      %v353 = vadd.f32 %v335, %v344
      %v354 = vadd.f32 %v336, %v345
      %v355 = vadd.f32 %v337, %v346
      %v356 = vadd.f32 %v338, %v347
      %v357 = vmul.f32 %v258, 0.375
      %v358 = vmul.f32 %v259, 0.375
      %v359 = vmul.f32 %v260, 0.375
      %v360 = vmul.f32 %v261, 0.375
      %v361 = vmul.f32 %v262, 0.375
      %v362 = vmul.f32 %v263, 0.375
      %v363 = vmul.f32 %v264, 0.375
      %v364 = vmul.f32 %v265, 0.375
      %v365 = vmul.f32 %v266, 0.375
      %v366 = vmul.f32 %v267, 0.375
      %v367 = vmul.f32 %v268, 0.375
      %v368 = vmul.f32 %v269, 0.375
      %v369 = vmul.f32 %v270, 0.375
      %v370 = vmul.f32 %v271, 0.375
      %v371 = vmul.f32 %v272, 0.375
      %v372 = vmul.f32 %v273, 0.375
      %v373 = vmul.f32 %v274, 0.375
      %v374 = vmul.f32 %v275, 0.375
      %vm393 = vcmask 1046528
      %v394 = vrot.slane %v357, 1
      %v395 = vrot.slane %v358, 1
      %v396 = vsel %vm393, %v394, %v395
      %v397 = vrot.slane %v359, 1
      %v398 = vrot.slane %v360, 1
      %v399 = vsel %vm393, %v397, %v398
      %v400 = vrot.slane %v361, 1
      %v401 = vrot.slane %v362, 1
      %v402 = vsel %vm393, %v400, %v401
      %v403 = vrot.slane %v363, 1
      %v404 = vrot.slane %v364, 1
      %v405 = vsel %vm393, %v403, %v404
      %v406 = vrot.slane %v365, 1
      %v407 = vrot.slane %v366, 1
      %v408 = vsel %vm393, %v406, %v407
      %v409 = vrot.slane %v367, 1
      %v410 = vrot.slane %v368, 1
      %v411 = vsel %vm393, %v409, %v410
      %v412 = vrot.slane %v369, 1
      %v413 = vrot.slane %v370, 1
      %v414 = vsel %vm393, %v412, %v413
      %v415 = vrot.slane %v371, 1
      %v416 = vrot.slane %v372, 1
      %v417 = vsel %vm393, %v415, %v416
      %v418 = vrot.slane %v373, 1
      %v419 = vrot.slane %v374, 1
      %v420 = vsel %vm393, %v418, %v419
      %v430 = vadd.f32 %v348, %v396
      %v431 = vadd.f32 %v349, %v399
      %v432 = vadd.f32 %v350, %v402
      %v433 = vadd.f32 %v351, %v405
      %v434 = vadd.f32 %v352, %v408
      %v435 = vadd.f32 %v353, %v411
      %v436 = vadd.f32 %v354, %v414
      %v437 = vadd.f32 %v355, %v417
      %v438 = vadd.f32 %v356, %v420
      %v439 = vmul.f32 %v276, 0.125
      %v440 = vmul.f32 %v277, 0.125
      %v441 = vmul.f32 %v278, 0.125
      %v442 = vmul.f32 %v279, 0.125
      %v443 = vmul.f32 %v280, 0.125
      %v444 = vmul.f32 %v281, 0.125
      %v445 = vmul.f32 %v282, 0.125
      %v446 = vmul.f32 %v283, 0.125
      %v447 = vmul.f32 %v284, 0.125
      %v448 = vmul.f32 %v285, 0.125
      %v449 = vmul.f32 %v286, 0.125
      %v450 = vmul.f32 %v287, 0.125
      %v451 = vmul.f32 %v288, 0.125
      %v452 = vmul.f32 %v289, 0.125
      %v453 = vmul.f32 %v290, 0.125
      %v454 = vmul.f32 %v291, 0.125
      %v455 = vmul.f32 %v292, 0.125
      %v456 = vmul.f32 %v293, 0.125
      %v475 = vrot.slane %v439, 1
      %v476 = vrot.slane %v440, 1
      %v477 = vsel %vm393, %v475, %v476
      %v478 = vrot.slane %v441, 1
      %v479 = vrot.slane %v442, 1
      %v480 = vsel %vm393, %v478, %v479
      %v481 = vrot.slane %v443, 1
      %v482 = vrot.slane %v444, 1
      %v483 = vsel %vm393, %v481, %v482
      %v484 = vrot.slane %v445, 1
      %v485 = vrot.slane %v446, 1
      %v486 = vsel %vm393, %v484, %v485
      %v487 = vrot.slane %v447, 1
      %v488 = vrot.slane %v448, 1
      %v489 = vsel %vm393, %v487, %v488
      %v490 = vrot.slane %v449, 1
      %v491 = vrot.slane %v450, 1
      %v492 = vsel %vm393, %v490, %v491
      %v493 = vrot.slane %v451, 1
      %v494 = vrot.slane %v452, 1
      %v495 = vsel %vm393, %v493, %v494
      %v496 = vrot.slane %v453, 1
      %v497 = vrot.slane %v454, 1
      %v498 = vsel %vm393, %v496, %v497
      %v499 = vrot.slane %v455, 1
      %v500 = vrot.slane %v456, 1
      %v501 = vsel %vm393, %v499, %v500
      %v511 = vadd.f32 %v430, %v477
      %v512 = vadd.f32 %v431, %v480
      %v513 = vadd.f32 %v432, %v483
      %v514 = vadd.f32 %v433, %v486
      %v515 = vadd.f32 %v434, %v489
      %v516 = vadd.f32 %v435, %v492
      %v517 = vadd.f32 %v436, %v495
      %v518 = vadd.f32 %v437, %v498
      %v519 = vadd.f32 %v438, %v501
      %v520 = vmul.f32 %v294, 0.125
      %v521 = vmul.f32 %v296, 0.125
      %v522 = vmul.f32 %v298, 0.125
      %v523 = vmul.f32 %v300, 0.125
      %v524 = vmul.f32 %v302, 0.125
      %v525 = vmul.f32 %v304, 0.125
      %v526 = vmul.f32 %v306, 0.125
      %v527 = vmul.f32 %v308, 0.125
      %v528 = vmul.f32 %v310, 0.125
      %v529 = vmul.f32 %v312, 0.375
      %v530 = vmul.f32 %v314, 0.375
      %v531 = vmul.f32 %v316, 0.375
      %v532 = vmul.f32 %v318, 0.375
      %v533 = vmul.f32 %v320, 0.375
      %v534 = vmul.f32 %v322, 0.375
      %v535 = vmul.f32 %v324, 0.375
      %v536 = vmul.f32 %v326, 0.375
      %v537 = vmul.f32 %v328, 0.375
      %v538 = vadd.f32 %v520, %v529
      %v539 = vadd.f32 %v521, %v530
      %v540 = vadd.f32 %v522, %v531
      %v541 = vadd.f32 %v523, %v532
      %v542 = vadd.f32 %v524, %v533
      %v543 = vadd.f32 %v525, %v534
      %v544 = vadd.f32 %v526, %v535
      %v545 = vadd.f32 %v527, %v536
      %v546 = vadd.f32 %v528, %v537
      %v547 = vmul.f32 %v294, 0.375
      %v548 = vmul.f32 %v295, 0.375
      %v549 = vmul.f32 %v296, 0.375
      %v550 = vmul.f32 %v297, 0.375
      %v551 = vmul.f32 %v298, 0.375
      %v552 = vmul.f32 %v299, 0.375
      %v553 = vmul.f32 %v300, 0.375
      %v554 = vmul.f32 %v301, 0.375
      %v555 = vmul.f32 %v302, 0.375
      %v556 = vmul.f32 %v303, 0.375
      %v557 = vmul.f32 %v304, 0.375
      %v558 = vmul.f32 %v305, 0.375
      %v559 = vmul.f32 %v306, 0.375
      %v560 = vmul.f32 %v307, 0.375
      %v561 = vmul.f32 %v308, 0.375
      %v562 = vmul.f32 %v309, 0.375
      %v563 = vmul.f32 %v310, 0.375
      %v564 = vmul.f32 %v311, 0.375
      %v583 = vrot.slane %v547, 1
      %v584 = vrot.slane %v548, 1
      %v585 = vsel %vm393, %v583, %v584
      %v586 = vrot.slane %v549, 1
      %v587 = vrot.slane %v550, 1
      %v588 = vsel %vm393, %v586, %v587
      %v589 = vrot.slane %v551, 1
      %v590 = vrot.slane %v552, 1
      %v591 = vsel %vm393, %v589, %v590
      %v592 = vrot.slane %v553, 1
      %v593 = vrot.slane %v554, 1
      %v594 = vsel %vm393, %v592, %v593
      %v595 = vrot.slane %v555, 1
      %v596 = vrot.slane %v556, 1
      %v597 = vsel %vm393, %v595, %v596
      %v598 = vrot.slane %v557, 1
      %v599 = vrot.slane %v558, 1
      %v600 = vsel %vm393, %v598, %v599
      %v601 = vrot.slane %v559, 1
      %v602 = vrot.slane %v560, 1
      %v603 = vsel %vm393, %v601, %v602
      %v604 = vrot.slane %v561, 1
      %v605 = vrot.slane %v562, 1
      %v606 = vsel %vm393, %v604, %v605
      %v607 = vrot.slane %v563, 1
      %v608 = vrot.slane %v564, 1
      %v609 = vsel %vm393, %v607, %v608
      %v619 = vadd.f32 %v538, %v585
      %v620 = vadd.f32 %v539, %v588
      %v621 = vadd.f32 %v540, %v591
      %v622 = vadd.f32 %v541, %v594
      %v623 = vadd.f32 %v542, %v597
      %v624 = vadd.f32 %v543, %v600
      %v625 = vadd.f32 %v544, %v603
      %v626 = vadd.f32 %v545, %v606
      %v627 = vadd.f32 %v546, %v609
      %v628 = vmul.f32 %v312, 0.125
      %v629 = vmul.f32 %v313, 0.125
      %v630 = vmul.f32 %v314, 0.125
      %v631 = vmul.f32 %v315, 0.125
      %v632 = vmul.f32 %v316, 0.125
      %v633 = vmul.f32 %v317, 0.125
      %v634 = vmul.f32 %v318, 0.125
      %v635 = vmul.f32 %v319, 0.125
      %v636 = vmul.f32 %v320, 0.125
      %v637 = vmul.f32 %v321, 0.125
      %v638 = vmul.f32 %v322, 0.125
      %v639 = vmul.f32 %v323, 0.125
      %v640 = vmul.f32 %v324, 0.125
      %v641 = vmul.f32 %v325, 0.125
      %v642 = vmul.f32 %v326, 0.125
      %v643 = vmul.f32 %v327, 0.125
      %v644 = vmul.f32 %v328, 0.125
      %v645 = vmul.f32 %v329, 0.125
      %v664 = vrot.slane %v628, 1
      %v665 = vrot.slane %v629, 1
      %v666 = vsel %vm393, %v664, %v665
      %v667 = vrot.slane %v630, 1
      %v668 = vrot.slane %v631, 1
      %v669 = vsel %vm393, %v667, %v668
      %v670 = vrot.slane %v632, 1
      %v671 = vrot.slane %v633, 1
      %v672 = vsel %vm393, %v670, %v671
      %v673 = vrot.slane %v634, 1
      %v674 = vrot.slane %v635, 1
      %v675 = vsel %vm393, %v673, %v674
      %v676 = vrot.slane %v636, 1
      %v677 = vrot.slane %v637, 1
      %v678 = vsel %vm393, %v676, %v677
      %v679 = vrot.slane %v638, 1
      %v680 = vrot.slane %v639, 1
      %v681 = vsel %vm393, %v679, %v680
      %v682 = vrot.slane %v640, 1
      %v683 = vrot.slane %v641, 1
      %v684 = vsel %vm393, %v682, %v683
      %v685 = vrot.slane %v642, 1
      %v686 = vrot.slane %v643, 1
      %v687 = vsel %vm393, %v685, %v686
      %v688 = vrot.slane %v644, 1
      %v689 = vrot.slane %v645, 1
      %v690 = vsel %vm393, %v688, %v689
      %v700 = vadd.f32 %v619, %v666
      %v701 = vadd.f32 %v620, %v669
      %v702 = vadd.f32 %v621, %v672
      %v703 = vadd.f32 %v622, %v675
      %v704 = vadd.f32 %v623, %v678
      %v705 = vadd.f32 %v624, %v681
      %v706 = vadd.f32 %v625, %v684
      %v707 = vadd.f32 %v626, %v687
      %v708 = vadd.f32 %v627, %v690
      %v709 = vmul.f32 %v511, 0.125
      %v710 = vmul.f32 %v512, 0.125
      %v711 = vmul.f32 %v513, 0.125
      %v712 = vmul.f32 %v514, 0.125
      %v713 = vmul.f32 %v515, 0.125
      %v714 = vmul.f32 %v516, 0.125
      %v715 = vmul.f32 %v517, 0.125
      %v716 = vmul.f32 %v518, 0.125
      %v717 = vmul.f32 %v700, 0.375
      %v718 = vmul.f32 %v701, 0.375
      %v719 = vmul.f32 %v702, 0.375
      %v720 = vmul.f32 %v703, 0.375
      %v721 = vmul.f32 %v704, 0.375
      %v722 = vmul.f32 %v705, 0.375
      %v723 = vmul.f32 %v706, 0.375
      %v724 = vmul.f32 %v707, 0.375
      %v725 = vadd.f32 %v709, %v717
      %v726 = vadd.f32 %v710, %v718
      %v727 = vadd.f32 %v711, %v719
      %v728 = vadd.f32 %v712, %v720
      %v729 = vadd.f32 %v713, %v721
      %v730 = vadd.f32 %v714, %v722
      %v731 = vadd.f32 %v715, %v723
      %v732 = vadd.f32 %v716, %v724
      %v733 = vmul.f32 %v512, 0.375
      %v734 = vmul.f32 %v513, 0.375
      %v735 = vmul.f32 %v514, 0.375
      %v736 = vmul.f32 %v515, 0.375
      %v737 = vmul.f32 %v516, 0.375
      %v738 = vmul.f32 %v517, 0.375
      %v739 = vmul.f32 %v518, 0.375
      %v740 = vmul.f32 %v519, 0.375
      %v741 = vadd.f32 %v725, %v733
      %v742 = vadd.f32 %v726, %v734
      %v743 = vadd.f32 %v727, %v735
      %v744 = vadd.f32 %v728, %v736
      %v745 = vadd.f32 %v729, %v737
      %v746 = vadd.f32 %v730, %v738
      %v747 = vadd.f32 %v731, %v739
      %v748 = vadd.f32 %v732, %v740
      %v749 = vmul.f32 %v701, 0.125
      %v750 = vmul.f32 %v702, 0.125
      %v751 = vmul.f32 %v703, 0.125
      %v752 = vmul.f32 %v704, 0.125
      %v753 = vmul.f32 %v705, 0.125
      %v754 = vmul.f32 %v706, 0.125
      %v755 = vmul.f32 %v707, 0.125
      %v756 = vmul.f32 %v708, 0.125
      %v757 = vadd.f32 %v741, %v749
      %v758 = vadd.f32 %v742, %v750
      %v759 = vadd.f32 %v743, %v751
      %v760 = vadd.f32 %v744, %v752
      %v761 = vadd.f32 %v745, %v753
      %v762 = vadd.f32 %v746, %v754
      %v763 = vadd.f32 %v747, %v755
      %v764 = vadd.f32 %v748, %v756
      %vm765 = vcmask 31744
      %766 = vst.msk [vmem:[%s257] sm:$0xff] %vm765, %v757
      %767 = vst.msk [vmem:[%s257 + $0x8] sm:$0xff] %vm765, %v758
      %768 = vst.msk [vmem:[%s257 + $0x10] sm:$0xff] %vm765, %v759
      %769 = vst.msk [vmem:[%s257 + $0x18] sm:$0xff] %vm765, %v760
      %770 = vst.msk [vmem:[%s257 + $0x20] sm:$0xff] %vm765, %v761
      %771 = vst.msk [vmem:[%s257 + $0x28] sm:$0xff] %vm765, %v762
      %772 = vst.msk [vmem:[%s257 + $0x30] sm:$0xff] %vm765, %v763
      %773 = vst.msk [vmem:[%s257 + $0x38] sm:$0xff] %vm765, %v764
      %p774 = scmp.lt.s32.totalorder %s15, 1
      %s775 = scalar_select %p774, %s15, 1
      %s776 = smul.addr %s775, 8
      %s777 = smul.addr %s776, 8
      %s778 = scalar_lea.vmem %s4, %s777
      // Predicated region
      $region37: #{_lambda_.6} parent=35 // pred_check
        %p779 = pneg %p137
      $region38: #{_lambda_.6} parent=35 // pred_check_branch
        %781 = sbr.rel (%p779) target = $region40
      $region39: #{_lambda_.6} parent=35 // pred_region
        _
      $region40: #{_lambda_.6} parent=35 // pred_fallthru
        _
    $region36: #{_lambda_.6} parent=5 // pred_fallthru
      _
    %p782 = scmp.le.s32.totalorder 2, %s10
    // Predicated region
    $region41: #{_lambda_.6} parent=5 // pred_check
      %p783 = pneg %p782
    $region42: #{_lambda_.6} parent=5 // pred_check_branch
      %785 = sbr.rel (%p783) target = $region44
    $region43: #{_lambda_.6} parent=5 // pred_region
      %s786 = ssub.s32 %s10, 2
      // Predicated region
      $region45: #{_lambda_.6} parent=43 // pred_check
        %p787 = pneg %p143
      $region46: #{_lambda_.6} parent=43 // pred_check_branch
        %789 = sbr.rel (%p787) target = $region48
      $region47: #{_lambda_.6} parent=43 // pred_region
        %p790 = scmp.lt.s32.totalorder %s16, 1
        %s791 = scalar_select %p790, %s16, 1
        %s792 = smul.addr %s791, 8
        %s793 = smul.addr %s792, 8
        %s794 = scalar_lea.vmem %s4, %s793
      $region48: #{_lambda_.6} parent=43 // pred_fallthru
        _
    $region44: #{_lambda_.6} parent=5 // pred_fallthru
      _
  $region6: #{_lambda_.6} parent=0 // loop_footer
    %s14 = sadd.s32 1, %s10
  $region7: #{_lambda_.6} parent=0 // loop_footer_branch
    %9 = sbr.rel target = $region3
  $region8: #{_lambda_.6} parent=0 // loop_exit
    _

// kernel: _lambda_.4
$region0: #{_lambda_.4}
  #allocation0 [shape = 'u32[]', space=smem, size = 0x4, offset = 0x4, fixed_abs, tag = 'smem constant byte address 0x4 - core index']
  #allocation1 [shape = 'u32[144,128]{1,0:T(1,128)}', space=vmem, size = 0x12000, scoped, tag = 'internal scratch']
  #allocation2 [shape = 'f32[256,128]{1,0:T(8,128)}', space=vmem, size = 0x20000, scoped, tag = 'scratch operand']
  %s0 = inlined_call_operand.vmem [shape: bf16[512,128], index: 0, kind: input, shape index: {}]
  %s1 = inlined_call_operand.vmem [shape: bf16[128,128], index: 1, kind: input, shape index: {}]
  %s2 = inlined_call_operand.vmem [shape: f32[1,128], index: 2, kind: input, shape index: {}]
  %s3 = inlined_call_operand.vmem [shape: f32[512,128], index: 3, kind: output, shape index: {}]
  %s4 = sld [smem:[#allocation0]]
  $region53: #{_lambda_.4} parent=0
    _
  %s6 = ssub.s32 1, %s4
  %s7 = scalar_select 0, %s6, %s4
  loop: start=0, step=1, limit=4
  $region2: #{_lambda_.4} parent=0 // loop_pre_header
    _
  $region3: #{_lambda_.4} parent=0 // loop_header
    %s9 = sphi 0, %s13
    %p10 = scmp.ge.s32.totalorder %s9, 4
    %s16 = sphi 0, %s35
    %s17 = sphi 0, %s31
    %s18 = sphi 0, %s27
    %s19 = sphi 0, %s16
    %s20 = sphi 0, %s17
    %s21 = sphi 0, %s18
    %s22 = sphi 0, %s19
    %s23 = sphi 0, %s20
    %s24 = sphi 0, %s21
    %s40 = sphi 0, %s42
    %s43 = sphi 0, %s40
    %s44 = sphi 0, %s43
    %s60 = sphi 0, %s44
    %s68 = sphi 0, %s70
    %s71 = sphi 0, %s68
    %s72 = sphi 0, %s71
    %s88 = sphi 0, %s72
    %s94 = sphi 0, %s96
    %s97 = sphi 0, %s94
    %s98 = sphi 0, %s97
    %s114 = sphi 0, %s98
    %s122 = sphi 0, %s124
    %s125 = sphi 0, %s122
    %s126 = sphi 0, %s125
    %s142 = sphi 0, %s126
  $region4: #{_lambda_.4} parent=0 // loop_header_branch
    %12 = sbr.rel (%p10) target = $region8
  $region5: #{_lambda_.4} parent=0 // loop_body
    %s14 = ssub.s32 %s9, 1
    %s15 = ssub.s32 %s9, 2
    %s25 = sadd.s32 1, %s18
    %p26 = scmp.ge.s32.totalorder %s25, 1
    %s27 = scalar_select %p26, 0, %s25
    %s28 = sadd.s32 1, %s17
    %s29 = scalar_select %p26, %s28, %s17
    %p30 = scmp.ge.s32.totalorder %s29, 1
    %s31 = scalar_select %p30, 0, %s29
    %s32 = sadd.s32 1, %s16
    %s33 = scalar_select %p30, %s32, %s16
    %p34 = scmp.ge.s32.totalorder %s33, 2
    %s35 = scalar_select %p34, 0, %s33
    %s36 = ssub.s32 %s16, %s35
    %s37 = ssub.s32 %s18, %s27
    %s38 = sor.u32 %s36, %s37
    %p39 = scmp.eq.s32.totalorder %s38, 0
    %s41 = sadd.s32 %s40, 1
    %s42 = scalar_select %p39, %s40, %s41
    %p45 = pneg %p39
    %p46 = scmp.eq.s32.totalorder %s9, 1
    %p47 = por %p45, %p46
    %p48 = scmp.ne.s32.totalorder %s40, %s43
    %p49 = scmp.eq.s32.totalorder %s9, 0
    %p50 = por %p48, %p49
    %p51 = scmp.ne.s32.totalorder %s40, %s43
    %p52 = scmp.eq.s32.totalorder %s14, 1
    %p53 = por %p51, %p52
    %p54 = scmp.ne.s32.totalorder %s43, %s44
    %p55 = scmp.eq.s32.totalorder %s14, 0
    %p56 = por %p54, %p55
    %p57 = scmp.ne.s32.totalorder %s43, %s44
    %p58 = scmp.eq.s32.totalorder %s15, 1
    %p59 = por %p57, %p58
    %p61 = scmp.ne.s32.totalorder %s44, %s60
    %p62 = scmp.eq.s32.totalorder %s15, 0
    %p63 = por %p61, %p62
    %s64 = ssub.s32 %s18, %s27
    %s65 = ssub.s32 %s17, %s31
    %s66 = sor.u32 %s64, %s65
    %p67 = scmp.eq.s32.totalorder %s66, 0
    %s69 = sadd.s32 %s68, 1
    %s70 = scalar_select %p67, %s68, %s69
    %p73 = pneg %p67
    %p74 = scmp.eq.s32.totalorder %s9, 1
    %p75 = por %p73, %p74
    %p76 = scmp.ne.s32.totalorder %s68, %s71
    %p77 = scmp.eq.s32.totalorder %s9, 0
    %p78 = por %p76, %p77
    %p79 = scmp.ne.s32.totalorder %s68, %s71
    %p80 = scmp.eq.s32.totalorder %s14, 1
    %p81 = por %p79, %p80
    %p82 = scmp.ne.s32.totalorder %s71, %s72
    %p83 = scmp.eq.s32.totalorder %s14, 0
    %p84 = por %p82, %p83
    %p85 = scmp.ne.s32.totalorder %s71, %s72
    %p86 = scmp.eq.s32.totalorder %s15, 1
    %p87 = por %p85, %p86
    %p89 = scmp.ne.s32.totalorder %s72, %s88
    %p90 = scmp.eq.s32.totalorder %s15, 0
    %p91 = por %p89, %p90
    %s92 = ssub.s32 %s17, %s31
    %p93 = scmp.eq.s32.totalorder %s92, 0
    %s95 = sadd.s32 %s94, 1
    %s96 = scalar_select %p93, %s94, %s95
    %p99 = pneg %p93
    %p100 = scmp.eq.s32.totalorder %s9, 1
    %p101 = por %p99, %p100
    %p102 = scmp.ne.s32.totalorder %s94, %s97
    %p103 = scmp.eq.s32.totalorder %s9, 0
    %p104 = por %p102, %p103
    %p105 = scmp.ne.s32.totalorder %s94, %s97
    %p106 = scmp.eq.s32.totalorder %s14, 1
    %p107 = por %p105, %p106
    %p108 = scmp.ne.s32.totalorder %s97, %s98
    %p109 = scmp.eq.s32.totalorder %s14, 0
    %p110 = por %p108, %p109
    %p111 = scmp.ne.s32.totalorder %s97, %s98
    %p112 = scmp.eq.s32.totalorder %s15, 1
    %p113 = por %p111, %p112
    %p115 = scmp.ne.s32.totalorder %s98, %s114
    %p116 = scmp.eq.s32.totalorder %s15, 0
    %p117 = por %p115, %p116
    %s118 = ssub.s32 %s16, %s35
    %s119 = ssub.s32 %s17, %s31
    %s120 = sor.u32 %s118, %s119
    %p121 = scmp.eq.s32.totalorder %s120, 0
    %s123 = sadd.s32 %s122, 1
    %s124 = scalar_select %p121, %s122, %s123
    %p127 = pneg %p121
    %p128 = scmp.eq.s32.totalorder %s9, 1
    %p129 = por %p127, %p128
    %p130 = scmp.ne.s32.totalorder %s122, %s125
    %p131 = scmp.eq.s32.totalorder %s9, 0
    %p132 = por %p130, %p131
    %p133 = scmp.ne.s32.totalorder %s122, %s125
    %p134 = scmp.eq.s32.totalorder %s14, 1
    %p135 = por %p133, %p134
    %p136 = scmp.ne.s32.totalorder %s125, %s126
    %p137 = scmp.eq.s32.totalorder %s14, 0
    %p138 = por %p136, %p137
    %p139 = scmp.ne.s32.totalorder %s125, %s126
    %p140 = scmp.eq.s32.totalorder %s15, 1
    %p141 = por %p139, %p140
    %p143 = scmp.ne.s32.totalorder %s126, %s142
    %p144 = scmp.eq.s32.totalorder %s15, 0
    %p145 = por %p143, %p144
    %p146 = scmp.le.s32.totalorder 1, %s9
    %p147 = scmp.lt.s32.totalorder %s9, 3
    %p148 = pnand %p146, %p147
    %p149 = pneg %p148
    // Predicated region
    $region9: #{_lambda_.4} parent=5 // pred_check
      _
    $region10: #{_lambda_.4} parent=5 // pred_check_branch
      %151 = sbr.rel (%p148) target = $region12
    $region11: #{_lambda_.4} parent=5 // pred_region
      %s152 = ssub.s32 %s9, 1
      // Predicated region
      $region13: #{_lambda_.4} parent=11 // pred_check
        %p153 = pneg %p84
      $region14: #{_lambda_.4} parent=11 // pred_check_branch
        %155 = sbr.rel (%p153) target = $region16
      $region15: #{_lambda_.4} parent=11 // pred_region
        %s156 = smul.u32 16, %s21
        %p157 = scmp.lt.s32.totalorder %s156, 15
        %s158 = scalar_select %p157, %s156, 15
        %p159 = scmp.lt.s32.totalorder %s20, 0
        %s160 = scalar_select %p159, %s20, 0
        %s161 = sadd.s32 %s160, %s158
        %s162 = smul.addr %s161, 4
        %s163 = scalar_lea.vmem %s1, %s162
        %s164 = smul.u32 16, %s21
      $region16: #{_lambda_.4} parent=11 // pred_fallthru
        _
      // Predicated region
      $region17: #{_lambda_.4} parent=11 // pred_check
        %p165 = pneg %p110
      $region18: #{_lambda_.4} parent=11 // pred_check_branch
        %167 = sbr.rel (%p165) target = $region20
      $region19: #{_lambda_.4} parent=11 // pred_region
        %p168 = scmp.lt.s32.totalorder %s20, 0
        %s169 = scalar_select %p168, %s20, 0
        %s170 = scalar_lea.vmem %s2, %s169
      $region20: #{_lambda_.4} parent=11 // pred_fallthru
        _
    $region12: #{_lambda_.4} parent=5 // pred_fallthru
      _
    %p171 = scmp.lt.s32.totalorder %s9, 2
    // Predicated region
    $region21: #{_lambda_.4} parent=5 // pred_check
      %p172 = pneg %p171
    $region22: #{_lambda_.4} parent=5 // pred_check_branch
      %174 = sbr.rel (%p172) target = $region24
    $region23: #{_lambda_.4} parent=5 // pred_region
      // Predicated region
      $region25: #{_lambda_.4} parent=23 // pred_check
        %p175 = pneg %p50
      $region26: #{_lambda_.4} parent=23 // pred_check_branch
        %177 = sbr.rel (%p175) target = $region28
      $region27: #{_lambda_.4} parent=23 // pred_region
        %s178 = smul.u32 32, %s16
        %p179 = scmp.lt.s32.totalorder %s178, 63
        %s180 = scalar_select %p179, %s178, 63
        %p181 = scmp.lt.s32.totalorder %s18, 0
        %s182 = scalar_select %p181, %s18, 0
        %s183 = sadd.s32 %s182, %s180
        %s184 = smul.addr %s183, 4
        %s185 = scalar_lea.vmem %s0, %s184
        %s186 = smul.u32 32, %s16
      $region28: #{_lambda_.4} parent=23 // pred_fallthru
        _
    $region24: #{_lambda_.4} parent=5 // pred_fallthru
      _
    %p187 = scmp.le.s32.totalorder 1, %s9
    %p188 = scmp.lt.s32.totalorder %s9, 3
    %p189 = pnand %p187, %p188
    %p190 = pneg %p189
    // Predicated region
    $region29: #{_lambda_.4} parent=5 // pred_check
      _
    $region30: #{_lambda_.4} parent=5 // pred_check_branch
      %192 = sbr.rel (%p189) target = $region32
    $region31: #{_lambda_.4} parent=5 // pred_region
      %s193 = ssub.s32 %s9, 1
      %s194 = smul.u32 32, %s19
      %p195 = scmp.lt.s32.totalorder %s194, 63
      %s196 = scalar_select %p195, %s194, 63
      %p197 = scmp.lt.s32.totalorder %s21, 0
      %s198 = scalar_select %p197, %s21, 0
      %s199 = sadd.s32 %s198, %s196
      %s200 = smul.addr %s199, 4
      %s201 = scalar_lea.vmem %s0, %s200
      %p202 = pneg %p56
      %p203 = pneg %p53
      %s204 = smul.u32 16, %s21
      %p205 = scmp.lt.s32.totalorder %s204, 15
      %s206 = scalar_select %p205, %s204, 15
      %p207 = scmp.lt.s32.totalorder %s20, 0
      %s208 = scalar_select %p207, %s20, 0
      %s209 = sadd.s32 %s208, %s206
      %s210 = smul.addr %s209, 4
      %s211 = scalar_lea.vmem %s1, %s210
      %p212 = pneg %p84
      %p213 = pneg %p81
      %p214 = scmp.lt.s32.totalorder %s20, 0
      %s215 = scalar_select %p214, %s20, 0
      %s216 = scalar_lea.vmem %s2, %s215
      %p217 = pneg %p110
      %p218 = pneg %p107
      %p219 = pneg %p138
      %p220 = pneg %p135
      %s221 = smul.u32 32, %s19
      %p222 = scmp.lt.s32.totalorder %s221, 63
      %s223 = scalar_select %p222, %s221, 63
      %p224 = scmp.lt.s32.totalorder %s20, 0
      %s225 = scalar_select %p224, %s20, 0
      %s226 = sadd.s32 %s225, %s223
      %s227 = smul.addr %s226, 8
      %s228 = scalar_lea.vmem %s3, %s227
      %s229 = smul.u32 32, %s19
      %p230 = scmp.lt.s32.totalorder %s229, 63
      %s231 = scalar_select %p230, %s229, 63
      %p232 = scmp.lt.s32.totalorder %s21, 0
      %s233 = scalar_select %p232, %s21, 0
      %s234 = sadd.s32 %s233, %s231
      %s235 = smul.addr %s234, 4
      %s236 = scalar_lea.vmem %s0, %s235
      %s237 = smul.u32 32, %s19
      %s238 = smul.u32 16, %s21
      %p239 = scmp.lt.s32.totalorder %s238, 15
      %s240 = scalar_select %p239, %s238, 15
      %p241 = scmp.lt.s32.totalorder %s20, 0
      %s242 = scalar_select %p241, %s20, 0
      %s243 = sadd.s32 %s242, %s240
      %s244 = smul.addr %s243, 4
      %s245 = scalar_lea.vmem %s1, %s244
      %s246 = smul.u32 16, %s21
      %p247 = scmp.lt.s32.totalorder %s20, 0
      %s248 = scalar_select %p247, %s20, 0
      %s249 = scalar_lea.vmem %s2, %s248
      %s250 = smul.u32 32, %s19
      %p251 = scmp.lt.s32.totalorder %s250, 63
      %s252 = scalar_select %p251, %s250, 63
      %p253 = scmp.lt.s32.totalorder %s20, 0
      %s254 = scalar_select %p253, %s20, 0
      %s255 = sadd.s32 %s254, %s252
      %s256 = smul.addr %s255, 8
      %s257 = scalar_lea.vmem %s3, %s256
      %s258 = smul.u32 32, %s19
      %p260 = scmp.eq.s32.totalorder %s21, 0
      // Predicated region
      $region33: #{_lambda_.4} parent=31 // pred_check
        %p261 = pneg %p260
      $region34: #{_lambda_.4} parent=31 // pred_check_branch
        %263 = sbr.rel (%p261) target = $region36
      $region35: #{_lambda_.4} parent=31 // pred_region
        %264 = vst [vmem:[#allocation2] sm:$0xff] 0.0
        %265 = vst [vmem:[#allocation2 + $0x8] sm:$0xff] 0.0
        %266 = vst [vmem:[#allocation2 + $0x10] sm:$0xff] 0.0
        %267 = vst [vmem:[#allocation2 + $0x18] sm:$0xff] 0.0
        %268 = vst [vmem:[#allocation2 + $0x20] sm:$0xff] 0.0
        %269 = vst [vmem:[#allocation2 + $0x28] sm:$0xff] 0.0
        %270 = vst [vmem:[#allocation2 + $0x30] sm:$0xff] 0.0
        %271 = vst [vmem:[#allocation2 + $0x38] sm:$0xff] 0.0
        %272 = vst [vmem:[#allocation2 + $0x40] sm:$0xff] 0.0
        %273 = vst [vmem:[#allocation2 + $0x48] sm:$0xff] 0.0
        %274 = vst [vmem:[#allocation2 + $0x50] sm:$0xff] 0.0
        %275 = vst [vmem:[#allocation2 + $0x58] sm:$0xff] 0.0
        %276 = vst [vmem:[#allocation2 + $0x60] sm:$0xff] 0.0
        %277 = vst [vmem:[#allocation2 + $0x68] sm:$0xff] 0.0
        %278 = vst [vmem:[#allocation2 + $0x70] sm:$0xff] 0.0
        %279 = vst [vmem:[#allocation2 + $0x78] sm:$0xff] 0.0
        %280 = vst [vmem:[#allocation2 + $0x80] sm:$0xff] 0.0
        %281 = vst [vmem:[#allocation2 + $0x88] sm:$0xff] 0.0
        %282 = vst [vmem:[#allocation2 + $0x90] sm:$0xff] 0.0
        %283 = vst [vmem:[#allocation2 + $0x98] sm:$0xff] 0.0
        %284 = vst [vmem:[#allocation2 + $0xa0] sm:$0xff] 0.0
        %285 = vst [vmem:[#allocation2 + $0xa8] sm:$0xff] 0.0
        %286 = vst [vmem:[#allocation2 + $0xb0] sm:$0xff] 0.0
        %287 = vst [vmem:[#allocation2 + $0xb8] sm:$0xff] 0.0
        %288 = vst [vmem:[#allocation2 + $0xc0] sm:$0xff] 0.0
        %289 = vst [vmem:[#allocation2 + $0xc8] sm:$0xff] 0.0
        %290 = vst [vmem:[#allocation2 + $0xd0] sm:$0xff] 0.0
        %291 = vst [vmem:[#allocation2 + $0xd8] sm:$0xff] 0.0
        %292 = vst [vmem:[#allocation2 + $0xe0] sm:$0xff] 0.0
        %293 = vst [vmem:[#allocation2 + $0xe8] sm:$0xff] 0.0
        %294 = vst [vmem:[#allocation2 + $0xf0] sm:$0xff] 0.0
        %295 = vst [vmem:[#allocation2 + $0xf8] sm:$0xff] 0.0
      $region36: #{_lambda_.4} parent=31 // pred_fallthru
        _
      %v296 = vld [vmem:[#allocation2] sm:$0xff]
      %v297 = vld [vmem:[#allocation2 + $0x8] sm:$0xff]
      %v298 = vld [vmem:[#allocation2 + $0x10] sm:$0xff]
      %v299 = vld [vmem:[#allocation2 + $0x18] sm:$0xff]
      %v300 = vld [vmem:[#allocation2 + $0x20] sm:$0xff]
      %v301 = vld [vmem:[#allocation2 + $0x28] sm:$0xff]
      %v302 = vld [vmem:[#allocation2 + $0x30] sm:$0xff]
      %v303 = vld [vmem:[#allocation2 + $0x38] sm:$0xff]
      %v304 = vld [vmem:[#allocation2 + $0x40] sm:$0xff]
      %v305 = vld [vmem:[#allocation2 + $0x48] sm:$0xff]
      %v306 = vld [vmem:[#allocation2 + $0x50] sm:$0xff]
      %v307 = vld [vmem:[#allocation2 + $0x58] sm:$0xff]
      %v308 = vld [vmem:[#allocation2 + $0x60] sm:$0xff]
      %v309 = vld [vmem:[#allocation2 + $0x68] sm:$0xff]
      %v310 = vld [vmem:[#allocation2 + $0x70] sm:$0xff]
      %v311 = vld [vmem:[#allocation2 + $0x78] sm:$0xff]
      %v312 = vld [vmem:[#allocation2 + $0x80] sm:$0xff]
      %v313 = vld [vmem:[#allocation2 + $0x88] sm:$0xff]
      %v314 = vld [vmem:[#allocation2 + $0x90] sm:$0xff]
      %v315 = vld [vmem:[#allocation2 + $0x98] sm:$0xff]
      %v316 = vld [vmem:[#allocation2 + $0xa0] sm:$0xff]
      %v317 = vld [vmem:[#allocation2 + $0xa8] sm:$0xff]
      %v318 = vld [vmem:[#allocation2 + $0xb0] sm:$0xff]
      %v319 = vld [vmem:[#allocation2 + $0xb8] sm:$0xff]
      %v320 = vld [vmem:[#allocation2 + $0xc0] sm:$0xff]
      %v321 = vld [vmem:[#allocation2 + $0xc8] sm:$0xff]
      %v322 = vld [vmem:[#allocation2 + $0xd0] sm:$0xff]
      %v323 = vld [vmem:[#allocation2 + $0xd8] sm:$0xff]
      %v324 = vld [vmem:[#allocation2 + $0xe0] sm:$0xff]
      %v325 = vld [vmem:[#allocation2 + $0xe8] sm:$0xff]
      %v326 = vld [vmem:[#allocation2 + $0xf0] sm:$0xff]
      %v327 = vld [vmem:[#allocation2 + $0xf8] sm:$0xff]
      %v328 = vld [vmem:[%s236] sm:$0xf]
      %v329 = vld [vmem:[%s236 + $0x4] sm:$0xf]
      %v330 = vld [vmem:[%s236 + $0x8] sm:$0xf]
      %v331 = vld [vmem:[%s236 + $0xc] sm:$0xf]
      %v332 = vld [vmem:[%s236 + $0x10] sm:$0xf]
      %v333 = vld [vmem:[%s236 + $0x14] sm:$0xf]
      %v334 = vld [vmem:[%s236 + $0x18] sm:$0xf]
      %v335 = vld [vmem:[%s236 + $0x1c] sm:$0xf]
      %v336 = vld [vmem:[%s236 + $0x20] sm:$0xf]
      %v337 = vld [vmem:[%s236 + $0x24] sm:$0xf]
      %v338 = vld [vmem:[%s236 + $0x28] sm:$0xf]
      %v339 = vld [vmem:[%s236 + $0x2c] sm:$0xf]
      %v340 = vld [vmem:[%s236 + $0x30] sm:$0xf]
      %v341 = vld [vmem:[%s236 + $0x34] sm:$0xf]
      %v342 = vld [vmem:[%s236 + $0x38] sm:$0xf]
      %v343 = vld [vmem:[%s236 + $0x3c] sm:$0xf]
      %v344 = vld [vmem:[%s236 + $0x40] sm:$0xf]
      %v345 = vld [vmem:[%s236 + $0x44] sm:$0xf]
      %v346 = vld [vmem:[%s236 + $0x48] sm:$0xf]
      %v347 = vld [vmem:[%s236 + $0x4c] sm:$0xf]
      %v348 = vld [vmem:[%s236 + $0x50] sm:$0xf]
      %v349 = vld [vmem:[%s236 + $0x54] sm:$0xf]
      %v350 = vld [vmem:[%s236 + $0x58] sm:$0xf]
      %v351 = vld [vmem:[%s236 + $0x5c] sm:$0xf]
      %v352 = vld [vmem:[%s236 + $0x60] sm:$0xf]
      %v353 = vld [vmem:[%s236 + $0x64] sm:$0xf]
      %v354 = vld [vmem:[%s236 + $0x68] sm:$0xf]
      %v355 = vld [vmem:[%s236 + $0x6c] sm:$0xf]
      %v356 = vld [vmem:[%s236 + $0x70] sm:$0xf]
      %v357 = vld [vmem:[%s236 + $0x74] sm:$0xf]
      %v358 = vld [vmem:[%s236 + $0x78] sm:$0xf]
      %v359 = vld [vmem:[%s236 + $0x7c] sm:$0xf]
      %v360 = vld [vmem:[%s245] sm:$0xf]
      %v361 = vld [vmem:[%s245 + $0x4] sm:$0xf]
      %v362 = vld [vmem:[%s245 + $0x8] sm:$0xf]
      %v363 = vld [vmem:[%s245 + $0xc] sm:$0xf]
      %v364 = vld [vmem:[%s245 + $0x10] sm:$0xf]
      %v365 = vld [vmem:[%s245 + $0x14] sm:$0xf]
      %v366 = vld [vmem:[%s245 + $0x18] sm:$0xf]
      %v367 = vld [vmem:[%s245 + $0x1c] sm:$0xf]
      %v368 = vld [vmem:[%s245 + $0x20] sm:$0xf]
      %v369 = vld [vmem:[%s245 + $0x24] sm:$0xf]
      %v370 = vld [vmem:[%s245 + $0x28] sm:$0xf]
      %v371 = vld [vmem:[%s245 + $0x2c] sm:$0xf]
      %v372 = vld [vmem:[%s245 + $0x30] sm:$0xf]
      %v373 = vld [vmem:[%s245 + $0x34] sm:$0xf]
      %v374 = vld [vmem:[%s245 + $0x38] sm:$0xf]
      %v375 = vld [vmem:[%s245 + $0x3c] sm:$0xf]
      %v408 = vunpack.c.l.b16 %v328
      %v409 = vunpack.c.l.b16 %v329
      %v410 = vunpack.c.l.b16 %v330
      %v411 = vunpack.c.l.b16 %v331
      %v412 = vunpack.c.l.b16 %v332
      %v413 = vunpack.c.l.b16 %v333
      %v414 = vunpack.c.l.b16 %v334
      %v415 = vunpack.c.l.b16 %v335
      %v416 = vunpack.c.l.b16 %v336
      %v417 = vunpack.c.l.b16 %v337
      %v418 = vunpack.c.l.b16 %v338
      %v419 = vunpack.c.l.b16 %v339
      %v420 = vunpack.c.l.b16 %v340
      %v421 = vunpack.c.l.b16 %v341
      %v422 = vunpack.c.l.b16 %v342
      %v423 = vunpack.c.l.b16 %v343
      %v424 = vunpack.c.l.b16 %v344
      %v425 = vunpack.c.l.b16 %v345
      %v426 = vunpack.c.l.b16 %v346
      %v427 = vunpack.c.l.b16 %v347
      %v428 = vunpack.c.l.b16 %v348
      %v429 = vunpack.c.l.b16 %v349
      %v430 = vunpack.c.l.b16 %v350
      %v431 = vunpack.c.l.b16 %v351
      %v432 = vunpack.c.l.b16 %v352
      %v433 = vunpack.c.l.b16 %v353
      %v434 = vunpack.c.l.b16 %v354
      %v435 = vunpack.c.l.b16 %v355
      %v436 = vunpack.c.l.b16 %v356
      %v437 = vunpack.c.l.b16 %v357
      %v438 = vunpack.c.l.b16 %v358
      %v439 = vunpack.c.l.b16 %v359
      %v440 = vpack.c.b16 %v409, %v408
      %v441 = vpack.c.b16 %v411, %v410
      %v442 = vpack.c.b16 %v413, %v412
      %v443 = vpack.c.b16 %v415, %v414
      %v444 = vpack.c.b16 %v417, %v416
      %v445 = vpack.c.b16 %v419, %v418
      %v446 = vpack.c.b16 %v421, %v420
      %v447 = vpack.c.b16 %v423, %v422
      %v448 = vpack.c.b16 %v425, %v424
      %v449 = vpack.c.b16 %v427, %v426
      %v450 = vpack.c.b16 %v429, %v428
      %v451 = vpack.c.b16 %v431, %v430
      %v452 = vpack.c.b16 %v433, %v432
      %v453 = vpack.c.b16 %v435, %v434
      %v454 = vpack.c.b16 %v437, %v436
      %v455 = vpack.c.b16 %v439, %v438
      %v488 = vunpack.c.l.b16 %v360
      %v489 = vunpack.c.l.b16 %v361
      %v490 = vunpack.c.l.b16 %v362
      %v491 = vunpack.c.l.b16 %v363
      %v492 = vunpack.c.l.b16 %v364
      %v493 = vunpack.c.l.b16 %v365
      %v494 = vunpack.c.l.b16 %v366
      %v495 = vunpack.c.l.b16 %v367
      %v496 = vunpack.c.l.b16 %v368
      %v497 = vunpack.c.l.b16 %v369
      %v498 = vunpack.c.l.b16 %v370
      %v499 = vunpack.c.l.b16 %v371
      %v500 = vunpack.c.l.b16 %v372
      %v501 = vunpack.c.l.b16 %v373
      %v502 = vunpack.c.l.b16 %v374
      %v503 = vunpack.c.l.b16 %v375
      %v504 = vpack.c.b16 %v489, %v488
      %v505 = vpack.c.b16 %v491, %v490
      %v506 = vpack.c.b16 %v493, %v492
      %v507 = vpack.c.b16 %v495, %v494
      %v508 = vpack.c.b16 %v497, %v496
      %v509 = vpack.c.b16 %v499, %v498
      %v510 = vpack.c.b16 %v501, %v500
      %v511 = vpack.c.b16 %v503, %v502
      %520 = vmatprep.subr.bf16.mxu0 0
      %521 = vmatpush1.bf16.msra.mxu0 %v504
      %522 = vmatprep.subr.bf16.mxu0 0
      %523 = vmatpush1.bf16.msra.mxu0 %v505
      %524 = vmatprep.subr.bf16.mxu0 0
      %525 = vmatpush1.bf16.msra.mxu0 %v506
      %526 = vmatprep.subr.bf16.mxu0 0
      %527 = vmatpush1.bf16.msra.mxu0 %v507
      %528 = vmatprep.subr.bf16.mxu0 0
      %529 = vmatpush1.bf16.msra.mxu0 %v508
      %530 = vmatprep.subr.bf16.mxu0 0
      %531 = vmatpush1.bf16.msra.mxu0 %v509
      %532 = vmatprep.subr.bf16.mxu0 0
      %533 = vmatpush1.bf16.msra.mxu0 %v510
      %534 = vmatprep.subr.bf16.mxu0 0
      %535 = vmatpush1.bf16.msra.mxu0 %v511
      %536 = vmatprep.subr.bf16.mxu0 0
      %537 = vmatpush1.bf16.msra.mxu0 0
      %538 = vmatprep.subr.bf16.mxu0 0
      %539 = vmatpush1.bf16.msra.mxu0 0
      %540 = vmatprep.subr.bf16.mxu0 0
      %541 = vmatpush1.bf16.msra.mxu0 0
      %542 = vmatprep.subr.bf16.mxu0 0
      %543 = vmatpush1.bf16.msra.mxu0 0
      %544 = vmatprep.subr.bf16.mxu0 0
      %545 = vmatpush1.bf16.msra.mxu0 0
      %546 = vmatprep.subr.bf16.mxu0 0
      %547 = vmatpush1.bf16.msra.mxu0 0
      %548 = vmatprep.subr.bf16.mxu0 0
      %549 = vmatpush1.bf16.msra.mxu0 0
      %550 = vmatprep.subr.bf16.mxu0 0
      %551 = vmatpush1.bf16.msra.mxu0 0
      %552 = vmatprep.mubr.bf16.mxu0 0
      %553 = vmatmul.mubr.bf16.gmra.mrb[0].mxu0 %v440
      %v554 = vpop.f32.mrb[0].mxu0
      %v555 = vadd.f32 0.0, %v554
      %v556 = vpop.f32.mrb[0].mxu0
      %v557 = vpop.f32.mrb[0].mxu0
      %v558 = vadd.f32 0.0, %v557
      %v559 = vpop.f32.mrb[0].mxu0
      %560 = vmatprep.mubr.bf16.mxu0 0
      %561 = vmatmul.mubr.bf16.gmra.mrb[0].mxu0 %v441
      %v562 = vpop.f32.mrb[0].mxu0
      %v563 = vadd.f32 0.0, %v562
      %v564 = vpop.f32.mrb[0].mxu0
      %v565 = vpop.f32.mrb[0].mxu0
      %v566 = vadd.f32 0.0, %v565
      %v567 = vpop.f32.mrb[0].mxu0
      %568 = vmatprep.mubr.bf16.mxu0 0
      %569 = vmatmul.mubr.bf16.gmra.mrb[0].mxu0 %v442
      %v570 = vpop.f32.mrb[0].mxu0
      %v571 = vadd.f32 0.0, %v570
      %v572 = vpop.f32.mrb[0].mxu0
      %v573 = vpop.f32.mrb[0].mxu0
      %v574 = vadd.f32 0.0, %v573
      %v575 = vpop.f32.mrb[0].mxu0
      %576 = vmatprep.mubr.bf16.mxu0 0
      %577 = vmatmul.mubr.bf16.gmra.mrb[0].mxu0 %v443
      %v578 = vpop.f32.mrb[0].mxu0
      %v579 = vadd.f32 0.0, %v578
      %v580 = vpop.f32.mrb[0].mxu0
      %v581 = vpop.f32.mrb[0].mxu0
      %v582 = vadd.f32 0.0, %v581
      %v583 = vpop.f32.mrb[0].mxu0
      %584 = vmatprep.mubr.bf16.mxu0 0
      %585 = vmatmul.mubr.bf16.gmra.mrb[0].mxu0 %v444
      %v586 = vpop.f32.mrb[0].mxu0
      %v587 = vadd.f32 0.0, %v586
      %v588 = vpop.f32.mrb[0].mxu0
      %v589 = vpop.f32.mrb[0].mxu0
      %v590 = vadd.f32 0.0, %v589
      %v591 = vpop.f32.mrb[0].mxu0
      %592 = vmatprep.mubr.bf16.mxu0 0
      %593 = vmatmul.mubr.bf16.gmra.mrb[0].mxu0 %v445
      %v594 = vpop.f32.mrb[0].mxu0
      %v595 = vadd.f32 0.0, %v594
      %v596 = vpop.f32.mrb[0].mxu0
      %v597 = vpop.f32.mrb[0].mxu0
      %v598 = vadd.f32 0.0, %v597
      %v599 = vpop.f32.mrb[0].mxu0
      %600 = vmatprep.mubr.bf16.mxu0 0
      %601 = vmatmul.mubr.bf16.gmra.mrb[0].mxu0 %v446
      %v602 = vpop.f32.mrb[0].mxu0
      %v603 = vadd.f32 0.0, %v602
      %v604 = vpop.f32.mrb[0].mxu0
      %v605 = vpop.f32.mrb[0].mxu0
      %v606 = vadd.f32 0.0, %v605
      %v607 = vpop.f32.mrb[0].mxu0
      %608 = vmatprep.mubr.bf16.mxu0 0
      %609 = vmatmul.mubr.bf16.gmra.mrb[0].mxu0 %v447
      %v610 = vpop.f32.mrb[0].mxu0
      %v611 = vadd.f32 0.0, %v610
      %v612 = vpop.f32.mrb[0].mxu0
      %v613 = vpop.f32.mrb[0].mxu0
      %v614 = vadd.f32 0.0, %v613
      %v615 = vpop.f32.mrb[0].mxu0
      %616 = vmatprep.mubr.bf16.mxu0 0
      %617 = vmatmul.mubr.bf16.gmra.mrb[0].mxu0 %v448
      %v618 = vpop.f32.mrb[0].mxu0
      %v619 = vadd.f32 0.0, %v618
      %v620 = vpop.f32.mrb[0].mxu0
      %v621 = vpop.f32.mrb[0].mxu0
      %v622 = vadd.f32 0.0, %v621
      %v623 = vpop.f32.mrb[0].mxu0
      %624 = vmatprep.mubr.bf16.mxu0 0
      %625 = vmatmul.mubr.bf16.gmra.mrb[0].mxu0 %v449
      %v626 = vpop.f32.mrb[0].mxu0
      %v627 = vadd.f32 0.0, %v626
      %v628 = vpop.f32.mrb[0].mxu0
      %v629 = vpop.f32.mrb[0].mxu0
      %v630 = vadd.f32 0.0, %v629
      %v631 = vpop.f32.mrb[0].mxu0
      %632 = vmatprep.mubr.bf16.mxu0 0
      %633 = vmatmul.mubr.bf16.gmra.mrb[0].mxu0 %v450
      %v634 = vpop.f32.mrb[0].mxu0
      %v635 = vadd.f32 0.0, %v634
      %v636 = vpop.f32.mrb[0].mxu0
      %v637 = vpop.f32.mrb[0].mxu0
      %v638 = vadd.f32 0.0, %v637
      %v639 = vpop.f32.mrb[0].mxu0
      %640 = vmatprep.mubr.bf16.mxu0 0
      %641 = vmatmul.mubr.bf16.gmra.mrb[0].mxu0 %v451
      %v642 = vpop.f32.mrb[0].mxu0
      %v643 = vadd.f32 0.0, %v642
      %v644 = vpop.f32.mrb[0].mxu0
      %v645 = vpop.f32.mrb[0].mxu0
      %v646 = vadd.f32 0.0, %v645
      %v647 = vpop.f32.mrb[0].mxu0
      %648 = vmatprep.mubr.bf16.mxu0 0
      %649 = vmatmul.mubr.bf16.gmra.mrb[0].mxu0 %v452
      %v650 = vpop.f32.mrb[0].mxu0
      %v651 = vadd.f32 0.0, %v650
      %v652 = vpop.f32.mrb[0].mxu0
      %v653 = vpop.f32.mrb[0].mxu0
      %v654 = vadd.f32 0.0, %v653
      %v655 = vpop.f32.mrb[0].mxu0
      %656 = vmatprep.mubr.bf16.mxu0 0
      %657 = vmatmul.mubr.bf16.gmra.mrb[0].mxu0 %v453
      %v658 = vpop.f32.mrb[0].mxu0
      %v659 = vadd.f32 0.0, %v658
      %v660 = vpop.f32.mrb[0].mxu0
      %v661 = vpop.f32.mrb[0].mxu0
      %v662 = vadd.f32 0.0, %v661
      %v663 = vpop.f32.mrb[0].mxu0
      %664 = vmatprep.mubr.bf16.mxu0 0
      %665 = vmatmul.mubr.bf16.gmra.mrb[0].mxu0 %v454
      %v666 = vpop.f32.mrb[0].mxu0
      %v667 = vadd.f32 0.0, %v666
      %v668 = vpop.f32.mrb[0].mxu0
      %v669 = vpop.f32.mrb[0].mxu0
      %v670 = vadd.f32 0.0, %v669
      %v671 = vpop.f32.mrb[0].mxu0
      %672 = vmatprep.mubr.bf16.mxu0 0
      %673 = vmatmul.mubr.bf16.gmra.mrb[0].mxu0 %v455
      %v674 = vpop.f32.mrb[0].mxu0
      %v675 = vadd.f32 0.0, %v674
      %v676 = vpop.f32.mrb[0].mxu0
      %v677 = vpop.f32.mrb[0].mxu0
      %v678 = vadd.f32 0.0, %v677
      %v679 = vpop.f32.mrb[0].mxu0
      %680 = vdwg.mxu0
      %v681 = vadd.f32 %v296, %v555
      %v682 = vadd.f32 %v297, %v558
      %v683 = vadd.f32 %v298, %v563
      %v684 = vadd.f32 %v299, %v566
      %v685 = vadd.f32 %v300, %v571
      %v686 = vadd.f32 %v301, %v574
      %v687 = vadd.f32 %v302, %v579
      %v688 = vadd.f32 %v303, %v582
      %v689 = vadd.f32 %v304, %v587
      %v690 = vadd.f32 %v305, %v590
      %v691 = vadd.f32 %v306, %v595
      %v692 = vadd.f32 %v307, %v598
      %v693 = vadd.f32 %v308, %v603
      %v694 = vadd.f32 %v309, %v606
      %v695 = vadd.f32 %v310, %v611
      %v696 = vadd.f32 %v311, %v614
      %v697 = vadd.f32 %v312, %v619
      %v698 = vadd.f32 %v313, %v622
      %v699 = vadd.f32 %v314, %v627
      %v700 = vadd.f32 %v315, %v630
      %v701 = vadd.f32 %v316, %v635
      %v702 = vadd.f32 %v317, %v638
      %v703 = vadd.f32 %v318, %v643
      %v704 = vadd.f32 %v319, %v646
      %v705 = vadd.f32 %v320, %v651
      %v706 = vadd.f32 %v321, %v654
      %v707 = vadd.f32 %v322, %v659
      %v708 = vadd.f32 %v323, %v662
      %v709 = vadd.f32 %v324, %v667
      %v710 = vadd.f32 %v325, %v670
      %v711 = vadd.f32 %v326, %v675
      %v712 = vadd.f32 %v327, %v678
      %713 = vst [vmem:[#allocation2] sm:$0xff] %v681
      %714 = vst [vmem:[#allocation2 + $0x8] sm:$0xff] %v682
      %715 = vst [vmem:[#allocation2 + $0x10] sm:$0xff] %v683
      %716 = vst [vmem:[#allocation2 + $0x18] sm:$0xff] %v684
      %717 = vst [vmem:[#allocation2 + $0x20] sm:$0xff] %v685
      %718 = vst [vmem:[#allocation2 + $0x28] sm:$0xff] %v686
      %719 = vst [vmem:[#allocation2 + $0x30] sm:$0xff] %v687
      %720 = vst [vmem:[#allocation2 + $0x38] sm:$0xff] %v688
      %721 = vst [vmem:[#allocation2 + $0x40] sm:$0xff] %v689
      %722 = vst [vmem:[#allocation2 + $0x48] sm:$0xff] %v690
      %723 = vst [vmem:[#allocation2 + $0x50] sm:$0xff] %v691
      %724 = vst [vmem:[#allocation2 + $0x58] sm:$0xff] %v692
      %725 = vst [vmem:[#allocation2 + $0x60] sm:$0xff] %v693
      %726 = vst [vmem:[#allocation2 + $0x68] sm:$0xff] %v694
      %727 = vst [vmem:[#allocation2 + $0x70] sm:$0xff] %v695
      %728 = vst [vmem:[#allocation2 + $0x78] sm:$0xff] %v696
      %729 = vst [vmem:[#allocation2 + $0x80] sm:$0xff] %v697
      %730 = vst [vmem:[#allocation2 + $0x88] sm:$0xff] %v698
      %731 = vst [vmem:[#allocation2 + $0x90] sm:$0xff] %v699
      %732 = vst [vmem:[#allocation2 + $0x98] sm:$0xff] %v700
      %733 = vst [vmem:[#allocation2 + $0xa0] sm:$0xff] %v701
      %734 = vst [vmem:[#allocation2 + $0xa8] sm:$0xff] %v702
      %735 = vst [vmem:[#allocation2 + $0xb0] sm:$0xff] %v703
      %736 = vst [vmem:[#allocation2 + $0xb8] sm:$0xff] %v704
      %737 = vst [vmem:[#allocation2 + $0xc0] sm:$0xff] %v705
      %738 = vst [vmem:[#allocation2 + $0xc8] sm:$0xff] %v706
      %739 = vst [vmem:[#allocation2 + $0xd0] sm:$0xff] %v707
      %740 = vst [vmem:[#allocation2 + $0xd8] sm:$0xff] %v708
      %741 = vst [vmem:[#allocation2 + $0xe0] sm:$0xff] %v709
      %742 = vst [vmem:[#allocation2 + $0xe8] sm:$0xff] %v710
      %743 = vst [vmem:[#allocation2 + $0xf0] sm:$0xff] %v711
      %744 = vst [vmem:[#allocation2 + $0xf8] sm:$0xff] %v712
      // Predicated region
      $region37: #{_lambda_.4} parent=31 // pred_check
        %p745 = pneg %p260
      $region38: #{_lambda_.4} parent=31 // pred_check_branch
        %747 = sbr.rel (%p745) target = $region40
      $region39: #{_lambda_.4} parent=31 // pred_region
        %v748 = vld [vmem:[#allocation2] sm:$0xff]
        %v749 = vld [vmem:[#allocation2 + $0x8] sm:$0xff]
        %v750 = vld [vmem:[#allocation2 + $0x10] sm:$0xff]
        %v751 = vld [vmem:[#allocation2 + $0x18] sm:$0xff]
        %v752 = vld [vmem:[#allocation2 + $0x20] sm:$0xff]
        %v753 = vld [vmem:[#allocation2 + $0x28] sm:$0xff]
        %v754 = vld [vmem:[#allocation2 + $0x30] sm:$0xff]
        %v755 = vld [vmem:[#allocation2 + $0x38] sm:$0xff]
        %v756 = vld [vmem:[#allocation2 + $0x40] sm:$0xff]
        %v757 = vld [vmem:[#allocation2 + $0x48] sm:$0xff]
        %v758 = vld [vmem:[#allocation2 + $0x50] sm:$0xff]
        %v759 = vld [vmem:[#allocation2 + $0x58] sm:$0xff]
        %v760 = vld [vmem:[#allocation2 + $0x60] sm:$0xff]
        %v761 = vld [vmem:[#allocation2 + $0x68] sm:$0xff]
        %v762 = vld [vmem:[#allocation2 + $0x70] sm:$0xff]
        %v763 = vld [vmem:[#allocation2 + $0x78] sm:$0xff]
        %v764 = vld [vmem:[#allocation2 + $0x80] sm:$0xff]
        %v765 = vld [vmem:[#allocation2 + $0x88] sm:$0xff]
        %v766 = vld [vmem:[#allocation2 + $0x90] sm:$0xff]
        %v767 = vld [vmem:[#allocation2 + $0x98] sm:$0xff]
        %v768 = vld [vmem:[#allocation2 + $0xa0] sm:$0xff]
        %v769 = vld [vmem:[#allocation2 + $0xa8] sm:$0xff]
        %v770 = vld [vmem:[#allocation2 + $0xb0] sm:$0xff]
        %v771 = vld [vmem:[#allocation2 + $0xb8] sm:$0xff]
        %v772 = vld [vmem:[#allocation2 + $0xc0] sm:$0xff]
        %v773 = vld [vmem:[#allocation2 + $0xc8] sm:$0xff]
        %v774 = vld [vmem:[#allocation2 + $0xd0] sm:$0xff]
        %v775 = vld [vmem:[#allocation2 + $0xd8] sm:$0xff]
        %v776 = vld [vmem:[#allocation2 + $0xe0] sm:$0xff]
        %v777 = vld [vmem:[#allocation2 + $0xe8] sm:$0xff]
        %v778 = vld [vmem:[#allocation2 + $0xf0] sm:$0xff]
        %v779 = vld [vmem:[#allocation2 + $0xf8] sm:$0xff]
        %v780 = vld [vmem:[%s249] sm:$0x1]
        %v782 = vlaneseq
        %v783 = vshrl.u32 %v782, 7
        %v784 = vsub.s32 0, %v783
        %v785 = vrot.slane %v780, %v784
        %v787 = vadd.f32 %v748, %v785
        %v788 = vadd.f32 %v749, %v785
        %v789 = vadd.f32 %v750, %v785
        %v790 = vadd.f32 %v751, %v785
        %v791 = vadd.f32 %v752, %v785
        %v792 = vadd.f32 %v753, %v785
        %v793 = vadd.f32 %v754, %v785
        %v794 = vadd.f32 %v755, %v785
        %v795 = vadd.f32 %v756, %v785
        %v796 = vadd.f32 %v757, %v785
        %v797 = vadd.f32 %v758, %v785
        %v798 = vadd.f32 %v759, %v785
        %v799 = vadd.f32 %v760, %v785
        %v800 = vadd.f32 %v761, %v785
        %v801 = vadd.f32 %v762, %v785
        %v802 = vadd.f32 %v763, %v785
        %v803 = vadd.f32 %v764, %v785
        %v804 = vadd.f32 %v765, %v785
        %v805 = vadd.f32 %v766, %v785
        %v806 = vadd.f32 %v767, %v785
        %v807 = vadd.f32 %v768, %v785
        %v808 = vadd.f32 %v769, %v785
        %v809 = vadd.f32 %v770, %v785
        %v810 = vadd.f32 %v771, %v785
        %v811 = vadd.f32 %v772, %v785
        %v812 = vadd.f32 %v773, %v785
        %v813 = vadd.f32 %v774, %v785
        %v814 = vadd.f32 %v775, %v785
        %v815 = vadd.f32 %v776, %v785
        %v816 = vadd.f32 %v777, %v785
        %v817 = vadd.f32 %v778, %v785
        %v818 = vadd.f32 %v779, %v785
        %vm819 = vcmp.ge.f32.partialorder %v787, 0.0
        %vm820 = vcmp.ge.f32.partialorder %v788, 0.0
        %vm821 = vcmp.ge.f32.partialorder %v789, 0.0
        %vm822 = vcmp.ge.f32.partialorder %v790, 0.0
        %vm823 = vcmp.ge.f32.partialorder %v791, 0.0
        %vm824 = vcmp.ge.f32.partialorder %v792, 0.0
        %vm825 = vcmp.ge.f32.partialorder %v793, 0.0
        %vm826 = vcmp.ge.f32.partialorder %v794, 0.0
        %vm827 = vcmp.ge.f32.partialorder %v795, 0.0
        %vm828 = vcmp.ge.f32.partialorder %v796, 0.0
        %vm829 = vcmp.ge.f32.partialorder %v797, 0.0
        %vm830 = vcmp.ge.f32.partialorder %v798, 0.0
        %vm831 = vcmp.ge.f32.partialorder %v799, 0.0
        %vm832 = vcmp.ge.f32.partialorder %v800, 0.0
        %vm833 = vcmp.ge.f32.partialorder %v801, 0.0
        %vm834 = vcmp.ge.f32.partialorder %v802, 0.0
        %vm835 = vcmp.ge.f32.partialorder %v803, 0.0
        %vm836 = vcmp.ge.f32.partialorder %v804, 0.0
        %vm837 = vcmp.ge.f32.partialorder %v805, 0.0
        %vm838 = vcmp.ge.f32.partialorder %v806, 0.0
        %vm839 = vcmp.ge.f32.partialorder %v807, 0.0
        %vm840 = vcmp.ge.f32.partialorder %v808, 0.0
        %vm841 = vcmp.ge.f32.partialorder %v809, 0.0
        %vm842 = vcmp.ge.f32.partialorder %v810, 0.0
        %vm843 = vcmp.ge.f32.partialorder %v811, 0.0
        %vm844 = vcmp.ge.f32.partialorder %v812, 0.0
        %vm845 = vcmp.ge.f32.partialorder %v813, 0.0
        %vm846 = vcmp.ge.f32.partialorder %v814, 0.0
        %vm847 = vcmp.ge.f32.partialorder %v815, 0.0
        %vm848 = vcmp.ge.f32.partialorder %v816, 0.0
        %vm849 = vcmp.ge.f32.partialorder %v817, 0.0
        %vm850 = vcmp.ge.f32.partialorder %v818, 0.0
        %v851 = vmul.f32 %v787, 0.2
        %v852 = vmul.f32 %v788, 0.2
        %v853 = vmul.f32 %v789, 0.2
        %v854 = vmul.f32 %v790, 0.2
        %v855 = vmul.f32 %v791, 0.2
        %v856 = vmul.f32 %v792, 0.2
        %v857 = vmul.f32 %v793, 0.2
        %v858 = vmul.f32 %v794, 0.2
        %v859 = vmul.f32 %v795, 0.2
        %v860 = vmul.f32 %v796, 0.2
        %v861 = vmul.f32 %v797, 0.2
        %v862 = vmul.f32 %v798, 0.2
        %v863 = vmul.f32 %v799, 0.2
        %v864 = vmul.f32 %v800, 0.2
        %v865 = vmul.f32 %v801, 0.2
        %v866 = vmul.f32 %v802, 0.2
        %v867 = vmul.f32 %v803, 0.2
        %v868 = vmul.f32 %v804, 0.2
        %v869 = vmul.f32 %v805, 0.2
        %v870 = vmul.f32 %v806, 0.2
        %v871 = vmul.f32 %v807, 0.2
        %v872 = vmul.f32 %v808, 0.2
        %v873 = vmul.f32 %v809, 0.2
        %v874 = vmul.f32 %v810, 0.2
        %v875 = vmul.f32 %v811, 0.2
        %v876 = vmul.f32 %v812, 0.2
        %v877 = vmul.f32 %v813, 0.2
        %v878 = vmul.f32 %v814, 0.2
        %v879 = vmul.f32 %v815, 0.2
        %v880 = vmul.f32 %v816, 0.2
        %v881 = vmul.f32 %v817, 0.2
        %v882 = vmul.f32 %v818, 0.2
        %v883 = vsel %vm819, %v787, %v851
        %v884 = vsel %vm820, %v788, %v852
        %v885 = vsel %vm821, %v789, %v853
        %v886 = vsel %vm822, %v790, %v854
        %v887 = vsel %vm823, %v791, %v855
        %v888 = vsel %vm824, %v792, %v856
        %v889 = vsel %vm825, %v793, %v857
        %v890 = vsel %vm826, %v794, %v858
        %v891 = vsel %vm827, %v795, %v859
        %v892 = vsel %vm828, %v796, %v860
        %v893 = vsel %vm829, %v797, %v861
        %v894 = vsel %vm830, %v798, %v862
        %v895 = vsel %vm831, %v799, %v863
        %v896 = vsel %vm832, %v800, %v864
        %v897 = vsel %vm833, %v801, %v865
        %v898 = vsel %vm834, %v802, %v866
        %v899 = vsel %vm835, %v803, %v867
        %v900 = vsel %vm836, %v804, %v868
        %v901 = vsel %vm837, %v805, %v869
        %v902 = vsel %vm838, %v806, %v870
        %v903 = vsel %vm839, %v807, %v871
        %v904 = vsel %vm840, %v808, %v872
        %v905 = vsel %vm841, %v809, %v873
        %v906 = vsel %vm842, %v810, %v874
        %v907 = vsel %vm843, %v811, %v875
        %v908 = vsel %vm844, %v812, %v876
        %v909 = vsel %vm845, %v813, %v877
        %v910 = vsel %vm846, %v814, %v878
        %v911 = vsel %vm847, %v815, %v879
        %v912 = vsel %vm848, %v816, %v880
        %v913 = vsel %vm849, %v817, %v881
        %v914 = vsel %vm850, %v818, %v882
        %v915 = vmul.f32 %v883, 1.4142135
        %v916 = vmul.f32 %v884, 1.4142135
        %v917 = vmul.f32 %v885, 1.4142135
        %v918 = vmul.f32 %v886, 1.4142135
        %v919 = vmul.f32 %v887, 1.4142135
        %v920 = vmul.f32 %v888, 1.4142135
        %v921 = vmul.f32 %v889, 1.4142135
        %v922 = vmul.f32 %v890, 1.4142135
        %v923 = vmul.f32 %v891, 1.4142135
        %v924 = vmul.f32 %v892, 1.4142135
        %v925 = vmul.f32 %v893, 1.4142135
        %v926 = vmul.f32 %v894, 1.4142135
        %v927 = vmul.f32 %v895, 1.4142135
        %v928 = vmul.f32 %v896, 1.4142135
        %v929 = vmul.f32 %v897, 1.4142135
        %v930 = vmul.f32 %v898, 1.4142135
        %v931 = vmul.f32 %v899, 1.4142135
        %v932 = vmul.f32 %v900, 1.4142135
        %v933 = vmul.f32 %v901, 1.4142135
        %v934 = vmul.f32 %v902, 1.4142135
        %v935 = vmul.f32 %v903, 1.4142135
        %v936 = vmul.f32 %v904, 1.4142135
        %v937 = vmul.f32 %v905, 1.4142135
        %v938 = vmul.f32 %v906, 1.4142135
        %v939 = vmul.f32 %v907, 1.4142135
        %v940 = vmul.f32 %v908, 1.4142135
        %v941 = vmul.f32 %v909, 1.4142135
        %v942 = vmul.f32 %v910, 1.4142135
        %v943 = vmul.f32 %v911, 1.4142135
        %v944 = vmul.f32 %v912, 1.4142135
        %v945 = vmul.f32 %v913, 1.4142135
        %v946 = vmul.f32 %v914, 1.4142135
        %947 = vst [vmem:[%s257] sm:$0xff] %v915
        %948 = vst [vmem:[%s257 + $0x8] sm:$0xff] %v916
        %949 = vst [vmem:[%s257 + $0x10] sm:$0xff] %v917
        %950 = vst [vmem:[%s257 + $0x18] sm:$0xff] %v918
        %951 = vst [vmem:[%s257 + $0x20] sm:$0xff] %v919
        %952 = vst [vmem:[%s257 + $0x28] sm:$0xff] %v920
        %953 = vst [vmem:[%s257 + $0x30] sm:$0xff] %v921
        %954 = vst [vmem:[%s257 + $0x38] sm:$0xff] %v922
        %955 = vst [vmem:[%s257 + $0x40] sm:$0xff] %v923
        %956 = vst [vmem:[%s257 + $0x48] sm:$0xff] %v924
        %957 = vst [vmem:[%s257 + $0x50] sm:$0xff] %v925
        %958 = vst [vmem:[%s257 + $0x58] sm:$0xff] %v926
        %959 = vst [vmem:[%s257 + $0x60] sm:$0xff] %v927
        %960 = vst [vmem:[%s257 + $0x68] sm:$0xff] %v928
        %961 = vst [vmem:[%s257 + $0x70] sm:$0xff] %v929
        %962 = vst [vmem:[%s257 + $0x78] sm:$0xff] %v930
        %963 = vst [vmem:[%s257 + $0x80] sm:$0xff] %v931
        %964 = vst [vmem:[%s257 + $0x88] sm:$0xff] %v932
        %965 = vst [vmem:[%s257 + $0x90] sm:$0xff] %v933
        %966 = vst [vmem:[%s257 + $0x98] sm:$0xff] %v934
        %967 = vst [vmem:[%s257 + $0xa0] sm:$0xff] %v935
        %968 = vst [vmem:[%s257 + $0xa8] sm:$0xff] %v936
        %969 = vst [vmem:[%s257 + $0xb0] sm:$0xff] %v937
        %970 = vst [vmem:[%s257 + $0xb8] sm:$0xff] %v938
        %971 = vst [vmem:[%s257 + $0xc0] sm:$0xff] %v939
        %972 = vst [vmem:[%s257 + $0xc8] sm:$0xff] %v940
        %973 = vst [vmem:[%s257 + $0xd0] sm:$0xff] %v941
        %974 = vst [vmem:[%s257 + $0xd8] sm:$0xff] %v942
        %975 = vst [vmem:[%s257 + $0xe0] sm:$0xff] %v943
        %976 = vst [vmem:[%s257 + $0xe8] sm:$0xff] %v944
        %977 = vst [vmem:[%s257 + $0xf0] sm:$0xff] %v945
        %978 = vst [vmem:[%s257 + $0xf8] sm:$0xff] %v946
      $region40: #{_lambda_.4} parent=31 // pred_fallthru
        _
      %s979 = smul.u32 32, %s19
      %p980 = scmp.lt.s32.totalorder %s979, 63
      %s981 = scalar_select %p980, %s979, 63
      %p982 = scmp.lt.s32.totalorder %s20, 0
      %s983 = scalar_select %p982, %s20, 0
      %s984 = sadd.s32 %s983, %s981
      %s985 = smul.addr %s984, 8
      %s986 = scalar_lea.vmem %s3, %s985
      // Predicated region
      $region41: #{_lambda_.4} parent=31 // pred_check
        %p987 = pneg %p135
      $region42: #{_lambda_.4} parent=31 // pred_check_branch
        %989 = sbr.rel (%p987) target = $region44
      $region43: #{_lambda_.4} parent=31 // pred_region
        %s990 = smul.u32 32, %s19
      $region44: #{_lambda_.4} parent=31 // pred_fallthru
        _
    $region32: #{_lambda_.4} parent=5 // pred_fallthru
      _
    %p991 = scmp.le.s32.totalorder 2, %s9
    // Predicated region
    $region45: #{_lambda_.4} parent=5 // pred_check
      %p992 = pneg %p991
    $region46: #{_lambda_.4} parent=5 // pred_check_branch
      %994 = sbr.rel (%p992) target = $region48
    $region47: #{_lambda_.4} parent=5 // pred_region
      %s995 = ssub.s32 %s9, 2
      // Predicated region
      $region49: #{_lambda_.4} parent=47 // pred_check
        %p996 = pneg %p141
      $region50: #{_lambda_.4} parent=47 // pred_check_branch
        %998 = sbr.rel (%p996) target = $region52
      $region51: #{_lambda_.4} parent=47 // pred_region
        %s999 = smul.u32 32, %s22
        %p1000 = scmp.lt.s32.totalorder %s999, 63
        %s1001 = scalar_select %p1000, %s999, 63
        %p1002 = scmp.lt.s32.totalorder %s23, 0
        %s1003 = scalar_select %p1002, %s23, 0
        %s1004 = sadd.s32 %s1003, %s1001
        %s1005 = smul.addr %s1004, 8
        %s1006 = scalar_lea.vmem %s3, %s1005
      $region52: #{_lambda_.4} parent=47 // pred_fallthru
        _
    $region48: #{_lambda_.4} parent=5 // pred_fallthru
      _
  $region6: #{_lambda_.4} parent=0 // loop_footer
    %s13 = sadd.s32 1, %s9
  $region7: #{_lambda_.4} parent=0 // loop_footer_branch
    %8 = sbr.rel target = $region3
  $region8: #{_lambda_.4} parent=0 // loop_exit
    _

// kernel: _lambda_.5
$region0: #{_lambda_.5}
  #allocation0 [shape = 'u32[]', space=smem, size = 0x4, offset = 0x4, fixed_abs, tag = 'smem constant byte address 0x4 - core index']
  #allocation1 [shape = 'u32[144,128]{1,0:T(1,128)}', space=vmem, size = 0x12000, scoped, tag = 'internal scratch']
  %s0 = inlined_call_operand.vmem [shape: f32[2,20,20,4], index: 0, kind: input, shape index: {}]
  %s1 = inlined_call_operand.vmem [shape: f32[2,17,17,4], index: 1, kind: output, shape index: {}]
  %s2 = sld [smem:[#allocation0]]
  $region37: #{_lambda_.5} parent=0
    _
  %s4 = ssub.s32 1, %s2
  %s5 = scalar_select 0, %s4, %s2
  loop: start=0, step=1, limit=4
  $region2: #{_lambda_.5} parent=0 // loop_pre_header
    _
  $region3: #{_lambda_.5} parent=0 // loop_header
    %s7 = sphi 0, %s11
    %p8 = scmp.ge.s32.totalorder %s7, 4
    %s17 = sphi 0, %s19
    %s20 = sphi 0, %s17
    %s21 = sphi 0, %s20
    %s37 = sphi 0, %s21
    %s43 = sphi 0, %s45
    %s46 = sphi 0, %s43
    %s47 = sphi 0, %s46
    %s63 = sphi 0, %s47
  $region4: #{_lambda_.5} parent=0 // loop_header_branch
    %10 = sbr.rel (%p8) target = $region8
  $region5: #{_lambda_.5} parent=0 // loop_body
    %s12 = ssub.s32 %s7, 1
    %s13 = ssub.s32 %s7, 2
    %s14 = sadd.s32 %s7, 1
    %s15 = ssub.s32 %s7, %s14
    %p16 = scmp.eq.s32.totalorder %s15, 0
    %s18 = sadd.s32 %s17, 1
    %s19 = scalar_select %p16, %s17, %s18
    %p22 = pneg %p16
    %p23 = scmp.eq.s32.totalorder %s7, 1
    %p24 = por %p22, %p23
    %p25 = scmp.ne.s32.totalorder %s17, %s20
    %p26 = scmp.eq.s32.totalorder %s7, 0
    %p27 = por %p25, %p26
    %p28 = scmp.ne.s32.totalorder %s17, %s20
    %p29 = scmp.eq.s32.totalorder %s12, 1
    %p30 = por %p28, %p29
    %p31 = scmp.ne.s32.totalorder %s20, %s21
    %p32 = scmp.eq.s32.totalorder %s12, 0
    %p33 = por %p31, %p32
    %p34 = scmp.ne.s32.totalorder %s20, %s21
    %p35 = scmp.eq.s32.totalorder %s13, 1
    %p36 = por %p34, %p35
    %p38 = scmp.ne.s32.totalorder %s21, %s37
    %p39 = scmp.eq.s32.totalorder %s13, 0
    %p40 = por %p38, %p39
    %s41 = ssub.s32 %s7, %s14
    %p42 = scmp.eq.s32.totalorder %s41, 0
    %s44 = sadd.s32 %s43, 1
    %s45 = scalar_select %p42, %s43, %s44
    %p48 = pneg %p42
    %p49 = scmp.eq.s32.totalorder %s7, 1
    %p50 = por %p48, %p49
    %p51 = scmp.ne.s32.totalorder %s43, %s46
    %p52 = scmp.eq.s32.totalorder %s7, 0
    %p53 = por %p51, %p52
    %p54 = scmp.ne.s32.totalorder %s43, %s46
    %p55 = scmp.eq.s32.totalorder %s12, 1
    %p56 = por %p54, %p55
    %p57 = scmp.ne.s32.totalorder %s46, %s47
    %p58 = scmp.eq.s32.totalorder %s12, 0
    %p59 = por %p57, %p58
    %p60 = scmp.ne.s32.totalorder %s46, %s47
    %p61 = scmp.eq.s32.totalorder %s13, 1
    %p62 = por %p60, %p61
    %p64 = scmp.ne.s32.totalorder %s47, %s63
    %p65 = scmp.eq.s32.totalorder %s13, 0
    %p66 = por %p64, %p65
    %p67 = scmp.le.s32.totalorder 1, %s7
    %p68 = scmp.lt.s32.totalorder %s7, 3
    %p69 = pnand %p67, %p68
    %p70 = pneg %p69
    // Predicated region
    $region9: #{_lambda_.5} parent=5 // pred_check
      _
    $region10: #{_lambda_.5} parent=5 // pred_check_branch
      %72 = sbr.rel (%p69) target = $region12
    $region11: #{_lambda_.5} parent=5 // pred_region
      %s73 = ssub.s32 %s7, 1
    $region12: #{_lambda_.5} parent=5 // pred_fallthru
      _
    %p74 = scmp.lt.s32.totalorder %s7, 2
    // Predicated region
    $region13: #{_lambda_.5} parent=5 // pred_check
      %p75 = pneg %p74
    $region14: #{_lambda_.5} parent=5 // pred_check_branch
      %77 = sbr.rel (%p75) target = $region16
    $region15: #{_lambda_.5} parent=5 // pred_region
      // Predicated region
      $region17: #{_lambda_.5} parent=15 // pred_check
        %p78 = pneg %p27
      $region18: #{_lambda_.5} parent=15 // pred_check_branch
        %80 = sbr.rel (%p78) target = $region20
      $region19: #{_lambda_.5} parent=15 // pred_region
        %p81 = scmp.lt.s32.totalorder %s7, 1
        %s82 = scalar_select %p81, %s7, 1
        %s83 = smul.addr %s82, 60
        %s84 = smul.addr %s83, 8
        %s85 = scalar_lea.vmem %s0, %s84
      $region20: #{_lambda_.5} parent=15 // pred_fallthru
        _
    $region16: #{_lambda_.5} parent=5 // pred_fallthru
      _
    %p86 = scmp.le.s32.totalorder 1, %s7
    %p87 = scmp.lt.s32.totalorder %s7, 3
    %p88 = pnand %p86, %p87
    %p89 = pneg %p88
    // Predicated region
    $region21: #{_lambda_.5} parent=5 // pred_check
      _
    $region22: #{_lambda_.5} parent=5 // pred_check_branch
      %91 = sbr.rel (%p88) target = $region24
    $region23: #{_lambda_.5} parent=5 // pred_region
      %s92 = ssub.s32 %s7, 1
      %p93 = scmp.lt.s32.totalorder %s12, 1
      %s94 = scalar_select %p93, %s12, 1
      %s95 = smul.addr %s94, 60
      %s96 = smul.addr %s95, 8
      %s97 = scalar_lea.vmem %s0, %s96
      %p98 = pneg %p33
      %p99 = pneg %p30
      %p100 = pneg %p59
      %p101 = pneg %p56
      %p102 = scmp.lt.s32.totalorder %s12, 1
      %s103 = scalar_select %p102, %s12, 1
      %s104 = smul.addr %s103, 51
      %s105 = smul.addr %s104, 8
      %s106 = scalar_lea.vmem %s1, %s105
      %p107 = scmp.lt.s32.totalorder %s12, 1
      %s108 = scalar_select %p107, %s12, 1
      %s109 = smul.addr %s108, 60
      %s110 = smul.addr %s109, 8
      %s111 = scalar_lea.vmem %s0, %s110
      %p112 = scmp.lt.s32.totalorder %s12, 1
      %s113 = scalar_select %p112, %s12, 1
      %s114 = smul.addr %s113, 51
      %s115 = smul.addr %s114, 8
      %s116 = scalar_lea.vmem %s1, %s115
      %v117 = vld [vmem:[%s111] sm:$0xff]
      %v118 = vld [vmem:[%s111 + $0x8] sm:$0xff]
      %v119 = vld [vmem:[%s111 + $0x10] sm:$0xf]
      %v120 = vld [vmem:[%s111 + $0x18] sm:$0xff]
      %v121 = vld [vmem:[%s111 + $0x20] sm:$0xff]
      %v122 = vld [vmem:[%s111 + $0x28] sm:$0xf]
      %v123 = vld [vmem:[%s111 + $0x30] sm:$0xff]
      %v124 = vld [vmem:[%s111 + $0x38] sm:$0xff]
      %v125 = vld [vmem:[%s111 + $0x40] sm:$0xf]
      %v126 = vld [vmem:[%s111 + $0x48] sm:$0xff]
      %v127 = vld [vmem:[%s111 + $0x50] sm:$0xff]
      %v128 = vld [vmem:[%s111 + $0x58] sm:$0xf]
      %v129 = vld [vmem:[%s111 + $0x60] sm:$0xff]
      %v130 = vld [vmem:[%s111 + $0x68] sm:$0xff]
      %v131 = vld [vmem:[%s111 + $0x70] sm:$0xf]
      %v132 = vld [vmem:[%s111 + $0x78] sm:$0xff]
      %v133 = vld [vmem:[%s111 + $0x80] sm:$0xff]
      %v134 = vld [vmem:[%s111 + $0x88] sm:$0xf]
      %v135 = vld [vmem:[%s111 + $0x90] sm:$0xff]
      %v136 = vld [vmem:[%s111 + $0x98] sm:$0xff]
      %v137 = vld [vmem:[%s111 + $0xa0] sm:$0xf]
      %v138 = vld [vmem:[%s111 + $0xa8] sm:$0xff]
      %v139 = vld [vmem:[%s111 + $0xb0] sm:$0xff]
      %v140 = vld [vmem:[%s111 + $0xb8] sm:$0xf]
      %v141 = vld [vmem:[%s111 + $0xc0] sm:$0xff]
      %v142 = vld [vmem:[%s111 + $0xc8] sm:$0xff]
      %v143 = vld [vmem:[%s111 + $0xd0] sm:$0xf]
      %v144 = vld [vmem:[%s111 + $0xd8] sm:$0xff]
      %v145 = vld [vmem:[%s111 + $0xe0] sm:$0xff]
      %v146 = vld [vmem:[%s111 + $0xe8] sm:$0xf]
      %v147 = vld [vmem:[%s111 + $0xf0] sm:$0xff]
      %v148 = vld [vmem:[%s111 + $0xf8] sm:$0xff]
      %v149 = vld [vmem:[%s111 + $0x100] sm:$0xf]
      %v150 = vld [vmem:[%s111 + $0x108] sm:$0xff]
      %v151 = vld [vmem:[%s111 + $0x110] sm:$0xff]
      %v152 = vld [vmem:[%s111 + $0x118] sm:$0xf]
      %v153 = vld [vmem:[%s111 + $0x120] sm:$0xff]
      %v154 = vld [vmem:[%s111 + $0x128] sm:$0xff]
      %v155 = vld [vmem:[%s111 + $0x130] sm:$0xf]
      %v156 = vld [vmem:[%s111 + $0x138] sm:$0xff]
      %v157 = vld [vmem:[%s111 + $0x140] sm:$0xff]
      %v158 = vld [vmem:[%s111 + $0x148] sm:$0xf]
      %v159 = vld [vmem:[%s111 + $0x150] sm:$0xff]
      %v160 = vld [vmem:[%s111 + $0x158] sm:$0xff]
      %v161 = vld [vmem:[%s111 + $0x160] sm:$0xf]
      %v162 = vld [vmem:[%s111 + $0x168] sm:$0xff]
      %v163 = vld [vmem:[%s111 + $0x170] sm:$0xff]
      %v164 = vld [vmem:[%s111 + $0x178] sm:$0xf]
      %v165 = vld [vmem:[%s111 + $0x180] sm:$0xff]
      %v166 = vld [vmem:[%s111 + $0x188] sm:$0xff]
      %v167 = vld [vmem:[%s111 + $0x190] sm:$0xf]
      %v168 = vld [vmem:[%s111 + $0x198] sm:$0xff]
      %v169 = vld [vmem:[%s111 + $0x1a0] sm:$0xff]
      %v170 = vld [vmem:[%s111 + $0x1a8] sm:$0xf]
      %v171 = vld [vmem:[%s111 + $0x1b0] sm:$0xff]
      %v172 = vld [vmem:[%s111 + $0x1b8] sm:$0xff]
      %v173 = vld [vmem:[%s111 + $0x1c0] sm:$0xf]
      %v174 = vld [vmem:[%s111 + $0x1c8] sm:$0xff]
      %v175 = vld [vmem:[%s111 + $0x1d0] sm:$0xff]
      %v176 = vld [vmem:[%s111 + $0x1d8] sm:$0xf]
      %v177 = vmul.f32 %v117, 0.125
      %v178 = vmul.f32 %v118, 0.125
      %v179 = vmul.f32 %v119, 0.125
      %v180 = vmul.f32 %v120, 0.125
      %v181 = vmul.f32 %v121, 0.125
      %v182 = vmul.f32 %v122, 0.125
      %v183 = vmul.f32 %v123, 0.125
      %v184 = vmul.f32 %v124, 0.125
      %v185 = vmul.f32 %v125, 0.125
      %v186 = vmul.f32 %v126, 0.125
      %v187 = vmul.f32 %v127, 0.125
      %v188 = vmul.f32 %v128, 0.125
      %v189 = vmul.f32 %v129, 0.125
      %v190 = vmul.f32 %v130, 0.125
      %v191 = vmul.f32 %v131, 0.125
      %v192 = vmul.f32 %v132, 0.125
      %v193 = vmul.f32 %v133, 0.125
      %v194 = vmul.f32 %v134, 0.125
      %v195 = vmul.f32 %v135, 0.125
      %v196 = vmul.f32 %v136, 0.125
      %v197 = vmul.f32 %v137, 0.125
      %v198 = vmul.f32 %v138, 0.125
      %v199 = vmul.f32 %v139, 0.125
      %v200 = vmul.f32 %v140, 0.125
      %v201 = vmul.f32 %v141, 0.125
      %v202 = vmul.f32 %v142, 0.125
      %v203 = vmul.f32 %v143, 0.125
      %v204 = vmul.f32 %v144, 0.125
      %v205 = vmul.f32 %v145, 0.125
      %v206 = vmul.f32 %v146, 0.125
      %v207 = vmul.f32 %v147, 0.125
      %v208 = vmul.f32 %v148, 0.125
      %v209 = vmul.f32 %v149, 0.125
      %v210 = vmul.f32 %v150, 0.125
      %v211 = vmul.f32 %v151, 0.125
      %v212 = vmul.f32 %v152, 0.125
      %v213 = vmul.f32 %v153, 0.125
      %v214 = vmul.f32 %v154, 0.125
      %v215 = vmul.f32 %v155, 0.125
      %v216 = vmul.f32 %v156, 0.125
      %v217 = vmul.f32 %v157, 0.125
      %v218 = vmul.f32 %v158, 0.125
      %v219 = vmul.f32 %v159, 0.125
      %v220 = vmul.f32 %v160, 0.125
      %v221 = vmul.f32 %v161, 0.125
      %v222 = vmul.f32 %v162, 0.125
      %v223 = vmul.f32 %v163, 0.125
      %v224 = vmul.f32 %v164, 0.125
      %v225 = vmul.f32 %v165, 0.125
      %v226 = vmul.f32 %v166, 0.125
      %v227 = vmul.f32 %v167, 0.125
      %v228 = vmul.f32 %v168, 0.125
      %v229 = vmul.f32 %v169, 0.125
      %v230 = vmul.f32 %v170, 0.125
      %v231 = vmul.f32 %v171, 0.125
      %v232 = vmul.f32 %v172, 0.125
      %v233 = vmul.f32 %v173, 0.125
      %v234 = vmul.f32 %v174, 0.125
      %v235 = vmul.f32 %v175, 0.125
      %v236 = vmul.f32 %v176, 0.125
      %v237 = vmul.f32 %v117, 0.375
      %v238 = vmul.f32 %v118, 0.375
      %v239 = vmul.f32 %v119, 0.375
      %v240 = vmul.f32 %v120, 0.375
      %v241 = vmul.f32 %v121, 0.375
      %v242 = vmul.f32 %v122, 0.375
      %v243 = vmul.f32 %v123, 0.375
      %v244 = vmul.f32 %v124, 0.375
      %v245 = vmul.f32 %v125, 0.375
      %v246 = vmul.f32 %v126, 0.375
      %v247 = vmul.f32 %v127, 0.375
      %v248 = vmul.f32 %v128, 0.375
      %v249 = vmul.f32 %v129, 0.375
      %v250 = vmul.f32 %v130, 0.375
      %v251 = vmul.f32 %v131, 0.375
      %v252 = vmul.f32 %v132, 0.375
      %v253 = vmul.f32 %v133, 0.375
      %v254 = vmul.f32 %v134, 0.375
      %v255 = vmul.f32 %v135, 0.375
      %v256 = vmul.f32 %v136, 0.375
      %v257 = vmul.f32 %v137, 0.375
      %v258 = vmul.f32 %v138, 0.375
      %v259 = vmul.f32 %v139, 0.375
      %v260 = vmul.f32 %v140, 0.375
      %v261 = vmul.f32 %v141, 0.375
      %v262 = vmul.f32 %v142, 0.375
      %v263 = vmul.f32 %v143, 0.375
      %v264 = vmul.f32 %v144, 0.375
      %v265 = vmul.f32 %v145, 0.375
      %v266 = vmul.f32 %v146, 0.375
      %v267 = vmul.f32 %v147, 0.375
      %v268 = vmul.f32 %v148, 0.375
      %v269 = vmul.f32 %v149, 0.375
      %v270 = vmul.f32 %v150, 0.375
      %v271 = vmul.f32 %v151, 0.375
      %v272 = vmul.f32 %v152, 0.375
      %v273 = vmul.f32 %v153, 0.375
      %v274 = vmul.f32 %v154, 0.375
      %v275 = vmul.f32 %v155, 0.375
      %v276 = vmul.f32 %v156, 0.375
      %v277 = vmul.f32 %v157, 0.375
      %v278 = vmul.f32 %v158, 0.375
      %v279 = vmul.f32 %v159, 0.375
      %v280 = vmul.f32 %v160, 0.375
      %v281 = vmul.f32 %v161, 0.375
      %v282 = vmul.f32 %v162, 0.375
      %v283 = vmul.f32 %v163, 0.375
      %v284 = vmul.f32 %v164, 0.375
      %v285 = vmul.f32 %v165, 0.375
      %v286 = vmul.f32 %v166, 0.375
      %v287 = vmul.f32 %v167, 0.375
      %v288 = vmul.f32 %v168, 0.375
      %v289 = vmul.f32 %v169, 0.375
      %v290 = vmul.f32 %v170, 0.375
      %v291 = vmul.f32 %v171, 0.375
      %v292 = vmul.f32 %v172, 0.375
      %v293 = vmul.f32 %v173, 0.375
      %v294 = vmul.f32 %v174, 0.375
      %v295 = vmul.f32 %v175, 0.375
      %v296 = vmul.f32 %v176, 0.375
      %vm357 = vcmask 1046528
      %v358 = vrot.slane %v237, 1
      %v359 = vrot.slane %v238, 1
      %v360 = vsel %vm357, %v358, %v359
      %v361 = vrot.slane %v239, 1
      %v362 = vsel %vm357, %v359, %v361
      %v363 = vrot.slane %v240, 1
      %v364 = vrot.slane %v241, 1
      %v365 = vsel %vm357, %v363, %v364
      %v366 = vrot.slane %v242, 1
      %v367 = vsel %vm357, %v364, %v366
      %v368 = vrot.slane %v243, 1
      %v369 = vrot.slane %v244, 1
      %v370 = vsel %vm357, %v368, %v369
      %v371 = vrot.slane %v245, 1
      %v372 = vsel %vm357, %v369, %v371
      %v373 = vrot.slane %v246, 1
      %v374 = vrot.slane %v247, 1
      %v375 = vsel %vm357, %v373, %v374
      %v376 = vrot.slane %v248, 1
      %v377 = vsel %vm357, %v374, %v376
      %v378 = vrot.slane %v249, 1
      %v379 = vrot.slane %v250, 1
      %v380 = vsel %vm357, %v378, %v379
      %v381 = vrot.slane %v251, 1
      %v382 = vsel %vm357, %v379, %v381
      %v383 = vrot.slane %v252, 1
      %v384 = vrot.slane %v253, 1
      %v385 = vsel %vm357, %v383, %v384
      %v386 = vrot.slane %v254, 1
      %v387 = vsel %vm357, %v384, %v386
      %v388 = vrot.slane %v255, 1
      %v389 = vrot.slane %v256, 1
      %v390 = vsel %vm357, %v388, %v389
      %v391 = vrot.slane %v257, 1
      %v392 = vsel %vm357, %v389, %v391
      %v393 = vrot.slane %v258, 1
      %v394 = vrot.slane %v259, 1
      %v395 = vsel %vm357, %v393, %v394
      %v396 = vrot.slane %v260, 1
      %v397 = vsel %vm357, %v394, %v396
      %v398 = vrot.slane %v261, 1
      %v399 = vrot.slane %v262, 1
      %v400 = vsel %vm357, %v398, %v399
      %v401 = vrot.slane %v263, 1
      %v402 = vsel %vm357, %v399, %v401
      %v403 = vrot.slane %v264, 1
      %v404 = vrot.slane %v265, 1
      %v405 = vsel %vm357, %v403, %v404
      %v406 = vrot.slane %v266, 1
      %v407 = vsel %vm357, %v404, %v406
      %v408 = vrot.slane %v267, 1
      %v409 = vrot.slane %v268, 1
      %v410 = vsel %vm357, %v408, %v409
      %v411 = vrot.slane %v269, 1
      %v412 = vsel %vm357, %v409, %v411
      %v413 = vrot.slane %v270, 1
      %v414 = vrot.slane %v271, 1
      %v415 = vsel %vm357, %v413, %v414
      %v416 = vrot.slane %v272, 1
      %v417 = vsel %vm357, %v414, %v416
      %v418 = vrot.slane %v273, 1
      %v419 = vrot.slane %v274, 1
      %v420 = vsel %vm357, %v418, %v419
      %v421 = vrot.slane %v275, 1
      %v422 = vsel %vm357, %v419, %v421
      %v423 = vrot.slane %v276, 1
      %v424 = vrot.slane %v277, 1
      %v425 = vsel %vm357, %v423, %v424
      %v426 = vrot.slane %v278, 1
      %v427 = vsel %vm357, %v424, %v426
      %v428 = vrot.slane %v279, 1
      %v429 = vrot.slane %v280, 1
      %v430 = vsel %vm357, %v428, %v429
      %v431 = vrot.slane %v281, 1
      %v432 = vsel %vm357, %v429, %v431
      %v433 = vrot.slane %v282, 1
      %v434 = vrot.slane %v283, 1
      %v435 = vsel %vm357, %v433, %v434
      %v436 = vrot.slane %v284, 1
      %v437 = vsel %vm357, %v434, %v436
      %v438 = vrot.slane %v285, 1
      %v439 = vrot.slane %v286, 1
      %v440 = vsel %vm357, %v438, %v439
      %v441 = vrot.slane %v287, 1
      %v442 = vsel %vm357, %v439, %v441
      %v443 = vrot.slane %v288, 1
      %v444 = vrot.slane %v289, 1
      %v445 = vsel %vm357, %v443, %v444
      %v446 = vrot.slane %v290, 1
      %v447 = vsel %vm357, %v444, %v446
      %v448 = vrot.slane %v291, 1
      %v449 = vrot.slane %v292, 1
      %v450 = vsel %vm357, %v448, %v449
      %v451 = vrot.slane %v293, 1
      %v452 = vsel %vm357, %v449, %v451
      %v453 = vrot.slane %v294, 1
      %v454 = vrot.slane %v295, 1
      %v455 = vsel %vm357, %v453, %v454
      %v456 = vrot.slane %v296, 1
      %v457 = vsel %vm357, %v454, %v456
      %v518 = vadd.f32 %v177, %v360
      %v519 = vadd.f32 %v178, %v362
      %v520 = vadd.f32 %v179, %v361
      %v521 = vadd.f32 %v180, %v365
      %v522 = vadd.f32 %v181, %v367
      %v523 = vadd.f32 %v182, %v366
      %v524 = vadd.f32 %v183, %v370
      %v525 = vadd.f32 %v184, %v372
      %v526 = vadd.f32 %v185, %v371
      %v527 = vadd.f32 %v186, %v375
      %v528 = vadd.f32 %v187, %v377
      %v529 = vadd.f32 %v188, %v376
      %v530 = vadd.f32 %v189, %v380
      %v531 = vadd.f32 %v190, %v382
      %v532 = vadd.f32 %v191, %v381
      %v533 = vadd.f32 %v192, %v385
      %v534 = vadd.f32 %v193, %v387
      %v535 = vadd.f32 %v194, %v386
      %v536 = vadd.f32 %v195, %v390
      %v537 = vadd.f32 %v196, %v392
      %v538 = vadd.f32 %v197, %v391
      %v539 = vadd.f32 %v198, %v395
      %v540 = vadd.f32 %v199, %v397
      %v541 = vadd.f32 %v200, %v396
      %v542 = vadd.f32 %v201, %v400
      %v543 = vadd.f32 %v202, %v402
      %v544 = vadd.f32 %v203, %v401
      %v545 = vadd.f32 %v204, %v405
      %v546 = vadd.f32 %v205, %v407
      %v547 = vadd.f32 %v206, %v406
      %v548 = vadd.f32 %v207, %v410
      %v549 = vadd.f32 %v208, %v412
      %v550 = vadd.f32 %v209, %v411
      %v551 = vadd.f32 %v210, %v415
      %v552 = vadd.f32 %v211, %v417
      %v553 = vadd.f32 %v212, %v416
      %v554 = vadd.f32 %v213, %v420
      %v555 = vadd.f32 %v214, %v422
      %v556 = vadd.f32 %v215, %v421
      %v557 = vadd.f32 %v216, %v425
      %v558 = vadd.f32 %v217, %v427
      %v559 = vadd.f32 %v218, %v426
      %v560 = vadd.f32 %v219, %v430
      %v561 = vadd.f32 %v220, %v432
      %v562 = vadd.f32 %v221, %v431
      %v563 = vadd.f32 %v222, %v435
      %v564 = vadd.f32 %v223, %v437
      %v565 = vadd.f32 %v224, %v436
      %v566 = vadd.f32 %v225, %v440
      %v567 = vadd.f32 %v226, %v442
      %v568 = vadd.f32 %v227, %v441
      %v569 = vadd.f32 %v228, %v445
      %v570 = vadd.f32 %v229, %v447
      %v571 = vadd.f32 %v230, %v446
      %v572 = vadd.f32 %v231, %v450
      %v573 = vadd.f32 %v232, %v452
      %v574 = vadd.f32 %v233, %v451
      %v575 = vadd.f32 %v234, %v455
      %v576 = vadd.f32 %v235, %v457
      %v577 = vadd.f32 %v236, %v456
      %vm578 = vcmask 1045504
      %v579 = vrot.slane %v237, 2
      %v580 = vrot.slane %v238, 2
      %v581 = vsel %vm578, %v579, %v580
      %v582 = vrot.slane %v239, 2
      %v583 = vsel %vm578, %v580, %v582
      %v584 = vrot.slane %v240, 2
      %v585 = vrot.slane %v241, 2
      %v586 = vsel %vm578, %v584, %v585
      %v587 = vrot.slane %v242, 2
      %v588 = vsel %vm578, %v585, %v587
      %v589 = vrot.slane %v243, 2
      %v590 = vrot.slane %v244, 2
      %v591 = vsel %vm578, %v589, %v590
      %v592 = vrot.slane %v245, 2
      %v593 = vsel %vm578, %v590, %v592
      %v594 = vrot.slane %v246, 2
      %v595 = vrot.slane %v247, 2
      %v596 = vsel %vm578, %v594, %v595
      %v597 = vrot.slane %v248, 2
      %v598 = vsel %vm578, %v595, %v597
      %v599 = vrot.slane %v249, 2
      %v600 = vrot.slane %v250, 2
      %v601 = vsel %vm578, %v599, %v600
      %v602 = vrot.slane %v251, 2
      %v603 = vsel %vm578, %v600, %v602
      %v604 = vrot.slane %v252, 2
      %v605 = vrot.slane %v253, 2
      %v606 = vsel %vm578, %v604, %v605
      %v607 = vrot.slane %v254, 2
      %v608 = vsel %vm578, %v605, %v607
      %v609 = vrot.slane %v255, 2
      %v610 = vrot.slane %v256, 2
      %v611 = vsel %vm578, %v609, %v610
      %v612 = vrot.slane %v257, 2
      %v613 = vsel %vm578, %v610, %v612
      %v614 = vrot.slane %v258, 2
      %v615 = vrot.slane %v259, 2
      %v616 = vsel %vm578, %v614, %v615
      %v617 = vrot.slane %v260, 2
      %v618 = vsel %vm578, %v615, %v617
      %v619 = vrot.slane %v261, 2
      %v620 = vrot.slane %v262, 2
      %v621 = vsel %vm578, %v619, %v620
      %v622 = vrot.slane %v263, 2
      %v623 = vsel %vm578, %v620, %v622
      %v624 = vrot.slane %v264, 2
      %v625 = vrot.slane %v265, 2
      %v626 = vsel %vm578, %v624, %v625
      %v627 = vrot.slane %v266, 2
      %v628 = vsel %vm578, %v625, %v627
      %v629 = vrot.slane %v267, 2
      %v630 = vrot.slane %v268, 2
      %v631 = vsel %vm578, %v629, %v630
      %v632 = vrot.slane %v269, 2
      %v633 = vsel %vm578, %v630, %v632
      %v634 = vrot.slane %v270, 2
      %v635 = vrot.slane %v271, 2
      %v636 = vsel %vm578, %v634, %v635
      %v637 = vrot.slane %v272, 2
      %v638 = vsel %vm578, %v635, %v637
      %v639 = vrot.slane %v273, 2
      %v640 = vrot.slane %v274, 2
      %v641 = vsel %vm578, %v639, %v640
      %v642 = vrot.slane %v275, 2
      %v643 = vsel %vm578, %v640, %v642
      %v644 = vrot.slane %v276, 2
      %v645 = vrot.slane %v277, 2
      %v646 = vsel %vm578, %v644, %v645
      %v647 = vrot.slane %v278, 2
      %v648 = vsel %vm578, %v645, %v647
      %v649 = vrot.slane %v279, 2
      %v650 = vrot.slane %v280, 2
      %v651 = vsel %vm578, %v649, %v650
      %v652 = vrot.slane %v281, 2
      %v653 = vsel %vm578, %v650, %v652
      %v654 = vrot.slane %v282, 2
      %v655 = vrot.slane %v283, 2
      %v656 = vsel %vm578, %v654, %v655
      %v657 = vrot.slane %v284, 2
      %v658 = vsel %vm578, %v655, %v657
      %v659 = vrot.slane %v285, 2
      %v660 = vrot.slane %v286, 2
      %v661 = vsel %vm578, %v659, %v660
      %v662 = vrot.slane %v287, 2
      %v663 = vsel %vm578, %v660, %v662
      %v664 = vrot.slane %v288, 2
      %v665 = vrot.slane %v289, 2
      %v666 = vsel %vm578, %v664, %v665
      %v667 = vrot.slane %v290, 2
      %v668 = vsel %vm578, %v665, %v667
      %v669 = vrot.slane %v291, 2
      %v670 = vrot.slane %v292, 2
      %v671 = vsel %vm578, %v669, %v670
      %v672 = vrot.slane %v293, 2
      %v673 = vsel %vm578, %v670, %v672
      %v674 = vrot.slane %v294, 2
      %v675 = vrot.slane %v295, 2
      %v676 = vsel %vm578, %v674, %v675
      %v677 = vrot.slane %v296, 2
      %v678 = vsel %vm578, %v675, %v677
      %v739 = vadd.f32 %v518, %v581
      %v740 = vadd.f32 %v519, %v583
      %v741 = vadd.f32 %v520, %v582
      %v742 = vadd.f32 %v521, %v586
      %v743 = vadd.f32 %v522, %v588
      %v744 = vadd.f32 %v523, %v587
      %v745 = vadd.f32 %v524, %v591
      %v746 = vadd.f32 %v525, %v593
      %v747 = vadd.f32 %v526, %v592
      %v748 = vadd.f32 %v527, %v596
      %v749 = vadd.f32 %v528, %v598
      %v750 = vadd.f32 %v529, %v597
      %v751 = vadd.f32 %v530, %v601
      %v752 = vadd.f32 %v531, %v603
      %v753 = vadd.f32 %v532, %v602
      %v754 = vadd.f32 %v533, %v606
      %v755 = vadd.f32 %v534, %v608
      %v756 = vadd.f32 %v535, %v607
      %v757 = vadd.f32 %v536, %v611
      %v758 = vadd.f32 %v537, %v613
      %v759 = vadd.f32 %v538, %v612
      %v760 = vadd.f32 %v539, %v616
      %v761 = vadd.f32 %v540, %v618
      %v762 = vadd.f32 %v541, %v617
      %v763 = vadd.f32 %v542, %v621
      %v764 = vadd.f32 %v543, %v623
      %v765 = vadd.f32 %v544, %v622
      %v766 = vadd.f32 %v545, %v626
      %v767 = vadd.f32 %v546, %v628
      %v768 = vadd.f32 %v547, %v627
      %v769 = vadd.f32 %v548, %v631
      %v770 = vadd.f32 %v549, %v633
      %v771 = vadd.f32 %v550, %v632
      %v772 = vadd.f32 %v551, %v636
      %v773 = vadd.f32 %v552, %v638
      %v774 = vadd.f32 %v553, %v637
      %v775 = vadd.f32 %v554, %v641
      %v776 = vadd.f32 %v555, %v643
      %v777 = vadd.f32 %v556, %v642
      %v778 = vadd.f32 %v557, %v646
      %v779 = vadd.f32 %v558, %v648
      %v780 = vadd.f32 %v559, %v647
      %v781 = vadd.f32 %v560, %v651
      %v782 = vadd.f32 %v561, %v653
      %v783 = vadd.f32 %v562, %v652
      %v784 = vadd.f32 %v563, %v656
      %v785 = vadd.f32 %v564, %v658
      %v786 = vadd.f32 %v565, %v657
      %v787 = vadd.f32 %v566, %v661
      %v788 = vadd.f32 %v567, %v663
      %v789 = vadd.f32 %v568, %v662
      %v790 = vadd.f32 %v569, %v666
      %v791 = vadd.f32 %v570, %v668
      %v792 = vadd.f32 %v571, %v667
      %v793 = vadd.f32 %v572, %v671
      %v794 = vadd.f32 %v573, %v673
      %v795 = vadd.f32 %v574, %v672
      %v796 = vadd.f32 %v575, %v676
      %v797 = vadd.f32 %v576, %v678
      %v798 = vadd.f32 %v577, %v677
      %vm859 = vcmask 1044480
      %v860 = vrot.slane %v177, 3
      %v861 = vrot.slane %v178, 3
      %v862 = vsel %vm859, %v860, %v861
      %v863 = vrot.slane %v179, 3
      %v864 = vsel %vm859, %v861, %v863
      %v865 = vrot.slane %v180, 3
      %v866 = vrot.slane %v181, 3
      %v867 = vsel %vm859, %v865, %v866
      %v868 = vrot.slane %v182, 3
      %v869 = vsel %vm859, %v866, %v868
      %v870 = vrot.slane %v183, 3
      %v871 = vrot.slane %v184, 3
      %v872 = vsel %vm859, %v870, %v871
      %v873 = vrot.slane %v185, 3
      %v874 = vsel %vm859, %v871, %v873
      %v875 = vrot.slane %v186, 3
      %v876 = vrot.slane %v187, 3
      %v877 = vsel %vm859, %v875, %v876
      %v878 = vrot.slane %v188, 3
      %v879 = vsel %vm859, %v876, %v878
      %v880 = vrot.slane %v189, 3
      %v881 = vrot.slane %v190, 3
      %v882 = vsel %vm859, %v880, %v881
      %v883 = vrot.slane %v191, 3
      %v884 = vsel %vm859, %v881, %v883
      %v885 = vrot.slane %v192, 3
      %v886 = vrot.slane %v193, 3
      %v887 = vsel %vm859, %v885, %v886
      %v888 = vrot.slane %v194, 3
      %v889 = vsel %vm859, %v886, %v888
      %v890 = vrot.slane %v195, 3
      %v891 = vrot.slane %v196, 3
      %v892 = vsel %vm859, %v890, %v891
      %v893 = vrot.slane %v197, 3
      %v894 = vsel %vm859, %v891, %v893
      %v895 = vrot.slane %v198, 3
      %v896 = vrot.slane %v199, 3
      %v897 = vsel %vm859, %v895, %v896
      %v898 = vrot.slane %v200, 3
      %v899 = vsel %vm859, %v896, %v898
      %v900 = vrot.slane %v201, 3
      %v901 = vrot.slane %v202, 3
      %v902 = vsel %vm859, %v900, %v901
      %v903 = vrot.slane %v203, 3
      %v904 = vsel %vm859, %v901, %v903
      %v905 = vrot.slane %v204, 3
      %v906 = vrot.slane %v205, 3
      %v907 = vsel %vm859, %v905, %v906
      %v908 = vrot.slane %v206, 3
      %v909 = vsel %vm859, %v906, %v908
      %v910 = vrot.slane %v207, 3
      %v911 = vrot.slane %v208, 3
      %v912 = vsel %vm859, %v910, %v911
      %v913 = vrot.slane %v209, 3
      %v914 = vsel %vm859, %v911, %v913
      %v915 = vrot.slane %v210, 3
      %v916 = vrot.slane %v211, 3
      %v917 = vsel %vm859, %v915, %v916
      %v918 = vrot.slane %v212, 3
      %v919 = vsel %vm859, %v916, %v918
      %v920 = vrot.slane %v213, 3
      %v921 = vrot.slane %v214, 3
      %v922 = vsel %vm859, %v920, %v921
      %v923 = vrot.slane %v215, 3
      %v924 = vsel %vm859, %v921, %v923
      %v925 = vrot.slane %v216, 3
      %v926 = vrot.slane %v217, 3
      %v927 = vsel %vm859, %v925, %v926
      %v928 = vrot.slane %v218, 3
      %v929 = vsel %vm859, %v926, %v928
      %v930 = vrot.slane %v219, 3
      %v931 = vrot.slane %v220, 3
      %v932 = vsel %vm859, %v930, %v931
      %v933 = vrot.slane %v221, 3
      %v934 = vsel %vm859, %v931, %v933
      %v935 = vrot.slane %v222, 3
      %v936 = vrot.slane %v223, 3
      %v937 = vsel %vm859, %v935, %v936
      %v938 = vrot.slane %v224, 3
      %v939 = vsel %vm859, %v936, %v938
      %v940 = vrot.slane %v225, 3
      %v941 = vrot.slane %v226, 3
      %v942 = vsel %vm859, %v940, %v941
      %v943 = vrot.slane %v227, 3
      %v944 = vsel %vm859, %v941, %v943
      %v945 = vrot.slane %v228, 3
      %v946 = vrot.slane %v229, 3
      %v947 = vsel %vm859, %v945, %v946
      %v948 = vrot.slane %v230, 3
      %v949 = vsel %vm859, %v946, %v948
      %v950 = vrot.slane %v231, 3
      %v951 = vrot.slane %v232, 3
      %v952 = vsel %vm859, %v950, %v951
      %v953 = vrot.slane %v233, 3
      %v954 = vsel %vm859, %v951, %v953
      %v955 = vrot.slane %v234, 3
      %v956 = vrot.slane %v235, 3
      %v957 = vsel %vm859, %v955, %v956
      %v958 = vrot.slane %v236, 3
      %v959 = vsel %vm859, %v956, %v958
      %v1020 = vadd.f32 %v739, %v862
      %v1021 = vadd.f32 %v740, %v864
      %v1022 = vadd.f32 %v741, %v863
      %v1023 = vadd.f32 %v742, %v867
      %v1024 = vadd.f32 %v743, %v869
      %v1025 = vadd.f32 %v744, %v868
      %v1026 = vadd.f32 %v745, %v872
      %v1027 = vadd.f32 %v746, %v874
      %v1028 = vadd.f32 %v747, %v873
      %v1029 = vadd.f32 %v748, %v877
      %v1030 = vadd.f32 %v749, %v879
      %v1031 = vadd.f32 %v750, %v878
      %v1032 = vadd.f32 %v751, %v882
      %v1033 = vadd.f32 %v752, %v884
      %v1034 = vadd.f32 %v753, %v883
      %v1035 = vadd.f32 %v754, %v887
      %v1036 = vadd.f32 %v755, %v889
      %v1037 = vadd.f32 %v756, %v888
      %v1038 = vadd.f32 %v757, %v892
      %v1039 = vadd.f32 %v758, %v894
      %v1040 = vadd.f32 %v759, %v893
      %v1041 = vadd.f32 %v760, %v897
      %v1042 = vadd.f32 %v761, %v899
      %v1043 = vadd.f32 %v762, %v898
      %v1044 = vadd.f32 %v763, %v902
      %v1045 = vadd.f32 %v764, %v904
      %v1046 = vadd.f32 %v765, %v903
      %v1047 = vadd.f32 %v766, %v907
      %v1048 = vadd.f32 %v767, %v909
      %v1049 = vadd.f32 %v768, %v908
      %v1050 = vadd.f32 %v769, %v912
      %v1051 = vadd.f32 %v770, %v914
      %v1052 = vadd.f32 %v771, %v913
      %v1053 = vadd.f32 %v772, %v917
      %v1054 = vadd.f32 %v773, %v919
      %v1055 = vadd.f32 %v774, %v918
      %v1056 = vadd.f32 %v775, %v922
      %v1057 = vadd.f32 %v776, %v924
      %v1058 = vadd.f32 %v777, %v923
      %v1059 = vadd.f32 %v778, %v927
      %v1060 = vadd.f32 %v779, %v929
      %v1061 = vadd.f32 %v780, %v928
      %v1062 = vadd.f32 %v781, %v932
      %v1063 = vadd.f32 %v782, %v934
      %v1064 = vadd.f32 %v783, %v933
      %v1065 = vadd.f32 %v784, %v937
      %v1066 = vadd.f32 %v785, %v939
      %v1067 = vadd.f32 %v786, %v938
      %v1068 = vadd.f32 %v787, %v942
      %v1069 = vadd.f32 %v788, %v944
      %v1070 = vadd.f32 %v789, %v943
      %v1071 = vadd.f32 %v790, %v947
      %v1072 = vadd.f32 %v791, %v949
      %v1073 = vadd.f32 %v792, %v948
      %v1074 = vadd.f32 %v793, %v952
      %v1075 = vadd.f32 %v794, %v954
      %v1076 = vadd.f32 %v795, %v953
      %v1077 = vadd.f32 %v796, %v957
      %v1078 = vadd.f32 %v797, %v959
      %v1079 = vadd.f32 %v798, %v958
      %v1080 = vmul.f32 %v1020, 0.125
      %v1081 = vmul.f32 %v1021, 0.125
      %v1082 = vmul.f32 %v1022, 0.125
      %v1083 = vmul.f32 %v1023, 0.125
      %v1084 = vmul.f32 %v1024, 0.125
      %v1085 = vmul.f32 %v1025, 0.125
      %v1086 = vmul.f32 %v1026, 0.125
      %v1087 = vmul.f32 %v1027, 0.125
      %v1088 = vmul.f32 %v1028, 0.125
      %v1089 = vmul.f32 %v1029, 0.125
      %v1090 = vmul.f32 %v1030, 0.125
      %v1091 = vmul.f32 %v1031, 0.125
      %v1092 = vmul.f32 %v1032, 0.125
      %v1093 = vmul.f32 %v1033, 0.125
      %v1094 = vmul.f32 %v1034, 0.125
      %v1095 = vmul.f32 %v1035, 0.125
      %v1096 = vmul.f32 %v1036, 0.125
      %v1097 = vmul.f32 %v1037, 0.125
      %v1098 = vmul.f32 %v1038, 0.125
      %v1099 = vmul.f32 %v1039, 0.125
      %v1100 = vmul.f32 %v1040, 0.125
      %v1101 = vmul.f32 %v1041, 0.125
      %v1102 = vmul.f32 %v1042, 0.125
      %v1103 = vmul.f32 %v1043, 0.125
      %v1104 = vmul.f32 %v1044, 0.125
      %v1105 = vmul.f32 %v1045, 0.125
      %v1106 = vmul.f32 %v1046, 0.125
      %v1107 = vmul.f32 %v1047, 0.125
      %v1108 = vmul.f32 %v1048, 0.125
      %v1109 = vmul.f32 %v1049, 0.125
      %v1110 = vmul.f32 %v1050, 0.125
      %v1111 = vmul.f32 %v1051, 0.125
      %v1112 = vmul.f32 %v1052, 0.125
      %v1113 = vmul.f32 %v1053, 0.125
      %v1114 = vmul.f32 %v1054, 0.125
      %v1115 = vmul.f32 %v1055, 0.125
      %v1116 = vmul.f32 %v1056, 0.125
      %v1117 = vmul.f32 %v1057, 0.125
      %v1118 = vmul.f32 %v1058, 0.125
      %v1119 = vmul.f32 %v1059, 0.125
      %v1120 = vmul.f32 %v1060, 0.125
      %v1121 = vmul.f32 %v1061, 0.125
      %v1122 = vmul.f32 %v1062, 0.125
      %v1123 = vmul.f32 %v1063, 0.125
      %v1124 = vmul.f32 %v1064, 0.125
      %v1125 = vmul.f32 %v1065, 0.125
      %v1126 = vmul.f32 %v1066, 0.125
      %v1127 = vmul.f32 %v1067, 0.125
      %v1128 = vmul.f32 %v1068, 0.125
      %v1129 = vmul.f32 %v1069, 0.125
      %v1130 = vmul.f32 %v1070, 0.125
      %v1131 = vmul.f32 %v1023, 0.375
      %v1132 = vmul.f32 %v1024, 0.375
      %v1133 = vmul.f32 %v1025, 0.375
      %v1134 = vmul.f32 %v1026, 0.375
      %v1135 = vmul.f32 %v1027, 0.375
      %v1136 = vmul.f32 %v1028, 0.375
      %v1137 = vmul.f32 %v1029, 0.375
      %v1138 = vmul.f32 %v1030, 0.375
      %v1139 = vmul.f32 %v1031, 0.375
      %v1140 = vmul.f32 %v1032, 0.375
      %v1141 = vmul.f32 %v1033, 0.375
      %v1142 = vmul.f32 %v1034, 0.375
      %v1143 = vmul.f32 %v1035, 0.375
      %v1144 = vmul.f32 %v1036, 0.375
      %v1145 = vmul.f32 %v1037, 0.375
      %v1146 = vmul.f32 %v1038, 0.375
      %v1147 = vmul.f32 %v1039, 0.375
      %v1148 = vmul.f32 %v1040, 0.375
      %v1149 = vmul.f32 %v1041, 0.375
      %v1150 = vmul.f32 %v1042, 0.375
      %v1151 = vmul.f32 %v1043, 0.375
      %v1152 = vmul.f32 %v1044, 0.375
      %v1153 = vmul.f32 %v1045, 0.375
      %v1154 = vmul.f32 %v1046, 0.375
      %v1155 = vmul.f32 %v1047, 0.375
      %v1156 = vmul.f32 %v1048, 0.375
      %v1157 = vmul.f32 %v1049, 0.375
      %v1158 = vmul.f32 %v1050, 0.375
      %v1159 = vmul.f32 %v1051, 0.375
      %v1160 = vmul.f32 %v1052, 0.375
      %v1161 = vmul.f32 %v1053, 0.375
      %v1162 = vmul.f32 %v1054, 0.375
      %v1163 = vmul.f32 %v1055, 0.375
      %v1164 = vmul.f32 %v1056, 0.375
      %v1165 = vmul.f32 %v1057, 0.375
      %v1166 = vmul.f32 %v1058, 0.375
      %v1167 = vmul.f32 %v1059, 0.375
      %v1168 = vmul.f32 %v1060, 0.375
      %v1169 = vmul.f32 %v1061, 0.375
      %v1170 = vmul.f32 %v1062, 0.375
      %v1171 = vmul.f32 %v1063, 0.375
      %v1172 = vmul.f32 %v1064, 0.375
      %v1173 = vmul.f32 %v1065, 0.375
      %v1174 = vmul.f32 %v1066, 0.375
      %v1175 = vmul.f32 %v1067, 0.375
      %v1176 = vmul.f32 %v1068, 0.375
      %v1177 = vmul.f32 %v1069, 0.375
      %v1178 = vmul.f32 %v1070, 0.375
      %v1179 = vmul.f32 %v1071, 0.375
      %v1180 = vmul.f32 %v1072, 0.375
      %v1181 = vmul.f32 %v1073, 0.375
      %v1182 = vadd.f32 %v1080, %v1131
      %v1183 = vadd.f32 %v1081, %v1132
      %v1184 = vadd.f32 %v1082, %v1133
      %v1185 = vadd.f32 %v1083, %v1134
      %v1186 = vadd.f32 %v1084, %v1135
      %v1187 = vadd.f32 %v1085, %v1136
      %v1188 = vadd.f32 %v1086, %v1137
      %v1189 = vadd.f32 %v1087, %v1138
      %v1190 = vadd.f32 %v1088, %v1139
      %v1191 = vadd.f32 %v1089, %v1140
      %v1192 = vadd.f32 %v1090, %v1141
      %v1193 = vadd.f32 %v1091, %v1142
      %v1194 = vadd.f32 %v1092, %v1143
      %v1195 = vadd.f32 %v1093, %v1144
      %v1196 = vadd.f32 %v1094, %v1145
      %v1197 = vadd.f32 %v1095, %v1146
      %v1198 = vadd.f32 %v1096, %v1147
      %v1199 = vadd.f32 %v1097, %v1148
      %v1200 = vadd.f32 %v1098, %v1149
      %v1201 = vadd.f32 %v1099, %v1150
      %v1202 = vadd.f32 %v1100, %v1151
      %v1203 = vadd.f32 %v1101, %v1152
      %v1204 = vadd.f32 %v1102, %v1153
      %v1205 = vadd.f32 %v1103, %v1154
      %v1206 = vadd.f32 %v1104, %v1155
      %v1207 = vadd.f32 %v1105, %v1156
      %v1208 = vadd.f32 %v1106, %v1157
      %v1209 = vadd.f32 %v1107, %v1158
      %v1210 = vadd.f32 %v1108, %v1159
      %v1211 = vadd.f32 %v1109, %v1160
      %v1212 = vadd.f32 %v1110, %v1161
      %v1213 = vadd.f32 %v1111, %v1162
      %v1214 = vadd.f32 %v1112, %v1163
      %v1215 = vadd.f32 %v1113, %v1164
      %v1216 = vadd.f32 %v1114, %v1165
      %v1217 = vadd.f32 %v1115, %v1166
      %v1218 = vadd.f32 %v1116, %v1167
      %v1219 = vadd.f32 %v1117, %v1168
      %v1220 = vadd.f32 %v1118, %v1169
      %v1221 = vadd.f32 %v1119, %v1170
      %v1222 = vadd.f32 %v1120, %v1171
      %v1223 = vadd.f32 %v1121, %v1172
      %v1224 = vadd.f32 %v1122, %v1173
      %v1225 = vadd.f32 %v1123, %v1174
      %v1226 = vadd.f32 %v1124, %v1175
      %v1227 = vadd.f32 %v1125, %v1176
      %v1228 = vadd.f32 %v1126, %v1177
      %v1229 = vadd.f32 %v1127, %v1178
      %v1230 = vadd.f32 %v1128, %v1179
      %v1231 = vadd.f32 %v1129, %v1180
      %v1232 = vadd.f32 %v1130, %v1181
      %v1233 = vmul.f32 %v1074, 0.375
      %v1234 = vmul.f32 %v1075, 0.375
      %v1235 = vmul.f32 %v1076, 0.375
      %v1236 = vadd.f32 %v1182, %v1134
      %v1237 = vadd.f32 %v1183, %v1135
      %v1238 = vadd.f32 %v1184, %v1136
      %v1239 = vadd.f32 %v1185, %v1137
      %v1240 = vadd.f32 %v1186, %v1138
      %v1241 = vadd.f32 %v1187, %v1139
      %v1242 = vadd.f32 %v1188, %v1140
      %v1243 = vadd.f32 %v1189, %v1141
      %v1244 = vadd.f32 %v1190, %v1142
      %v1245 = vadd.f32 %v1191, %v1143
      %v1246 = vadd.f32 %v1192, %v1144
      %v1247 = vadd.f32 %v1193, %v1145
      %v1248 = vadd.f32 %v1194, %v1146
      %v1249 = vadd.f32 %v1195, %v1147
      %v1250 = vadd.f32 %v1196, %v1148
      %v1251 = vadd.f32 %v1197, %v1149
      %v1252 = vadd.f32 %v1198, %v1150
      %v1253 = vadd.f32 %v1199, %v1151
      %v1254 = vadd.f32 %v1200, %v1152
      %v1255 = vadd.f32 %v1201, %v1153
      %v1256 = vadd.f32 %v1202, %v1154
      %v1257 = vadd.f32 %v1203, %v1155
      %v1258 = vadd.f32 %v1204, %v1156
      %v1259 = vadd.f32 %v1205, %v1157
      %v1260 = vadd.f32 %v1206, %v1158
      %v1261 = vadd.f32 %v1207, %v1159
      %v1262 = vadd.f32 %v1208, %v1160
      %v1263 = vadd.f32 %v1209, %v1161
      %v1264 = vadd.f32 %v1210, %v1162
      %v1265 = vadd.f32 %v1211, %v1163
      %v1266 = vadd.f32 %v1212, %v1164
      %v1267 = vadd.f32 %v1213, %v1165
      %v1268 = vadd.f32 %v1214, %v1166
      %v1269 = vadd.f32 %v1215, %v1167
      %v1270 = vadd.f32 %v1216, %v1168
      %v1271 = vadd.f32 %v1217, %v1169
      %v1272 = vadd.f32 %v1218, %v1170
      %v1273 = vadd.f32 %v1219, %v1171
      %v1274 = vadd.f32 %v1220, %v1172
      %v1275 = vadd.f32 %v1221, %v1173
      %v1276 = vadd.f32 %v1222, %v1174
      %v1277 = vadd.f32 %v1223, %v1175
      %v1278 = vadd.f32 %v1224, %v1176
      %v1279 = vadd.f32 %v1225, %v1177
      %v1280 = vadd.f32 %v1226, %v1178
      %v1281 = vadd.f32 %v1227, %v1179
      %v1282 = vadd.f32 %v1228, %v1180
      %v1283 = vadd.f32 %v1229, %v1181
      %v1284 = vadd.f32 %v1230, %v1233
      %v1285 = vadd.f32 %v1231, %v1234
      %v1286 = vadd.f32 %v1232, %v1235
      %v1287 = vmul.f32 %v1071, 0.125
      %v1288 = vmul.f32 %v1072, 0.125
      %v1289 = vmul.f32 %v1073, 0.125
      %v1290 = vmul.f32 %v1074, 0.125
      %v1291 = vmul.f32 %v1075, 0.125
      %v1292 = vmul.f32 %v1076, 0.125
      %v1293 = vmul.f32 %v1077, 0.125
      %v1294 = vmul.f32 %v1078, 0.125
      %v1295 = vmul.f32 %v1079, 0.125
      %v1296 = vadd.f32 %v1236, %v1089
      %v1297 = vadd.f32 %v1237, %v1090
      %v1298 = vadd.f32 %v1238, %v1091
      %v1299 = vadd.f32 %v1239, %v1092
      %v1300 = vadd.f32 %v1240, %v1093
      %v1301 = vadd.f32 %v1241, %v1094
      %v1302 = vadd.f32 %v1242, %v1095
      %v1303 = vadd.f32 %v1243, %v1096
      %v1304 = vadd.f32 %v1244, %v1097
      %v1305 = vadd.f32 %v1245, %v1098
      %v1306 = vadd.f32 %v1246, %v1099
      %v1307 = vadd.f32 %v1247, %v1100
      %v1308 = vadd.f32 %v1248, %v1101
      %v1309 = vadd.f32 %v1249, %v1102
      %v1310 = vadd.f32 %v1250, %v1103
      %v1311 = vadd.f32 %v1251, %v1104
      %v1312 = vadd.f32 %v1252, %v1105
      %v1313 = vadd.f32 %v1253, %v1106
      %v1314 = vadd.f32 %v1254, %v1107
      %v1315 = vadd.f32 %v1255, %v1108
      %v1316 = vadd.f32 %v1256, %v1109
      %v1317 = vadd.f32 %v1257, %v1110
      %v1318 = vadd.f32 %v1258, %v1111
      %v1319 = vadd.f32 %v1259, %v1112
      %v1320 = vadd.f32 %v1260, %v1113
      %v1321 = vadd.f32 %v1261, %v1114
      %v1322 = vadd.f32 %v1262, %v1115
      %v1323 = vadd.f32 %v1263, %v1116
      %v1324 = vadd.f32 %v1264, %v1117
      %v1325 = vadd.f32 %v1265, %v1118
      %v1326 = vadd.f32 %v1266, %v1119
      %v1327 = vadd.f32 %v1267, %v1120
      %v1328 = vadd.f32 %v1268, %v1121
      %v1329 = vadd.f32 %v1269, %v1122
      %v1330 = vadd.f32 %v1270, %v1123
      %v1331 = vadd.f32 %v1271, %v1124
      %v1332 = vadd.f32 %v1272, %v1125
      %v1333 = vadd.f32 %v1273, %v1126
      %v1334 = vadd.f32 %v1274, %v1127
      %v1335 = vadd.f32 %v1275, %v1128
      %v1336 = vadd.f32 %v1276, %v1129
      %v1337 = vadd.f32 %v1277, %v1130
      %v1338 = vadd.f32 %v1278, %v1287
      %v1339 = vadd.f32 %v1279, %v1288
      %v1340 = vadd.f32 %v1280, %v1289
      %v1341 = vadd.f32 %v1281, %v1290
      %v1342 = vadd.f32 %v1282, %v1291
      %v1343 = vadd.f32 %v1283, %v1292
      %v1344 = vadd.f32 %v1284, %v1293
      %v1345 = vadd.f32 %v1285, %v1294
      %v1346 = vadd.f32 %v1286, %v1295
      %vm1347 = vcmask 31744
      %1348 = vst.msk [vmem:[%s116] sm:$0xff] %vm1347, %v1296
      %1349 = vst.msk [vmem:[%s116 + $0x8] sm:$0xff] %vm1347, %v1297
      %vm1350 = vcmask 24576
      %1351 = vst.msk [vmem:[%s116 + $0x10] sm:$0x1] %vm1350, %v1298
      %1352 = vst.msk [vmem:[%s116 + $0x18] sm:$0xff] %vm1347, %v1299
      %1353 = vst.msk [vmem:[%s116 + $0x20] sm:$0xff] %vm1347, %v1300
      %1354 = vst.msk [vmem:[%s116 + $0x28] sm:$0x1] %vm1350, %v1301
      %1355 = vst.msk [vmem:[%s116 + $0x30] sm:$0xff] %vm1347, %v1302
      %1356 = vst.msk [vmem:[%s116 + $0x38] sm:$0xff] %vm1347, %v1303
      %1357 = vst.msk [vmem:[%s116 + $0x40] sm:$0x1] %vm1350, %v1304
      %1358 = vst.msk [vmem:[%s116 + $0x48] sm:$0xff] %vm1347, %v1305
      %1359 = vst.msk [vmem:[%s116 + $0x50] sm:$0xff] %vm1347, %v1306
      %1360 = vst.msk [vmem:[%s116 + $0x58] sm:$0x1] %vm1350, %v1307
      %1361 = vst.msk [vmem:[%s116 + $0x60] sm:$0xff] %vm1347, %v1308
      %1362 = vst.msk [vmem:[%s116 + $0x68] sm:$0xff] %vm1347, %v1309
      %1363 = vst.msk [vmem:[%s116 + $0x70] sm:$0x1] %vm1350, %v1310
      %1364 = vst.msk [vmem:[%s116 + $0x78] sm:$0xff] %vm1347, %v1311
      %1365 = vst.msk [vmem:[%s116 + $0x80] sm:$0xff] %vm1347, %v1312
      %1366 = vst.msk [vmem:[%s116 + $0x88] sm:$0x1] %vm1350, %v1313
      %1367 = vst.msk [vmem:[%s116 + $0x90] sm:$0xff] %vm1347, %v1314
      %1368 = vst.msk [vmem:[%s116 + $0x98] sm:$0xff] %vm1347, %v1315
      %1369 = vst.msk [vmem:[%s116 + $0xa0] sm:$0x1] %vm1350, %v1316
      %1370 = vst.msk [vmem:[%s116 + $0xa8] sm:$0xff] %vm1347, %v1317
      %1371 = vst.msk [vmem:[%s116 + $0xb0] sm:$0xff] %vm1347, %v1318
      %1372 = vst.msk [vmem:[%s116 + $0xb8] sm:$0x1] %vm1350, %v1319
      %1373 = vst.msk [vmem:[%s116 + $0xc0] sm:$0xff] %vm1347, %v1320
      %1374 = vst.msk [vmem:[%s116 + $0xc8] sm:$0xff] %vm1347, %v1321
      %1375 = vst.msk [vmem:[%s116 + $0xd0] sm:$0x1] %vm1350, %v1322
      %1376 = vst.msk [vmem:[%s116 + $0xd8] sm:$0xff] %vm1347, %v1323
      %1377 = vst.msk [vmem:[%s116 + $0xe0] sm:$0xff] %vm1347, %v1324
      %1378 = vst.msk [vmem:[%s116 + $0xe8] sm:$0x1] %vm1350, %v1325
      %1379 = vst.msk [vmem:[%s116 + $0xf0] sm:$0xff] %vm1347, %v1326
      %1380 = vst.msk [vmem:[%s116 + $0xf8] sm:$0xff] %vm1347, %v1327
      %1381 = vst.msk [vmem:[%s116 + $0x100] sm:$0x1] %vm1350, %v1328
      %1382 = vst.msk [vmem:[%s116 + $0x108] sm:$0xff] %vm1347, %v1329
      %1383 = vst.msk [vmem:[%s116 + $0x110] sm:$0xff] %vm1347, %v1330
      %1384 = vst.msk [vmem:[%s116 + $0x118] sm:$0x1] %vm1350, %v1331
      %1385 = vst.msk [vmem:[%s116 + $0x120] sm:$0xff] %vm1347, %v1332
      %1386 = vst.msk [vmem:[%s116 + $0x128] sm:$0xff] %vm1347, %v1333
      %1387 = vst.msk [vmem:[%s116 + $0x130] sm:$0x1] %vm1350, %v1334
      %1388 = vst.msk [vmem:[%s116 + $0x138] sm:$0xff] %vm1347, %v1335
      %1389 = vst.msk [vmem:[%s116 + $0x140] sm:$0xff] %vm1347, %v1336
      %1390 = vst.msk [vmem:[%s116 + $0x148] sm:$0x1] %vm1350, %v1337
      %1391 = vst.msk [vmem:[%s116 + $0x150] sm:$0xff] %vm1347, %v1338
      %1392 = vst.msk [vmem:[%s116 + $0x158] sm:$0xff] %vm1347, %v1339
      %1393 = vst.msk [vmem:[%s116 + $0x160] sm:$0x1] %vm1350, %v1340
      %1394 = vst.msk [vmem:[%s116 + $0x168] sm:$0xff] %vm1347, %v1341
      %1395 = vst.msk [vmem:[%s116 + $0x170] sm:$0xff] %vm1347, %v1342
      %1396 = vst.msk [vmem:[%s116 + $0x178] sm:$0x1] %vm1350, %v1343
      %1397 = vst.msk [vmem:[%s116 + $0x180] sm:$0xff] %vm1347, %v1344
      %1398 = vst.msk [vmem:[%s116 + $0x188] sm:$0xff] %vm1347, %v1345
      %1399 = vst.msk [vmem:[%s116 + $0x190] sm:$0x1] %vm1350, %v1346
      %p1400 = scmp.lt.s32.totalorder %s12, 1
      %s1401 = scalar_select %p1400, %s12, 1
      %s1402 = smul.addr %s1401, 51
      %s1403 = smul.addr %s1402, 8
      %s1404 = scalar_lea.vmem %s1, %s1403
      // Predicated region
      $region25: #{_lambda_.5} parent=23 // pred_check
        %p1405 = pneg %p56
      $region26: #{_lambda_.5} parent=23 // pred_check_branch
        %1407 = sbr.rel (%p1405) target = $region28
      $region27: #{_lambda_.5} parent=23 // pred_region
        _
      $region28: #{_lambda_.5} parent=23 // pred_fallthru
        _
    $region24: #{_lambda_.5} parent=5 // pred_fallthru
      _
    %p1408 = scmp.le.s32.totalorder 2, %s7
    // Predicated region
    $region29: #{_lambda_.5} parent=5 // pred_check
      %p1409 = pneg %p1408
    $region30: #{_lambda_.5} parent=5 // pred_check_branch
      %1411 = sbr.rel (%p1409) target = $region32
    $region31: #{_lambda_.5} parent=5 // pred_region
      %s1412 = ssub.s32 %s7, 2
      // Predicated region
      $region33: #{_lambda_.5} parent=31 // pred_check
        %p1413 = pneg %p62
      $region34: #{_lambda_.5} parent=31 // pred_check_branch
        %1415 = sbr.rel (%p1413) target = $region36
      $region35: #{_lambda_.5} parent=31 // pred_region
        %p1416 = scmp.lt.s32.totalorder %s13, 1
        %s1417 = scalar_select %p1416, %s13, 1
        %s1418 = smul.addr %s1417, 51
        %s1419 = smul.addr %s1418, 8
        %s1420 = scalar_lea.vmem %s1, %s1419
      $region36: #{_lambda_.5} parent=31 // pred_fallthru
        _
    $region32: #{_lambda_.5} parent=5 // pred_fallthru
      _
  $region6: #{_lambda_.5} parent=0 // loop_footer
    %s11 = sadd.s32 1, %s7
  $region7: #{_lambda_.5} parent=0 // loop_footer_branch
    %6 = sbr.rel target = $region3
  $region8: #{_lambda_.5} parent=0 // loop_exit
    _

// kernel: _lambda_.7
$region0: #{_lambda_.7}
  #allocation0 [shape = 'u32[]', space=smem, size = 0x4, offset = 0x4, fixed_abs, tag = 'smem constant byte address 0x4 - core index']
  #allocation1 [shape = 'u32[144,128]{1,0:T(1,128)}', space=vmem, size = 0x12000, scoped, tag = 'internal scratch']
  #allocation2 [shape = 'f32[128,128]{1,0:T(8,128)}', space=vmem, size = 0x10000, scoped, tag = 'scratch operand']
  %s0 = inlined_call_operand.vmem [shape: bf16[128,128], index: 0, kind: input, shape index: {}]
  %s1 = inlined_call_operand.vmem [shape: bf16[128,128], index: 1, kind: input, shape index: {}]
  %s2 = inlined_call_operand.vmem [shape: f32[1,128], index: 2, kind: input, shape index: {}]
  %s3 = inlined_call_operand.vmem [shape: bf16[128,128], index: 3, kind: input, shape index: {}]
  %s4 = inlined_call_operand.vmem [shape: bf16[128,128], index: 4, kind: input, shape index: {}]
  %s5 = inlined_call_operand.vmem [shape: f32[128,128], index: 5, kind: output, shape index: {}]
  %s6 = sld [smem:[#allocation0]]
  $region38: #{_lambda_.7} parent=0
    _
  %s8 = ssub.s32 1, %s6
  %s9 = scalar_select 0, %s8, %s6
  // Predicated region
  $region2: #{_lambda_.7} parent=0 // pred_check
    _
  $region3: #{_lambda_.7} parent=0 // pred_check_branch
    %11 = sbr.rel (0) target = $region5
  $region4: #{_lambda_.7} parent=0 // pred_region
    _
  $region5: #{_lambda_.7} parent=0 // pred_fallthru
    _
  // Predicated region
  $region6: #{_lambda_.7} parent=0 // pred_check
    _
  $region7: #{_lambda_.7} parent=0 // pred_check_branch
    %13 = sbr.rel (0) target = $region9
  $region8: #{_lambda_.7} parent=0 // pred_region
    _
  $region9: #{_lambda_.7} parent=0 // pred_fallthru
    _
  // Predicated region
  $region10: #{_lambda_.7} parent=0 // pred_check
    _
  $region11: #{_lambda_.7} parent=0 // pred_check_branch
    %15 = sbr.rel (0) target = $region13
  $region12: #{_lambda_.7} parent=0 // pred_region
    _
  $region13: #{_lambda_.7} parent=0 // pred_fallthru
    _
  // Predicated region
  $region14: #{_lambda_.7} parent=0 // pred_check
    _
  $region15: #{_lambda_.7} parent=0 // pred_check_branch
    %17 = sbr.rel (0) target = $region17
  $region16: #{_lambda_.7} parent=0 // pred_region
    _
  $region17: #{_lambda_.7} parent=0 // pred_fallthru
    _
  // Predicated region
  $region18: #{_lambda_.7} parent=0 // pred_check
    _
  $region19: #{_lambda_.7} parent=0 // pred_check_branch
    %19 = sbr.rel (0) target = $region21
  $region20: #{_lambda_.7} parent=0 // pred_region
    _
  $region21: #{_lambda_.7} parent=0 // pred_fallthru
    _
  %p21 = scmp.eq.s32.totalorder 0, 0
  // Predicated region
  $region22: #{_lambda_.7} parent=0 // pred_check
    %p22 = pneg %p21
  $region23: #{_lambda_.7} parent=0 // pred_check_branch
    %24 = sbr.rel (%p22) target = $region25
  $region24: #{_lambda_.7} parent=0 // pred_region
    %25 = vst [vmem:[#allocation2] sm:$0xff] 0.0
    %26 = vst [vmem:[#allocation2 + $0x8] sm:$0xff] 0.0
    %27 = vst [vmem:[#allocation2 + $0x10] sm:$0xff] 0.0
    %28 = vst [vmem:[#allocation2 + $0x18] sm:$0xff] 0.0
    %29 = vst [vmem:[#allocation2 + $0x20] sm:$0xff] 0.0
    %30 = vst [vmem:[#allocation2 + $0x28] sm:$0xff] 0.0
    %31 = vst [vmem:[#allocation2 + $0x30] sm:$0xff] 0.0
    %32 = vst [vmem:[#allocation2 + $0x38] sm:$0xff] 0.0
    %33 = vst [vmem:[#allocation2 + $0x40] sm:$0xff] 0.0
    %34 = vst [vmem:[#allocation2 + $0x48] sm:$0xff] 0.0
    %35 = vst [vmem:[#allocation2 + $0x50] sm:$0xff] 0.0
    %36 = vst [vmem:[#allocation2 + $0x58] sm:$0xff] 0.0
    %37 = vst [vmem:[#allocation2 + $0x60] sm:$0xff] 0.0
    %38 = vst [vmem:[#allocation2 + $0x68] sm:$0xff] 0.0
    %39 = vst [vmem:[#allocation2 + $0x70] sm:$0xff] 0.0
    %40 = vst [vmem:[#allocation2 + $0x78] sm:$0xff] 0.0
  $region25: #{_lambda_.7} parent=0 // pred_fallthru
    _
  %v41 = vld [vmem:[#allocation2] sm:$0xff]
  %v42 = vld [vmem:[#allocation2 + $0x8] sm:$0xff]
  %v43 = vld [vmem:[#allocation2 + $0x10] sm:$0xff]
  %v44 = vld [vmem:[#allocation2 + $0x18] sm:$0xff]
  %v45 = vld [vmem:[#allocation2 + $0x20] sm:$0xff]
  %v46 = vld [vmem:[#allocation2 + $0x28] sm:$0xff]
  %v47 = vld [vmem:[#allocation2 + $0x30] sm:$0xff]
  %v48 = vld [vmem:[#allocation2 + $0x38] sm:$0xff]
  %v49 = vld [vmem:[#allocation2 + $0x40] sm:$0xff]
  %v50 = vld [vmem:[#allocation2 + $0x48] sm:$0xff]
  %v51 = vld [vmem:[#allocation2 + $0x50] sm:$0xff]
  %v52 = vld [vmem:[#allocation2 + $0x58] sm:$0xff]
  %v53 = vld [vmem:[#allocation2 + $0x60] sm:$0xff]
  %v54 = vld [vmem:[#allocation2 + $0x68] sm:$0xff]
  %v55 = vld [vmem:[#allocation2 + $0x70] sm:$0xff]
  %v56 = vld [vmem:[#allocation2 + $0x78] sm:$0xff]
  %v57 = vld [vmem:[%s0] sm:$0xf]
  %v58 = vld [vmem:[%s0 + $0x4] sm:$0xf]
  %v59 = vld [vmem:[%s0 + $0x8] sm:$0xf]
  %v60 = vld [vmem:[%s0 + $0xc] sm:$0xf]
  %v61 = vld [vmem:[%s0 + $0x10] sm:$0xf]
  %v62 = vld [vmem:[%s0 + $0x14] sm:$0xf]
  %v63 = vld [vmem:[%s0 + $0x18] sm:$0xf]
  %v64 = vld [vmem:[%s0 + $0x1c] sm:$0xf]
  %v65 = vld [vmem:[%s0 + $0x20] sm:$0xf]
  %v66 = vld [vmem:[%s0 + $0x24] sm:$0xf]
  %v67 = vld [vmem:[%s0 + $0x28] sm:$0xf]
  %v68 = vld [vmem:[%s0 + $0x2c] sm:$0xf]
  %v69 = vld [vmem:[%s0 + $0x30] sm:$0xf]
  %v70 = vld [vmem:[%s0 + $0x34] sm:$0xf]
  %v71 = vld [vmem:[%s0 + $0x38] sm:$0xf]
  %v72 = vld [vmem:[%s0 + $0x3c] sm:$0xf]
  %v73 = vld [vmem:[%s1] sm:$0xf]
  %v74 = vld [vmem:[%s1 + $0x4] sm:$0xf]
  %v75 = vld [vmem:[%s1 + $0x8] sm:$0xf]
  %v76 = vld [vmem:[%s1 + $0xc] sm:$0xf]
  %v77 = vld [vmem:[%s1 + $0x10] sm:$0xf]
  %v78 = vld [vmem:[%s1 + $0x14] sm:$0xf]
  %v79 = vld [vmem:[%s1 + $0x18] sm:$0xf]
  %v80 = vld [vmem:[%s1 + $0x1c] sm:$0xf]
  %v81 = vld [vmem:[%s1 + $0x20] sm:$0xf]
  %v82 = vld [vmem:[%s1 + $0x24] sm:$0xf]
  %v83 = vld [vmem:[%s1 + $0x28] sm:$0xf]
  %v84 = vld [vmem:[%s1 + $0x2c] sm:$0xf]
  %v85 = vld [vmem:[%s1 + $0x30] sm:$0xf]
  %v86 = vld [vmem:[%s1 + $0x34] sm:$0xf]
  %v87 = vld [vmem:[%s1 + $0x38] sm:$0xf]
  %v88 = vld [vmem:[%s1 + $0x3c] sm:$0xf]
  %v105 = vunpack.c.l.b16 %v57
  %v106 = vunpack.c.l.b16 %v58
  %v107 = vunpack.c.l.b16 %v59
  %v108 = vunpack.c.l.b16 %v60
  %v109 = vunpack.c.l.b16 %v61
  %v110 = vunpack.c.l.b16 %v62
  %v111 = vunpack.c.l.b16 %v63
  %v112 = vunpack.c.l.b16 %v64
  %v113 = vunpack.c.l.b16 %v65
  %v114 = vunpack.c.l.b16 %v66
  %v115 = vunpack.c.l.b16 %v67
  %v116 = vunpack.c.l.b16 %v68
  %v117 = vunpack.c.l.b16 %v69
  %v118 = vunpack.c.l.b16 %v70
  %v119 = vunpack.c.l.b16 %v71
  %v120 = vunpack.c.l.b16 %v72
  %v121 = vpack.c.b16 %v106, %v105
  %v122 = vpack.c.b16 %v108, %v107
  %v123 = vpack.c.b16 %v110, %v109
  %v124 = vpack.c.b16 %v112, %v111
  %v125 = vpack.c.b16 %v114, %v113
  %v126 = vpack.c.b16 %v116, %v115
  %v127 = vpack.c.b16 %v118, %v117
  %v128 = vpack.c.b16 %v120, %v119
  %v153 = vunpack.c.l.b16 %v73
  %v154 = vunpack.c.l.b16 %v74
  %v155 = vunpack.c.l.b16 %v75
  %v156 = vunpack.c.l.b16 %v76
  %v157 = vunpack.c.l.b16 %v77
  %v158 = vunpack.c.l.b16 %v78
  %v159 = vunpack.c.l.b16 %v79
  %v160 = vunpack.c.l.b16 %v80
  %v161 = vunpack.c.l.b16 %v81
  %v162 = vunpack.c.l.b16 %v82
  %v163 = vunpack.c.l.b16 %v83
  %v164 = vunpack.c.l.b16 %v84
  %v165 = vunpack.c.l.b16 %v85
  %v166 = vunpack.c.l.b16 %v86
  %v167 = vunpack.c.l.b16 %v87
  %v168 = vunpack.c.l.b16 %v88
  %v169 = vpack.c.b16 %v154, %v153
  %v170 = vpack.c.b16 %v156, %v155
  %v171 = vpack.c.b16 %v158, %v157
  %v172 = vpack.c.b16 %v160, %v159
  %v173 = vpack.c.b16 %v162, %v161
  %v174 = vpack.c.b16 %v164, %v163
  %v175 = vpack.c.b16 %v166, %v165
  %v176 = vpack.c.b16 %v168, %v167
  %185 = vmatprep.subr.bf16.mxu0 0
  %186 = vmatpush1.bf16.msra.mxu0 %v169
  %187 = vmatprep.subr.bf16.mxu0 0
  %188 = vmatpush1.bf16.msra.mxu0 %v170
  %189 = vmatprep.subr.bf16.mxu0 0
  %190 = vmatpush1.bf16.msra.mxu0 %v171
  %191 = vmatprep.subr.bf16.mxu0 0
  %192 = vmatpush1.bf16.msra.mxu0 %v172
  %193 = vmatprep.subr.bf16.mxu0 0
  %194 = vmatpush1.bf16.msra.mxu0 %v173
  %195 = vmatprep.subr.bf16.mxu0 0
  %196 = vmatpush1.bf16.msra.mxu0 %v174
  %197 = vmatprep.subr.bf16.mxu0 0
  %198 = vmatpush1.bf16.msra.mxu0 %v175
  %199 = vmatprep.subr.bf16.mxu0 0
  %200 = vmatpush1.bf16.msra.mxu0 %v176
  %201 = vmatprep.subr.bf16.mxu0 0
  %202 = vmatpush1.bf16.msra.mxu0 0
  %203 = vmatprep.subr.bf16.mxu0 0
  %204 = vmatpush1.bf16.msra.mxu0 0
  %205 = vmatprep.subr.bf16.mxu0 0
  %206 = vmatpush1.bf16.msra.mxu0 0
  %207 = vmatprep.subr.bf16.mxu0 0
  %208 = vmatpush1.bf16.msra.mxu0 0
  %209 = vmatprep.subr.bf16.mxu0 0
  %210 = vmatpush1.bf16.msra.mxu0 0
  %211 = vmatprep.subr.bf16.mxu0 0
  %212 = vmatpush1.bf16.msra.mxu0 0
  %213 = vmatprep.subr.bf16.mxu0 0
  %214 = vmatpush1.bf16.msra.mxu0 0
  %215 = vmatprep.subr.bf16.mxu0 0
  %216 = vmatpush1.bf16.msra.mxu0 0
  %217 = vmatprep.mubr.bf16.mxu0 0
  %218 = vmatmul.mubr.bf16.gmra.mrb[0].mxu0 %v121
  %v219 = vpop.f32.mrb[0].mxu0
  %v220 = vadd.f32 0.0, %v219
  %v221 = vpop.f32.mrb[0].mxu0
  %v222 = vpop.f32.mrb[0].mxu0
  %v223 = vadd.f32 0.0, %v222
  %v224 = vpop.f32.mrb[0].mxu0
  %225 = vmatprep.mubr.bf16.mxu0 0
  %226 = vmatmul.mubr.bf16.gmra.mrb[0].mxu0 %v122
  %v227 = vpop.f32.mrb[0].mxu0
  %v228 = vadd.f32 0.0, %v227
  %v229 = vpop.f32.mrb[0].mxu0
  %v230 = vpop.f32.mrb[0].mxu0
  %v231 = vadd.f32 0.0, %v230
  %v232 = vpop.f32.mrb[0].mxu0
  %233 = vmatprep.mubr.bf16.mxu0 0
  %234 = vmatmul.mubr.bf16.gmra.mrb[0].mxu0 %v123
  %v235 = vpop.f32.mrb[0].mxu0
  %v236 = vadd.f32 0.0, %v235
  %v237 = vpop.f32.mrb[0].mxu0
  %v238 = vpop.f32.mrb[0].mxu0
  %v239 = vadd.f32 0.0, %v238
  %v240 = vpop.f32.mrb[0].mxu0
  %241 = vmatprep.mubr.bf16.mxu0 0
  %242 = vmatmul.mubr.bf16.gmra.mrb[0].mxu0 %v124
  %v243 = vpop.f32.mrb[0].mxu0
  %v244 = vadd.f32 0.0, %v243
  %v245 = vpop.f32.mrb[0].mxu0
  %v246 = vpop.f32.mrb[0].mxu0
  %v247 = vadd.f32 0.0, %v246
  %v248 = vpop.f32.mrb[0].mxu0
  %249 = vmatprep.mubr.bf16.mxu0 0
  %250 = vmatmul.mubr.bf16.gmra.mrb[0].mxu0 %v125
  %v251 = vpop.f32.mrb[0].mxu0
  %v252 = vadd.f32 0.0, %v251
  %v253 = vpop.f32.mrb[0].mxu0
  %v254 = vpop.f32.mrb[0].mxu0
  %v255 = vadd.f32 0.0, %v254
  %v256 = vpop.f32.mrb[0].mxu0
  %257 = vmatprep.mubr.bf16.mxu0 0
  %258 = vmatmul.mubr.bf16.gmra.mrb[0].mxu0 %v126
  %v259 = vpop.f32.mrb[0].mxu0
  %v260 = vadd.f32 0.0, %v259
  %v261 = vpop.f32.mrb[0].mxu0
  %v262 = vpop.f32.mrb[0].mxu0
  %v263 = vadd.f32 0.0, %v262
  %v264 = vpop.f32.mrb[0].mxu0
  %265 = vmatprep.mubr.bf16.mxu0 0
  %266 = vmatmul.mubr.bf16.gmra.mrb[0].mxu0 %v127
  %v267 = vpop.f32.mrb[0].mxu0
  %v268 = vadd.f32 0.0, %v267
  %v269 = vpop.f32.mrb[0].mxu0
  %v270 = vpop.f32.mrb[0].mxu0
  %v271 = vadd.f32 0.0, %v270
  %v272 = vpop.f32.mrb[0].mxu0
  %273 = vmatprep.mubr.bf16.mxu0 0
  %274 = vmatmul.mubr.bf16.gmra.mrb[0].mxu0 %v128
  %v275 = vpop.f32.mrb[0].mxu0
  %v276 = vadd.f32 0.0, %v275
  %v277 = vpop.f32.mrb[0].mxu0
  %v278 = vpop.f32.mrb[0].mxu0
  %v279 = vadd.f32 0.0, %v278
  %v280 = vpop.f32.mrb[0].mxu0
  %281 = vdwg.mxu0
  %v282 = vadd.f32 %v41, %v220
  %v283 = vadd.f32 %v42, %v223
  %v284 = vadd.f32 %v43, %v228
  %v285 = vadd.f32 %v44, %v231
  %v286 = vadd.f32 %v45, %v236
  %v287 = vadd.f32 %v46, %v239
  %v288 = vadd.f32 %v47, %v244
  %v289 = vadd.f32 %v48, %v247
  %v290 = vadd.f32 %v49, %v252
  %v291 = vadd.f32 %v50, %v255
  %v292 = vadd.f32 %v51, %v260
  %v293 = vadd.f32 %v52, %v263
  %v294 = vadd.f32 %v53, %v268
  %v295 = vadd.f32 %v54, %v271
  %v296 = vadd.f32 %v55, %v276
  %v297 = vadd.f32 %v56, %v279
  %298 = vst [vmem:[#allocation2] sm:$0xff] %v282
  %299 = vst [vmem:[#allocation2 + $0x8] sm:$0xff] %v283
  %300 = vst [vmem:[#allocation2 + $0x10] sm:$0xff] %v284
  %301 = vst [vmem:[#allocation2 + $0x18] sm:$0xff] %v285
  %302 = vst [vmem:[#allocation2 + $0x20] sm:$0xff] %v286
  %303 = vst [vmem:[#allocation2 + $0x28] sm:$0xff] %v287
  %304 = vst [vmem:[#allocation2 + $0x30] sm:$0xff] %v288
  %305 = vst [vmem:[#allocation2 + $0x38] sm:$0xff] %v289
  %306 = vst [vmem:[#allocation2 + $0x40] sm:$0xff] %v290
  %307 = vst [vmem:[#allocation2 + $0x48] sm:$0xff] %v291
  %308 = vst [vmem:[#allocation2 + $0x50] sm:$0xff] %v292
  %309 = vst [vmem:[#allocation2 + $0x58] sm:$0xff] %v293
  %310 = vst [vmem:[#allocation2 + $0x60] sm:$0xff] %v294
  %311 = vst [vmem:[#allocation2 + $0x68] sm:$0xff] %v295
  %312 = vst [vmem:[#allocation2 + $0x70] sm:$0xff] %v296
  %313 = vst [vmem:[#allocation2 + $0x78] sm:$0xff] %v297
  // Predicated region
  $region26: #{_lambda_.7} parent=0 // pred_check
    %p314 = pneg %p21
  $region27: #{_lambda_.7} parent=0 // pred_check_branch
    %316 = sbr.rel (%p314) target = $region29
  $region28: #{_lambda_.7} parent=0 // pred_region
    %v317 = vld [vmem:[#allocation2] sm:$0xff]
    %v318 = vld [vmem:[#allocation2 + $0x8] sm:$0xff]
    %v319 = vld [vmem:[#allocation2 + $0x10] sm:$0xff]
    %v320 = vld [vmem:[#allocation2 + $0x18] sm:$0xff]
    %v321 = vld [vmem:[#allocation2 + $0x20] sm:$0xff]
    %v322 = vld [vmem:[#allocation2 + $0x28] sm:$0xff]
    %v323 = vld [vmem:[#allocation2 + $0x30] sm:$0xff]
    %v324 = vld [vmem:[#allocation2 + $0x38] sm:$0xff]
    %v325 = vld [vmem:[#allocation2 + $0x40] sm:$0xff]
    %v326 = vld [vmem:[#allocation2 + $0x48] sm:$0xff]
    %v327 = vld [vmem:[#allocation2 + $0x50] sm:$0xff]
    %v328 = vld [vmem:[#allocation2 + $0x58] sm:$0xff]
    %v329 = vld [vmem:[#allocation2 + $0x60] sm:$0xff]
    %v330 = vld [vmem:[#allocation2 + $0x68] sm:$0xff]
    %v331 = vld [vmem:[#allocation2 + $0x70] sm:$0xff]
    %v332 = vld [vmem:[#allocation2 + $0x78] sm:$0xff]
    %v333 = vld [vmem:[%s2] sm:$0x1]
    %v335 = vlaneseq
    %v336 = vshrl.u32 %v335, 7
    %v337 = vsub.s32 0, %v336
    %v338 = vrot.slane %v333, %v337
    %v340 = vadd.f32 %v317, %v338
    %v341 = vadd.f32 %v318, %v338
    %v342 = vadd.f32 %v319, %v338
    %v343 = vadd.f32 %v320, %v338
    %v344 = vadd.f32 %v321, %v338
    %v345 = vadd.f32 %v322, %v338
    %v346 = vadd.f32 %v323, %v338
    %v347 = vadd.f32 %v324, %v338
    %v348 = vadd.f32 %v325, %v338
    %v349 = vadd.f32 %v326, %v338
    %v350 = vadd.f32 %v327, %v338
    %v351 = vadd.f32 %v328, %v338
    %v352 = vadd.f32 %v329, %v338
    %v353 = vadd.f32 %v330, %v338
    %v354 = vadd.f32 %v331, %v338
    %v355 = vadd.f32 %v332, %v338
    %vm356 = vcmp.ge.f32.partialorder %v340, 0.0
    %vm357 = vcmp.ge.f32.partialorder %v341, 0.0
    %vm358 = vcmp.ge.f32.partialorder %v342, 0.0
    %vm359 = vcmp.ge.f32.partialorder %v343, 0.0
    %vm360 = vcmp.ge.f32.partialorder %v344, 0.0
    %vm361 = vcmp.ge.f32.partialorder %v345, 0.0
    %vm362 = vcmp.ge.f32.partialorder %v346, 0.0
    %vm363 = vcmp.ge.f32.partialorder %v347, 0.0
    %vm364 = vcmp.ge.f32.partialorder %v348, 0.0
    %vm365 = vcmp.ge.f32.partialorder %v349, 0.0
    %vm366 = vcmp.ge.f32.partialorder %v350, 0.0
    %vm367 = vcmp.ge.f32.partialorder %v351, 0.0
    %vm368 = vcmp.ge.f32.partialorder %v352, 0.0
    %vm369 = vcmp.ge.f32.partialorder %v353, 0.0
    %vm370 = vcmp.ge.f32.partialorder %v354, 0.0
    %vm371 = vcmp.ge.f32.partialorder %v355, 0.0
    %v372 = vmul.f32 %v340, 0.2
    %v373 = vmul.f32 %v341, 0.2
    %v374 = vmul.f32 %v342, 0.2
    %v375 = vmul.f32 %v343, 0.2
    %v376 = vmul.f32 %v344, 0.2
    %v377 = vmul.f32 %v345, 0.2
    %v378 = vmul.f32 %v346, 0.2
    %v379 = vmul.f32 %v347, 0.2
    %v380 = vmul.f32 %v348, 0.2
    %v381 = vmul.f32 %v349, 0.2
    %v382 = vmul.f32 %v350, 0.2
    %v383 = vmul.f32 %v351, 0.2
    %v384 = vmul.f32 %v352, 0.2
    %v385 = vmul.f32 %v353, 0.2
    %v386 = vmul.f32 %v354, 0.2
    %v387 = vmul.f32 %v355, 0.2
    %v388 = vsel %vm356, %v340, %v372
    %v389 = vsel %vm357, %v341, %v373
    %v390 = vsel %vm358, %v342, %v374
    %v391 = vsel %vm359, %v343, %v375
    %v392 = vsel %vm360, %v344, %v376
    %v393 = vsel %vm361, %v345, %v377
    %v394 = vsel %vm362, %v346, %v378
    %v395 = vsel %vm363, %v347, %v379
    %v396 = vsel %vm364, %v348, %v380
    %v397 = vsel %vm365, %v349, %v381
    %v398 = vsel %vm366, %v350, %v382
    %v399 = vsel %vm367, %v351, %v383
    %v400 = vsel %vm368, %v352, %v384
    %v401 = vsel %vm369, %v353, %v385
    %v402 = vsel %vm370, %v354, %v386
    %v403 = vsel %vm371, %v355, %v387
    %v404 = vmul.f32 %v388, 1.4142135
    %v405 = vmul.f32 %v389, 1.4142135
    %v406 = vmul.f32 %v390, 1.4142135
    %v407 = vmul.f32 %v391, 1.4142135
    %v408 = vmul.f32 %v392, 1.4142135
    %v409 = vmul.f32 %v393, 1.4142135
    %v410 = vmul.f32 %v394, 1.4142135
    %v411 = vmul.f32 %v395, 1.4142135
    %v412 = vmul.f32 %v396, 1.4142135
    %v413 = vmul.f32 %v397, 1.4142135
    %v414 = vmul.f32 %v398, 1.4142135
    %v415 = vmul.f32 %v399, 1.4142135
    %v416 = vmul.f32 %v400, 1.4142135
    %v417 = vmul.f32 %v401, 1.4142135
    %v418 = vmul.f32 %v402, 1.4142135
    %v419 = vmul.f32 %v403, 1.4142135
    %v420 = vld [vmem:[%s3] sm:$0xf]
    %v421 = vld [vmem:[%s3 + $0x4] sm:$0xf]
    %v422 = vld [vmem:[%s3 + $0x8] sm:$0xf]
    %v423 = vld [vmem:[%s3 + $0xc] sm:$0xf]
    %v424 = vld [vmem:[%s3 + $0x10] sm:$0xf]
    %v425 = vld [vmem:[%s3 + $0x14] sm:$0xf]
    %v426 = vld [vmem:[%s3 + $0x18] sm:$0xf]
    %v427 = vld [vmem:[%s3 + $0x1c] sm:$0xf]
    %v428 = vld [vmem:[%s3 + $0x20] sm:$0xf]
    %v429 = vld [vmem:[%s3 + $0x24] sm:$0xf]
    %v430 = vld [vmem:[%s3 + $0x28] sm:$0xf]
    %v431 = vld [vmem:[%s3 + $0x2c] sm:$0xf]
    %v432 = vld [vmem:[%s3 + $0x30] sm:$0xf]
    %v433 = vld [vmem:[%s3 + $0x34] sm:$0xf]
    %v434 = vld [vmem:[%s3 + $0x38] sm:$0xf]
    %v435 = vld [vmem:[%s3 + $0x3c] sm:$0xf]
    %v436 = vld [vmem:[%s4] sm:$0xf]
    %v437 = vld [vmem:[%s4 + $0x4] sm:$0xf]
    %v438 = vld [vmem:[%s4 + $0x8] sm:$0xf]
    %v439 = vld [vmem:[%s4 + $0xc] sm:$0xf]
    %v440 = vld [vmem:[%s4 + $0x10] sm:$0xf]
    %v441 = vld [vmem:[%s4 + $0x14] sm:$0xf]
    %v442 = vld [vmem:[%s4 + $0x18] sm:$0xf]
    %v443 = vld [vmem:[%s4 + $0x1c] sm:$0xf]
    %v444 = vld [vmem:[%s4 + $0x20] sm:$0xf]
    %v445 = vld [vmem:[%s4 + $0x24] sm:$0xf]
    %v446 = vld [vmem:[%s4 + $0x28] sm:$0xf]
    %v447 = vld [vmem:[%s4 + $0x2c] sm:$0xf]
    %v448 = vld [vmem:[%s4 + $0x30] sm:$0xf]
    %v449 = vld [vmem:[%s4 + $0x34] sm:$0xf]
    %v450 = vld [vmem:[%s4 + $0x38] sm:$0xf]
    %v451 = vld [vmem:[%s4 + $0x3c] sm:$0xf]
    %v468 = vunpack.c.l.b16 %v420
    %v469 = vunpack.c.l.b16 %v421
    %v470 = vunpack.c.l.b16 %v422
    %v471 = vunpack.c.l.b16 %v423
    %v472 = vunpack.c.l.b16 %v424
    %v473 = vunpack.c.l.b16 %v425
    %v474 = vunpack.c.l.b16 %v426
    %v475 = vunpack.c.l.b16 %v427
    %v476 = vunpack.c.l.b16 %v428
    %v477 = vunpack.c.l.b16 %v429
    %v478 = vunpack.c.l.b16 %v430
    %v479 = vunpack.c.l.b16 %v431
    %v480 = vunpack.c.l.b16 %v432
    %v481 = vunpack.c.l.b16 %v433
    %v482 = vunpack.c.l.b16 %v434
    %v483 = vunpack.c.l.b16 %v435
    %v484 = vpack.c.b16 %v469, %v468
    %v485 = vpack.c.b16 %v471, %v470
    %v486 = vpack.c.b16 %v473, %v472
    %v487 = vpack.c.b16 %v475, %v474
    %v488 = vpack.c.b16 %v477, %v476
    %v489 = vpack.c.b16 %v479, %v478
    %v490 = vpack.c.b16 %v481, %v480
    %v491 = vpack.c.b16 %v483, %v482
    %v516 = vunpack.c.l.b16 %v436
    %v517 = vunpack.c.l.b16 %v437
    %v518 = vunpack.c.l.b16 %v438
    %v519 = vunpack.c.l.b16 %v439
    %v520 = vunpack.c.l.b16 %v440
    %v521 = vunpack.c.l.b16 %v441
    %v522 = vunpack.c.l.b16 %v442
    %v523 = vunpack.c.l.b16 %v443
    %v524 = vunpack.c.l.b16 %v444
    %v525 = vunpack.c.l.b16 %v445
    %v526 = vunpack.c.l.b16 %v446
    %v527 = vunpack.c.l.b16 %v447
    %v528 = vunpack.c.l.b16 %v448
    %v529 = vunpack.c.l.b16 %v449
    %v530 = vunpack.c.l.b16 %v450
    %v531 = vunpack.c.l.b16 %v451
    %v532 = vpack.c.b16 %v517, %v516
    %v533 = vpack.c.b16 %v519, %v518
    %v534 = vpack.c.b16 %v521, %v520
    %v535 = vpack.c.b16 %v523, %v522
    %v536 = vpack.c.b16 %v525, %v524
    %v537 = vpack.c.b16 %v527, %v526
    %v538 = vpack.c.b16 %v529, %v528
    %v539 = vpack.c.b16 %v531, %v530
    %548 = vmatprep.subr.bf16.mxu0 0
    %549 = vmatpush1.bf16.msra.mxu0 %v532
    %550 = vmatprep.subr.bf16.mxu0 0
    %551 = vmatpush1.bf16.msra.mxu0 %v533
    %552 = vmatprep.subr.bf16.mxu0 0
    %553 = vmatpush1.bf16.msra.mxu0 %v534
    %554 = vmatprep.subr.bf16.mxu0 0
    %555 = vmatpush1.bf16.msra.mxu0 %v535
    %556 = vmatprep.subr.bf16.mxu0 0
    %557 = vmatpush1.bf16.msra.mxu0 %v536
    %558 = vmatprep.subr.bf16.mxu0 0
    %559 = vmatpush1.bf16.msra.mxu0 %v537
    %560 = vmatprep.subr.bf16.mxu0 0
    %561 = vmatpush1.bf16.msra.mxu0 %v538
    %562 = vmatprep.subr.bf16.mxu0 0
    %563 = vmatpush1.bf16.msra.mxu0 %v539
    %564 = vmatprep.subr.bf16.mxu0 0
    %565 = vmatpush1.bf16.msra.mxu0 0
    %566 = vmatprep.subr.bf16.mxu0 0
    %567 = vmatpush1.bf16.msra.mxu0 0
    %568 = vmatprep.subr.bf16.mxu0 0
    %569 = vmatpush1.bf16.msra.mxu0 0
    %570 = vmatprep.subr.bf16.mxu0 0
    %571 = vmatpush1.bf16.msra.mxu0 0
    %572 = vmatprep.subr.bf16.mxu0 0
    %573 = vmatpush1.bf16.msra.mxu0 0
    %574 = vmatprep.subr.bf16.mxu0 0
    %575 = vmatpush1.bf16.msra.mxu0 0
    %576 = vmatprep.subr.bf16.mxu0 0
    %577 = vmatpush1.bf16.msra.mxu0 0
    %578 = vmatprep.subr.bf16.mxu0 0
    %579 = vmatpush1.bf16.msra.mxu0 0
    %580 = vmatprep.mubr.bf16.mxu0 0
    %581 = vmatmul.mubr.bf16.gmra.mrb[0].mxu0 %v484
    %v582 = vpop.f32.mrb[0].mxu0
    %v583 = vadd.f32 0.0, %v582
    %v584 = vpop.f32.mrb[0].mxu0
    %v585 = vpop.f32.mrb[0].mxu0
    %v586 = vadd.f32 0.0, %v585
    %v587 = vpop.f32.mrb[0].mxu0
    %588 = vmatprep.mubr.bf16.mxu0 0
    %589 = vmatmul.mubr.bf16.gmra.mrb[0].mxu0 %v485
    %v590 = vpop.f32.mrb[0].mxu0
    %v591 = vadd.f32 0.0, %v590
    %v592 = vpop.f32.mrb[0].mxu0
    %v593 = vpop.f32.mrb[0].mxu0
    %v594 = vadd.f32 0.0, %v593
    %v595 = vpop.f32.mrb[0].mxu0
    %596 = vmatprep.mubr.bf16.mxu0 0
    %597 = vmatmul.mubr.bf16.gmra.mrb[0].mxu0 %v486
    %v598 = vpop.f32.mrb[0].mxu0
    %v599 = vadd.f32 0.0, %v598
    %v600 = vpop.f32.mrb[0].mxu0
    %v601 = vpop.f32.mrb[0].mxu0
    %v602 = vadd.f32 0.0, %v601
    %v603 = vpop.f32.mrb[0].mxu0
    %604 = vmatprep.mubr.bf16.mxu0 0
    %605 = vmatmul.mubr.bf16.gmra.mrb[0].mxu0 %v487
    %v606 = vpop.f32.mrb[0].mxu0
    %v607 = vadd.f32 0.0, %v606
    %v608 = vpop.f32.mrb[0].mxu0
    %v609 = vpop.f32.mrb[0].mxu0
    %v610 = vadd.f32 0.0, %v609
    %v611 = vpop.f32.mrb[0].mxu0
    %612 = vmatprep.mubr.bf16.mxu0 0
    %613 = vmatmul.mubr.bf16.gmra.mrb[0].mxu0 %v488
    %v614 = vpop.f32.mrb[0].mxu0
    %v615 = vadd.f32 0.0, %v614
    %v616 = vpop.f32.mrb[0].mxu0
    %v617 = vpop.f32.mrb[0].mxu0
    %v618 = vadd.f32 0.0, %v617
    %v619 = vpop.f32.mrb[0].mxu0
    %620 = vmatprep.mubr.bf16.mxu0 0
    %621 = vmatmul.mubr.bf16.gmra.mrb[0].mxu0 %v489
    %v622 = vpop.f32.mrb[0].mxu0
    %v623 = vadd.f32 0.0, %v622
    %v624 = vpop.f32.mrb[0].mxu0
    %v625 = vpop.f32.mrb[0].mxu0
    %v626 = vadd.f32 0.0, %v625
    %v627 = vpop.f32.mrb[0].mxu0
    %628 = vmatprep.mubr.bf16.mxu0 0
    %629 = vmatmul.mubr.bf16.gmra.mrb[0].mxu0 %v490
    %v630 = vpop.f32.mrb[0].mxu0
    %v631 = vadd.f32 0.0, %v630
    %v632 = vpop.f32.mrb[0].mxu0
    %v633 = vpop.f32.mrb[0].mxu0
    %v634 = vadd.f32 0.0, %v633
    %v635 = vpop.f32.mrb[0].mxu0
    %636 = vmatprep.mubr.bf16.mxu0 0
    %637 = vmatmul.mubr.bf16.gmra.mrb[0].mxu0 %v491
    %v638 = vpop.f32.mrb[0].mxu0
    %v639 = vadd.f32 0.0, %v638
    %v640 = vpop.f32.mrb[0].mxu0
    %v641 = vpop.f32.mrb[0].mxu0
    %v642 = vadd.f32 0.0, %v641
    %v643 = vpop.f32.mrb[0].mxu0
    %644 = vdwg.mxu0
    %v645 = vadd.f32 %v404, %v583
    %v646 = vadd.f32 %v405, %v586
    %v647 = vadd.f32 %v406, %v591
    %v648 = vadd.f32 %v407, %v594
    %v649 = vadd.f32 %v408, %v599
    %v650 = vadd.f32 %v409, %v602
    %v651 = vadd.f32 %v410, %v607
    %v652 = vadd.f32 %v411, %v610
    %v653 = vadd.f32 %v412, %v615
    %v654 = vadd.f32 %v413, %v618
    %v655 = vadd.f32 %v414, %v623
    %v656 = vadd.f32 %v415, %v626
    %v657 = vadd.f32 %v416, %v631
    %v658 = vadd.f32 %v417, %v634
    %v659 = vadd.f32 %v418, %v639
    %v660 = vadd.f32 %v419, %v642
    %v661 = vmul.f32 %v645, 0.70710677
    %v662 = vmul.f32 %v646, 0.70710677
    %v663 = vmul.f32 %v647, 0.70710677
    %v664 = vmul.f32 %v648, 0.70710677
    %v665 = vmul.f32 %v649, 0.70710677
    %v666 = vmul.f32 %v650, 0.70710677
    %v667 = vmul.f32 %v651, 0.70710677
    %v668 = vmul.f32 %v652, 0.70710677
    %v669 = vmul.f32 %v653, 0.70710677
    %v670 = vmul.f32 %v654, 0.70710677
    %v671 = vmul.f32 %v655, 0.70710677
    %v672 = vmul.f32 %v656, 0.70710677
    %v673 = vmul.f32 %v657, 0.70710677
    %v674 = vmul.f32 %v658, 0.70710677
    %v675 = vmul.f32 %v659, 0.70710677
    %v676 = vmul.f32 %v660, 0.70710677
    %677 = vst [vmem:[%s5] sm:$0xff] %v661
    %678 = vst [vmem:[%s5 + $0x8] sm:$0xff] %v662
    %679 = vst [vmem:[%s5 + $0x10] sm:$0xff] %v663
    %680 = vst [vmem:[%s5 + $0x18] sm:$0xff] %v664
    %681 = vst [vmem:[%s5 + $0x20] sm:$0xff] %v665
    %682 = vst [vmem:[%s5 + $0x28] sm:$0xff] %v666
    %683 = vst [vmem:[%s5 + $0x30] sm:$0xff] %v667
    %684 = vst [vmem:[%s5 + $0x38] sm:$0xff] %v668
    %685 = vst [vmem:[%s5 + $0x40] sm:$0xff] %v669
    %686 = vst [vmem:[%s5 + $0x48] sm:$0xff] %v670
    %687 = vst [vmem:[%s5 + $0x50] sm:$0xff] %v671
    %688 = vst [vmem:[%s5 + $0x58] sm:$0xff] %v672
    %689 = vst [vmem:[%s5 + $0x60] sm:$0xff] %v673
    %690 = vst [vmem:[%s5 + $0x68] sm:$0xff] %v674
    %691 = vst [vmem:[%s5 + $0x70] sm:$0xff] %v675
    %692 = vst [vmem:[%s5 + $0x78] sm:$0xff] %v676
  $region29: #{_lambda_.7} parent=0 // pred_fallthru
    _
  // Predicated region
  $region30: #{_lambda_.7} parent=0 // pred_check
    _
  $region31: #{_lambda_.7} parent=0 // pred_check_branch
    %694 = sbr.rel (0) target = $region33
  $region32: #{_lambda_.7} parent=0 // pred_region
    _
  $region33: #{_lambda_.7} parent=0 // pred_fallthru
    _
  // Predicated region
  $region34: #{_lambda_.7} parent=0 // pred_check
    _
  $region35: #{_lambda_.7} parent=0 // pred_check_branch
    %696 = sbr.rel (0) target = $region37
  $region36: #{_lambda_.7} parent=0 // pred_region
    _
  $region37: #{_lambda_.7} parent=0 // pred_fallthru
    _

</llo_original>
